<compile_context>
chip_gen: v6e
topology: v6e:2x2x1
jax: 0.10.0
libtpu: 0.0.40
codegen_flags: <defaults>
</compile_context>

<pallas_src>
import functools

import jax
import jax.numpy as jnp
import numpy as np
from jax.experimental import pallas as pl
from jax.experimental.pallas import tpu as pltpu

EPS = 1e-5
LANE = 128
_VMEM_LIMIT = 48 * 1024 * 1024   # safe on v5e/v6e (128 MiB) and v7x (64 MiB)


def _round_up(v, m):
    return ((v + m - 1) // m) * m


def _pad_last(a, size):
    pad = size - a.shape[-1]
    if pad == 0:
        return a
    return jnp.pad(a, [(0, 0)] * (a.ndim - 1) + [(0, pad)])


def _pick_tile_h(h, tile_h):
    """Largest divisor of h that is <= tile_h (falls back to whole-H)."""
    if h <= tile_h:
        return h
    th = tile_h
    while h % th != 0:
        th -= 1
    return th if th >= 4 else h


def _prep_weights(w, ci_p, co_p):
    """(Cout, Cin, 3, 3) -> (9*ci_p, co_p) bf16 im2col weight.

    Row order is (ky, kx, ci) -- tap-major, channel-minor -- matching the
    in-kernel patch construction.  Channel padding rows/cols are zero.
    """
    co, ci = w.shape[0], w.shape[1]
    wt = jnp.transpose(w, (2, 3, 1, 0))                      # (3, 3, ci, co)
    wt = jnp.pad(wt, ((0, 0), (0, 0), (0, ci_p - ci), (0, co_p - co)))
    return wt.reshape(9 * ci_p, co_p).astype(jnp.bfloat16)


# ---------------------------------------------------------------------------
# conv kernel: 3x3/s1/p1 conv as one im2col MXU matmul per row tile, with
# optional fused input BN+ReLU and per-tile BN (mean, M2) statistics of the
# raw f32 output.  Halo rows are read from the resident per-batch image block.
# ---------------------------------------------------------------------------
def _conv3x3_kernel(x_ref, w_ref, ss_ref, y_ref, st_ref, *, th, wo, apply_act):
    # x_ref : (1, H, W, Ci)     whole (un-padded) image for this batch element
    # w_ref : (9*Ci, Co) bf16   im2col weight
    # ss_ref: (2, Ci) f32       input-BN (scale, shift) rows (conv2 only)
    # y_ref : (1, th, W, Co)    raw conv output tile (bf16)
    # st_ref: (1, 1, 2, Co) f32 per-tile (mean, M2) of the raw f32 output
    j = pl.program_id(1)
    n_t = pl.num_programs(1)
    h = x_ref.shape[1]
    ci = x_ref.shape[3]
    co = y_ref.shape[3]

    r0 = j * th
    if th % 8 == 0:
        r0 = pl.multiple_of(r0, th)

    ss = ss_ref[...]

    def act(v):
        v = v.astype(jnp.float32)
        if apply_act:
            scale = ss[0].reshape(1, 1, ci)
            shift = ss[1].reshape(1, 1, ci)
            v = jnp.maximum(v * scale + shift, 0.0)
        return v

    # Core rows plus one halo row on each side, taken directly from the
    # resident image block.  Out-of-image halo rows are zeroed *after* the
    # activation (conv zero padding lives in the activated domain).
    core = act(x_ref[0, pl.ds(r0, th)])                                 # (th, W, ci)
    top = act(x_ref[0, pl.ds(jnp.maximum(r0 - 1, 0), 1)])               # (1, W, ci)
    bot = act(x_ref[0, pl.ds(jnp.minimum(r0 + th, h - 1), 1)])          # (1, W, ci)
    top = jnp.where(j > 0, top, 0.0)
    bot = jnp.where(j < n_t - 1, bot, 0.0)

    # Single f32 -> bf16 cast of the whole tile, then zero-column padding.
    rows = jnp.concatenate([top, core, bot], axis=0).astype(jnp.bfloat16)  # (th+2, W, ci)
    zcol = jnp.zeros((th + 2, 1, ci), jnp.bfloat16)
    a = jnp.concatenate([zcol, rows, zcol], axis=1)                        # (th+2, W+2, ci)

    # im2col: one long-K matmul instead of 9 short-K matmuls + accumulator.
    cols = [a[ky:ky + th, kx:kx + wo, :] for ky in range(3) for kx in range(3)]
    patch = jnp.concatenate(cols, axis=-1).reshape(th * wo, 9 * ci)
    acc = jnp.dot(patch, w_ref[...], preferred_element_type=jnp.float32)   # (th*wo, co) f32

    # BN statistics from the f32 accumulator (before the bf16 downcast):
    # per-tile mean + M2, combined across tiles with Chan's formula outside.
    inv_cnt = 1.0 / float(th * wo)
    mu = jnp.sum(acc, axis=0, keepdims=True) * inv_cnt                     # (1, co)
    d = acc - mu
    m2 = jnp.sum(d * d, axis=0, keepdims=True)                             # (1, co)
    st_ref[...] = jnp.concatenate([mu, m2], axis=0).reshape(1, 1, 2, co)

    y_ref[...] = acc.reshape(1, th, wo, co).astype(y_ref.dtype)


def _conv3x3_call(x_nhwc, w_flat, ss, co_p, th, apply_input_act):
    n, h, w, ci = x_nhwc.shape
    t = h // th
    kern = functools.partial(_conv3x3_kernel, th=th, wo=w,
                             apply_act=apply_input_act)
    flops = 2 * n * h * w * int(w_flat.shape[0]) * co_p
    bytes_acc = (int(x_nhwc.size) * int(x_nhwc.dtype.itemsize)
                 + int(w_flat.size) * 2
                 + n * h * w * co_p * 2
                 + n * t * 2 * co_p * 4)
    return pl.pallas_call(
        kern,
        grid=(n, t),
        in_specs=[
            # Whole image per batch element; the block index only depends on
            # the batch axis, so it stays resident across the H-tile axis.
            pl.BlockSpec((1, h, w, ci), lambda i, j: (i, 0, 0, 0)),
            pl.BlockSpec(w_flat.shape, lambda i, j: (0, 0)),
            pl.BlockSpec(ss.shape, lambda i, j: (0, 0)),
        ],
        out_specs=[
            pl.BlockSpec((1, th, w, co_p), lambda i, j: (i, j, 0, 0)),
            pl.BlockSpec((1, 1, 2, co_p), lambda i, j: (i, j, 0, 0)),
        ],
        out_shape=[
            jax.ShapeDtypeStruct((n, h, w, co_p), jnp.bfloat16),
            jax.ShapeDtypeStruct((n, t, 2, co_p), jnp.float32),
        ],
        compiler_params=pltpu.CompilerParams(
            dimension_semantics=("parallel", "parallel"),
            vmem_limit_bytes=_VMEM_LIMIT),
        cost_estimate=pl.CostEstimate(flops=flops, transcendentals=0,
                                      bytes_accessed=bytes_acc),
    )(x_nhwc, w_flat, ss)


def _bn_scale_shift(stats, gamma_p, beta_p, tile_count):
    """Chan-combine per-tile (mean, M2) -> per-channel affine scale/shift."""
    c = stats.shape[-1]
    means = stats[:, :, 0, :].reshape(-1, c)
    m2s = stats[:, :, 1, :].reshape(-1, c)
    ntiles = means.shape[0]
    mean = jnp.mean(means, axis=0)
    m2 = jnp.sum(m2s, axis=0) + tile_count * jnp.sum((means - mean) ** 2, axis=0)
    var = jnp.maximum(m2 / (ntiles * tile_count), 0.0)
    scale = gamma_p * jax.lax.rsqrt(var + EPS)
    shift = beta_p - mean * scale
    return jnp.stack([scale, shift], axis=0).astype(jnp.float32)   # (2, C)


# ---------------------------------------------------------------------------
# final BN + ReLU + channel-crop + dtype cast (tiled elementwise kernel)
# ---------------------------------------------------------------------------
def _bn_relu_kernel(x_ref, ss_ref, o_ref):
    cout = o_ref.shape[-1]
    ss = ss_ref[...]
    scale = ss[0, :cout].reshape(1, 1, 1, cout)
    shift = ss[1, :cout].reshape(1, 1, 1, cout)
    xv = x_ref[...].astype(jnp.float32)[..., :cout]
    o_ref[...] = jnp.maximum(xv * scale + shift, 0.0).astype(o_ref.dtype)


def _bn_relu_call(y_raw, ss, th, cout, out_dtype):
    n, h, w, c = y_raw.shape
    t = h // th
    return pl.pallas_call(
        _bn_relu_kernel,
        grid=(n, t),
        in_specs=[
            pl.BlockSpec((1, th, w, c), lambda i, j: (i, j, 0, 0)),
            pl.BlockSpec((2, c), lambda i, j: (0, 0)),
        ],
        out_specs=pl.BlockSpec((1, th, w, cout), lambda i, j: (i, j, 0, 0)),
        out_shape=jax.ShapeDtypeStruct((n, h, w, cout), out_dtype),
        compiler_params=pltpu.CompilerParams(
            dimension_semantics=("parallel", "parallel"),
            vmem_limit_bytes=_VMEM_LIMIT),
    )(y_raw, ss)


def double_conv(x_nchw, w1, g1, b1, w2, g2, b2, *, tile_h=8):
    """DoubleConv forward (PyTorch train-mode BN semantics). x: (N, Cin, H, W)."""
    n, cin, h, w = x_nchw.shape
    cout = w1.shape[0]
    co_p = _round_up(cout, LANE)
    th = _pick_tile_h(h, tile_h)
    t = h // th
    tile_count = th * w

    # NCHW -> NHWC; conv1 input keeps its true Cin (no lane-padding in HBM).
    x = jnp.transpose(x_nchw, (0, 2, 3, 1))

    # im2col weights; BN params lane-padded with zeros (padded lanes must stay
    # zero so the padded output channels remain exactly 0 after BN+ReLU).
    w1t = _prep_weights(w1, cin, co_p)      # (9*cin,  co_p) bf16
    w2t = _prep_weights(w2, co_p, co_p)     # (9*co_p, co_p) bf16
    g1p, b1p = _pad_last(g1, co_p), _pad_last(b1, co_p)
    g2p, b2p = _pad_last(g2, co_p), _pad_last(b2, co_p)

    # ---- conv1 (raw bf16 output) + per-tile BN1 statistics ----
    ss_unused = jnp.zeros((2, cin), jnp.float32)
    y1, st1 = _conv3x3_call(x, w1t, ss_unused, co_p, th, apply_input_act=False)

    # ---- global BN1 stats -> per-channel scale/shift (tiny, plain JAX) ----
    ss1 = _bn_scale_shift(st1, g1p, b1p, tile_count)

    # ---- conv2 with BN1+ReLU fused on its input + per-tile BN2 statistics ----
    y2, st2 = _conv3x3_call(y1, w2t, ss1, co_p, th, apply_input_act=True)
    ss2 = _bn_scale_shift(st2, g2p, b2p, tile_count)

    # ---- BN2 + ReLU + channel crop + dtype cast (tiled elementwise kernel) ----
    out_nhwc = _bn_relu_call(y2, ss2, th, cout, x_nchw.dtype)

    return jnp.transpose(out_nhwc, (0, 3, 1, 2))


def ref_double_conv(x, w1, g1, b1, w2, g2, b2):
    """Pure-JAX reference of the PyTorch train-mode forward (NCHW).  Conv
    operands are cast to bf16 (f32 accumulation) to match the kernel's MXU
    precision policy; BN/ReLU math stays in f32."""
    def conv(x, w):
        return jax.lax.conv_general_dilated(
            x.astype(jnp.bfloat16), w.astype(jnp.bfloat16), (1, 1),
            ((1, 1), (1, 1)), dimension_numbers=("NCHW", "OIHW", "NCHW"),
            preferred_element_type=jnp.float32)

    def bn_relu(x, g, b):
        mean = jnp.mean(x, axis=(0, 2, 3), keepdims=True)
        var = jnp.mean((x - mean) ** 2, axis=(0, 2, 3), keepdims=True)
        y = (x - mean) * jax.lax.rsqrt(var + EPS) \
            * g.reshape(1, -1, 1, 1) + b.reshape(1, -1, 1, 1)
        return jnp.maximum(y, 0.0)

    y = bn_relu(conv(x, w1), g1, b1)
    return bn_relu(conv(y, w2), g2, b2)


if __name__ == "__main__":
    N, Cin, Cout, H, W = 2, 4, 8, 16, 16

    key = jax.random.PRNGKey(0)
    kx, kw1, kw2, kg1, kb1, kg2, kb2 = jax.random.split(key, 7)

    x = jax.random.normal(kx, (N, Cin, H, W), jnp.float32)
    # deterministic synthetic parameters (shapes from the module's __init__)
    w1 = jax.random.normal(kw1, (Cout, Cin, 3, 3), jnp.float32) * 0.2
    w2 = jax.random.normal(kw2, (Cout, Cout, 3, 3), jnp.float32) * 0.2
    g1 = 1.0 + 0.1 * jax.random.normal(kg1, (Cout,), jnp.float32)
    b1 = 0.1 * jax.random.normal(kb1, (Cout,), jnp.float32)
    g2 = 1.0 + 0.1 * jax.random.normal(kg2, (Cout,), jnp.float32)
    b2 = 0.1 * jax.random.normal(kb2, (Cout,), jnp.float32)

    out = jax.jit(double_conv)(x, w1, g1, b1, w2, g2, b2)
    out = jax.block_until_ready(out)

    ref = ref_double_conv(x, w1, g1, b1, w2, g2, b2)
    # bf16 MXU operands in both kernel and reference; the kernel additionally
    # stores the conv1/conv2 raw outputs in bf16 (per the perf review), so the
    # tolerance is slightly looser than pure-f32-intermediate comparison.
    np.testing.assert_allclose(np.asarray(out), np.asarray(ref),
                               rtol=3e-2, atol=3e-2)

    print("KERNEL_OK")
</pallas_src>

<mosaic_0001>
module attributes {stable_mosaic.version = 11 : i64} {
  func.func @_conv3x3_kernel(%arg0: i32, %arg1: i32, %arg2: memref<1x16x16x4xf32, #tpu.memory_space<vmem>>, %arg3: memref<36x128xbf16, #tpu.memory_space<vmem>>, %arg4: memref<2x4xf32, #tpu.memory_space<vmem>>, %arg5: memref<1x8x16x128xbf16, #tpu.memory_space<vmem>>, %arg6: memref<1x1x2x128xf32, #tpu.memory_space<vmem>>) attributes {dimension_semantics = [#tpu.dimension_semantics<parallel>, #tpu.dimension_semantics<parallel>], iteration_bounds = array<i64: 2, 2>, scalar_prefetch = 0 : i64, scratch_operands = 0 : i64, tpu.core_type = #tpu.core_type<tc>, window_params = [{transform_indices = @transform_0, window_bounds = array<i64: 1, 16, 16, 4>}, {pipeline_mode = #tpu.pipeline_mode<synchronous>, transform_indices = @transform_1, window_bounds = array<i64: 36, 128>}, {pipeline_mode = #tpu.pipeline_mode<synchronous>, transform_indices = @transform_2, window_bounds = array<i64: 2, 4>}, {transform_indices = @transform_3, window_bounds = array<i64: 1, 8, 16, 128>}, {transform_indices = @transform_4, window_bounds = array<i64: 1, 1, 2, 128>}]} {
    %c8_i32 = arith.constant 8 : i32
    %0 = arith.muli %arg1, %c8_i32 : i32
    %1 = tpu.assume_multiple %0, 8 : i32
    %c0 = arith.constant 0 : index
    %2 = arith.index_cast %1 : i32 to index
    %c0_0 = arith.constant 0 : index
    %c0_1 = arith.constant 0 : index
    %3 = vector.load %arg2[%c0, %2, %c0_0, %c0_1] : memref<1x16x16x4xf32, #tpu.memory_space<vmem>>, vector<1x8x16x4xf32>
    %4 = vector.shape_cast %3 : vector<1x8x16x4xf32> to vector<8x16x4xf32>
    %c1_i32 = arith.constant 1 : i32
    %5 = arith.subi %1, %c1_i32 : i32
    %c0_i32 = arith.constant 0 : i32
    %6 = arith.maxsi %5, %c0_i32 : i32
    %c0_2 = arith.constant 0 : index
    %7 = arith.index_cast %6 : i32 to index
    %c0_3 = arith.constant 0 : index
    %c0_4 = arith.constant 0 : index
    %8 = vector.load %arg2[%c0_2, %7, %c0_3, %c0_4] : memref<1x16x16x4xf32, #tpu.memory_space<vmem>>, vector<1x1x16x4xf32>
    %9 = vector.shape_cast %8 : vector<1x1x16x4xf32> to vector<1x16x4xf32>
    %c8_i32_5 = arith.constant 8 : i32
    %10 = arith.addi %1, %c8_i32_5 : i32
    %c15_i32 = arith.constant 15 : i32
    %11 = arith.minsi %10, %c15_i32 : i32
    %c0_6 = arith.constant 0 : index
    %12 = arith.index_cast %11 : i32 to index
    %c0_7 = arith.constant 0 : index
    %c0_8 = arith.constant 0 : index
    %13 = vector.load %arg2[%c0_6, %12, %c0_7, %c0_8] : memref<1x16x16x4xf32, #tpu.memory_space<vmem>>, vector<1x1x16x4xf32>
    %14 = vector.shape_cast %13 : vector<1x1x16x4xf32> to vector<1x16x4xf32>
    %c0_i32_9 = arith.constant 0 : i32
    %15 = arith.cmpi sgt, %arg1, %c0_i32_9 : i32
    %cst = arith.constant 0.000000e+00 : f32
    %16 = vector.broadcast %cst : f32 to vector<1x16x4xf32>
    %17 = arith.select %15, %9, %16 : vector<1x16x4xf32>
    %c1_i32_10 = arith.constant 1 : i32
    %18 = arith.cmpi slt, %arg1, %c1_i32_10 : i32
    %cst_11 = arith.constant 0.000000e+00 : f32
    %19 = vector.broadcast %cst_11 : f32 to vector<1x16x4xf32>
    %20 = arith.select %18, %14, %19 : vector<1x16x4xf32>
    %21 = tpu.concatenate %17, %4, %20 in 0 : vector<1x16x4xf32>, vector<8x16x4xf32>, vector<1x16x4xf32> -> vector<10x16x4xf32>
    %22 = arith.truncf %21 : vector<10x16x4xf32> to vector<10x16x4xbf16>
    %cst_12 = arith.constant 0.000000e+00 : bf16
    %23 = vector.broadcast %cst_12 : bf16 to vector<10x1x4xbf16>
    %24 = tpu.concatenate %23, %22, %23 in 1 : vector<10x1x4xbf16>, vector<10x16x4xbf16>, vector<10x1x4xbf16> -> vector<10x18x4xbf16>
    %25 = vector.extract_strided_slice %24 {offsets = [0, 0, 0], sizes = [8, 16, 4], strides = [1, 1, 1]} : vector<10x18x4xbf16> to vector<8x16x4xbf16>
    %26 = vector.extract_strided_slice %24 {offsets = [0, 1, 0], sizes = [8, 16, 4], strides = [1, 1, 1]} : vector<10x18x4xbf16> to vector<8x16x4xbf16>
    %27 = vector.extract_strided_slice %24 {offsets = [0, 2, 0], sizes = [8, 16, 4], strides = [1, 1, 1]} : vector<10x18x4xbf16> to vector<8x16x4xbf16>
    %28 = vector.extract_strided_slice %24 {offsets = [1, 0, 0], sizes = [8, 16, 4], strides = [1, 1, 1]} : vector<10x18x4xbf16> to vector<8x16x4xbf16>
    %29 = vector.extract_strided_slice %24 {offsets = [1, 1, 0], sizes = [8, 16, 4], strides = [1, 1, 1]} : vector<10x18x4xbf16> to vector<8x16x4xbf16>
    %30 = vector.extract_strided_slice %24 {offsets = [1, 2, 0], sizes = [8, 16, 4], strides = [1, 1, 1]} : vector<10x18x4xbf16> to vector<8x16x4xbf16>
    %31 = vector.extract_strided_slice %24 {offsets = [2, 0, 0], sizes = [8, 16, 4], strides = [1, 1, 1]} : vector<10x18x4xbf16> to vector<8x16x4xbf16>
    %32 = vector.extract_strided_slice %24 {offsets = [2, 1, 0], sizes = [8, 16, 4], strides = [1, 1, 1]} : vector<10x18x4xbf16> to vector<8x16x4xbf16>
    %33 = vector.extract_strided_slice %24 {offsets = [2, 2, 0], sizes = [8, 16, 4], strides = [1, 1, 1]} : vector<10x18x4xbf16> to vector<8x16x4xbf16>
    %34 = tpu.concatenate %25, %26, %27, %28, %29, %30, %31, %32, %33 in 2 : vector<8x16x4xbf16>, vector<8x16x4xbf16>, vector<8x16x4xbf16>, vector<8x16x4xbf16>, vector<8x16x4xbf16>, vector<8x16x4xbf16>, vector<8x16x4xbf16>, vector<8x16x4xbf16>, vector<8x16x4xbf16> -> vector<8x16x36xbf16>
    %35 = vector.shape_cast %34 : vector<8x16x36xbf16> to vector<128x36xbf16>
    %c0_13 = arith.constant 0 : index
    %c0_14 = arith.constant 0 : index
    %36 = vector.load %arg3[%c0_13, %c0_14] : memref<36x128xbf16, #tpu.memory_space<vmem>>, vector<36x128xbf16>
    %cst_15 = arith.constant dense<0.000000e+00> : vector<128x128xf32>
    %37 = tpu.matmul %35, %36, %cst_15 {dimension_numbers = #tpu.dot_dimension_numbers<[1], [0], [0], [1], [0, 0, 1, 1], [], []>} : vector<128x36xbf16>, vector<36x128xbf16>, vector<128x128xf32> -> vector<128x128xf32>
    %cst_16 = arith.constant dense<0.000000e+00> : vector<128xf32>
    %38 = vector.multi_reduction <add>, %37, %cst_16 [0] : vector<128x128xf32> to vector<128xf32>
    %39 = vector.shape_cast %38 : vector<128xf32> to vector<1x128xf32>
    %cst_17 = arith.constant 7.812500e-03 : f32
    %40 = vector.broadcast %cst_17 : f32 to vector<1x128xf32>
    %41 = arith.mulf %39, %40 : vector<1x128xf32>
    %42 = vector.broadcast %41 : vector<1x128xf32> to vector<128x128xf32>
    %43 = arith.subf %37, %42 : vector<128x128xf32>
    %44 = arith.mulf %43, %43 : vector<128x128xf32>
    %cst_18 = arith.constant dense<0.000000e+00> : vector<128xf32>
    %45 = vector.multi_reduction <add>, %44, %cst_18 [0] : vector<128x128xf32> to vector<128xf32>
    %46 = vector.shape_cast %45 : vector<128xf32> to vector<1x128xf32>
    %47 = tpu.concatenate %41, %46 in 0 : vector<1x128xf32>, vector<1x128xf32> -> vector<2x128xf32>
    %48 = vector.shape_cast %47 : vector<2x128xf32> to vector<1x1x2x128xf32>
    %c0_19 = arith.constant 0 : index
    %c0_20 = arith.constant 0 : index
    %c0_21 = arith.constant 0 : index
    %c0_22 = arith.constant 0 : index
    %49 = vector.load %arg6[%c0_19, %c0_20, %c0_21, %c0_22] : memref<1x1x2x128xf32, #tpu.memory_space<vmem>>, vector<1x1x2x128xf32>
    tpu.vector_store %arg6[%c0_19, %c0_20, %c0_21, %c0_22], %48 {strides = array<i32>} : memref<1x1x2x128xf32, #tpu.memory_space<vmem>>, vector<1x1x2x128xf32>,
    %50 = vector.shape_cast %37 : vector<128x128xf32> to vector<1x8x16x128xf32>
    %51 = arith.truncf %50 : vector<1x8x16x128xf32> to vector<1x8x16x128xbf16>
    %c0_23 = arith.constant 0 : index
    %c0_24 = arith.constant 0 : index
    %c0_25 = arith.constant 0 : index
    %c0_26 = arith.constant 0 : index
    %52 = vector.load %arg5[%c0_23, %c0_24, %c0_25, %c0_26] : memref<1x8x16x128xbf16, #tpu.memory_space<vmem>>, vector<1x8x16x128xbf16>
    tpu.vector_store %arg5[%c0_23, %c0_24, %c0_25, %c0_26], %51 {strides = array<i32>} : memref<1x8x16x128xbf16, #tpu.memory_space<vmem>>, vector<1x8x16x128xbf16>,
    return
  }
  func.func @transform_0(%arg0: i32, %arg1: i32) -> (i32, i32, i32, i32) {
    %c0_i32 = arith.constant 0 : i32
    %c0_i32_0 = arith.constant 0 : i32
    %c0_i32_1 = arith.constant 0 : i32
    %c0_i32_2 = arith.constant 0 : i32
    return %arg0, %c0_i32, %c0_i32_0, %c0_i32_1 : i32, i32, i32, i32
  }
  func.func @transform_1(%arg0: i32, %arg1: i32) -> (i32, i32) {
    %c0_i32 = arith.constant 0 : i32
    %c0_i32_0 = arith.constant 0 : i32
    %c0_i32_1 = arith.constant 0 : i32
    return %c0_i32, %c0_i32_0 : i32, i32
  }
  func.func @transform_2(%arg0: i32, %arg1: i32) -> (i32, i32) {
    %c0_i32 = arith.constant 0 : i32
    %c0_i32_0 = arith.constant 0 : i32
    %c0_i32_1 = arith.constant 0 : i32
    return %c0_i32, %c0_i32_0 : i32, i32
  }
  func.func @transform_3(%arg0: i32, %arg1: i32) -> (i32, i32, i32, i32) {
    %c0_i32 = arith.constant 0 : i32
    %c0_i32_0 = arith.constant 0 : i32
    %c0_i32_1 = arith.constant 0 : i32
    return %arg0, %arg1, %c0_i32, %c0_i32_0 : i32, i32, i32, i32
  }
  func.func @transform_4(%arg0: i32, %arg1: i32) -> (i32, i32, i32, i32) {
    %c0_i32 = arith.constant 0 : i32
    %c0_i32_0 = arith.constant 0 : i32
    %c0_i32_1 = arith.constant 0 : i32
    return %arg0, %arg1, %c0_i32, %c0_i32_0 : i32, i32, i32, i32
  }
}

module attributes {stable_mosaic.version = 11 : i64} {
  func.func @_bn_relu_kernel(%arg0: i32, %arg1: i32, %arg2: memref<1x8x16x128xbf16, #tpu.memory_space<vmem>>, %arg3: memref<2x128xf32, #tpu.memory_space<vmem>>, %arg4: memref<1x8x16x8xf32, #tpu.memory_space<vmem>>) attributes {dimension_semantics = [#tpu.dimension_semantics<parallel>, #tpu.dimension_semantics<parallel>], iteration_bounds = array<i64: 2, 2>, scalar_prefetch = 0 : i64, scratch_operands = 0 : i64, tpu.core_type = #tpu.core_type<tc>, window_params = [{transform_indices = @transform_0, window_bounds = array<i64: 1, 8, 16, 128>}, {pipeline_mode = #tpu.pipeline_mode<synchronous>, transform_indices = @transform_1, window_bounds = array<i64: 2, 128>}, {transform_indices = @transform_2, window_bounds = array<i64: 1, 8, 16, 8>}]} {
    %c0 = arith.constant 0 : index
    %c0_0 = arith.constant 0 : index
    %0 = vector.load %arg3[%c0, %c0_0] : memref<2x128xf32, #tpu.memory_space<vmem>>, vector<2x128xf32>
    %1 = vector.extract_strided_slice %0 {offsets = [0, 0], sizes = [1, 8], strides = [1, 1]} : vector<2x128xf32> to vector<1x8xf32>
    %2 = vector.shape_cast %1 : vector<1x8xf32> to vector<8xf32>
    %3 = vector.shape_cast %2 : vector<8xf32> to vector<1x1x1x8xf32>
    %4 = vector.extract_strided_slice %0 {offsets = [1, 0], sizes = [1, 8], strides = [1, 1]} : vector<2x128xf32> to vector<1x8xf32>
    %5 = vector.shape_cast %4 : vector<1x8xf32> to vector<8xf32>
    %6 = vector.shape_cast %5 : vector<8xf32> to vector<1x1x1x8xf32>
    %c0_1 = arith.constant 0 : index
    %c0_2 = arith.constant 0 : index
    %c0_3 = arith.constant 0 : index
    %c0_4 = arith.constant 0 : index
    %7 = vector.load %arg2[%c0_1, %c0_2, %c0_3, %c0_4] : memref<1x8x16x128xbf16, #tpu.memory_space<vmem>>, vector<1x8x16x128xbf16>
    %8 = arith.extf %7 : vector<1x8x16x128xbf16> to vector<1x8x16x128xf32>
    %9 = vector.extract_strided_slice %8 {offsets = [0, 0, 0, 0], sizes = [1, 8, 16, 8], strides = [1, 1, 1, 1]} : vector<1x8x16x128xf32> to vector<1x8x16x8xf32>
    %10 = vector.broadcast %3 : vector<1x1x1x8xf32> to vector<1x8x16x8xf32>
    %11 = arith.mulf %9, %10 : vector<1x8x16x8xf32>
    %12 = vector.broadcast %6 : vector<1x1x1x8xf32> to vector<1x8x16x8xf32>
    %13 = arith.addf %11, %12 : vector<1x8x16x8xf32>
    %cst = arith.constant 0.000000e+00 : f32
    %14 = vector.broadcast %cst : f32 to vector<1x8x16x8xf32>
    %15 = arith.maximumf %13, %14 : vector<1x8x16x8xf32>
    %c0_5 = arith.constant 0 : index
    %c0_6 = arith.constant 0 : index
    %c0_7 = arith.constant 0 : index
    %c0_8 = arith.constant 0 : index
    %16 = vector.load %arg4[%c0_5, %c0_6, %c0_7, %c0_8] : memref<1x8x16x8xf32, #tpu.memory_space<vmem>>, vector<1x8x16x8xf32>
    tpu.vector_store %arg4[%c0_5, %c0_6, %c0_7, %c0_8], %15 {strides = array<i32>} : memref<1x8x16x8xf32, #tpu.memory_space<vmem>>, vector<1x8x16x8xf32>,
    return
  }
  func.func @transform_0(%arg0: i32, %arg1: i32) -> (i32, i32, i32, i32) {
    %c0_i32 = arith.constant 0 : i32
    %c0_i32_0 = arith.constant 0 : i32
    %c0_i32_1 = arith.constant 0 : i32
    return %arg0, %arg1, %c0_i32, %c0_i32_0 : i32, i32, i32, i32
  }
  func.func @transform_1(%arg0: i32, %arg1: i32) -> (i32, i32) {
    %c0_i32 = arith.constant 0 : i32
    %c0_i32_0 = arith.constant 0 : i32
    %c0_i32_1 = arith.constant 0 : i32
    return %c0_i32, %c0_i32_0 : i32, i32
  }
  func.func @transform_2(%arg0: i32, %arg1: i32) -> (i32, i32, i32, i32) {
    %c0_i32 = arith.constant 0 : i32
    %c0_i32_0 = arith.constant 0 : i32
    %c0_i32_1 = arith.constant 0 : i32
    return %arg0, %arg1, %c0_i32, %c0_i32_0 : i32, i32, i32, i32
  }
}

module attributes {stable_mosaic.version = 11 : i64} {
  func.func @_conv3x3_kernel(%arg0: i32, %arg1: i32, %arg2: memref<1x16x16x128xbf16, #tpu.memory_space<vmem>>, %arg3: memref<1152x128xbf16, #tpu.memory_space<vmem>>, %arg4: memref<2x128xf32, #tpu.memory_space<vmem>>, %arg5: memref<1x8x16x128xbf16, #tpu.memory_space<vmem>>, %arg6: memref<1x1x2x128xf32, #tpu.memory_space<vmem>>) attributes {dimension_semantics = [#tpu.dimension_semantics<parallel>, #tpu.dimension_semantics<parallel>], iteration_bounds = array<i64: 2, 2>, scalar_prefetch = 0 : i64, scratch_operands = 0 : i64, tpu.core_type = #tpu.core_type<tc>, window_params = [{transform_indices = @transform_0, window_bounds = array<i64: 1, 16, 16, 128>}, {pipeline_mode = #tpu.pipeline_mode<synchronous>, transform_indices = @transform_1, window_bounds = array<i64: 1152, 128>}, {pipeline_mode = #tpu.pipeline_mode<synchronous>, transform_indices = @transform_2, window_bounds = array<i64: 2, 128>}, {transform_indices = @transform_3, window_bounds = array<i64: 1, 8, 16, 128>}, {transform_indices = @transform_4, window_bounds = array<i64: 1, 1, 2, 128>}]} {
    %c8_i32 = arith.constant 8 : i32
    %0 = arith.muli %arg1, %c8_i32 : i32
    %1 = tpu.assume_multiple %0, 8 : i32
    %c0 = arith.constant 0 : index
    %c0_0 = arith.constant 0 : index
    %2 = vector.load %arg4[%c0, %c0_0] : memref<2x128xf32, #tpu.memory_space<vmem>>, vector<2x128xf32>
    %c0_1 = arith.constant 0 : index
    %3 = arith.index_cast %1 : i32 to index
    %c0_2 = arith.constant 0 : index
    %c0_3 = arith.constant 0 : index
    %4 = vector.load %arg2[%c0_1, %3, %c0_2, %c0_3] : memref<1x16x16x128xbf16, #tpu.memory_space<vmem>>, vector<1x8x16x128xbf16>
    %5 = vector.shape_cast %4 : vector<1x8x16x128xbf16> to vector<8x16x128xbf16>
    %6 = arith.extf %5 : vector<8x16x128xbf16> to vector<8x16x128xf32>
    %7 = vector.extract_strided_slice %2 {offsets = [0, 0], sizes = [1, 128], strides = [1, 1]} : vector<2x128xf32> to vector<1x128xf32>
    %8 = vector.shape_cast %7 : vector<1x128xf32> to vector<128xf32>
    %9 = vector.shape_cast %8 : vector<128xf32> to vector<1x1x128xf32>
    %10 = vector.extract_strided_slice %2 {offsets = [1, 0], sizes = [1, 128], strides = [1, 1]} : vector<2x128xf32> to vector<1x128xf32>
    %11 = vector.shape_cast %10 : vector<1x128xf32> to vector<128xf32>
    %12 = vector.shape_cast %11 : vector<128xf32> to vector<1x1x128xf32>
    %13 = vector.broadcast %9 : vector<1x1x128xf32> to vector<8x16x128xf32>
    %14 = arith.mulf %6, %13 : vector<8x16x128xf32>
    %15 = vector.broadcast %12 : vector<1x1x128xf32> to vector<8x16x128xf32>
    %16 = arith.addf %14, %15 : vector<8x16x128xf32>
    %cst = arith.constant 0.000000e+00 : f32
    %17 = vector.broadcast %cst : f32 to vector<8x16x128xf32>
    %18 = arith.maximumf %16, %17 : vector<8x16x128xf32>
    %c1_i32 = arith.constant 1 : i32
    %19 = arith.subi %1, %c1_i32 : i32
    %c0_i32 = arith.constant 0 : i32
    %20 = arith.maxsi %19, %c0_i32 : i32
    %c0_4 = arith.constant 0 : index
    %21 = arith.index_cast %20 : i32 to index
    %c0_5 = arith.constant 0 : index
    %c0_6 = arith.constant 0 : index
    %22 = vector.load %arg2[%c0_4, %21, %c0_5, %c0_6] : memref<1x16x16x128xbf16, #tpu.memory_space<vmem>>, vector<1x1x16x128xbf16>
    %23 = vector.shape_cast %22 : vector<1x1x16x128xbf16> to vector<1x16x128xbf16>
    %24 = arith.extf %23 : vector<1x16x128xbf16> to vector<1x16x128xf32>
    %25 = vector.extract_strided_slice %2 {offsets = [0, 0], sizes = [1, 128], strides = [1, 1]} : vector<2x128xf32> to vector<1x128xf32>
    %26 = vector.shape_cast %25 : vector<1x128xf32> to vector<128xf32>
    %27 = vector.shape_cast %26 : vector<128xf32> to vector<1x1x128xf32>
    %28 = vector.extract_strided_slice %2 {offsets = [1, 0], sizes = [1, 128], strides = [1, 1]} : vector<2x128xf32> to vector<1x128xf32>
    %29 = vector.shape_cast %28 : vector<1x128xf32> to vector<128xf32>
    %30 = vector.shape_cast %29 : vector<128xf32> to vector<1x1x128xf32>
    %31 = vector.broadcast %27 : vector<1x1x128xf32> to vector<1x16x128xf32>
    %32 = arith.mulf %24, %31 : vector<1x16x128xf32>
    %33 = vector.broadcast %30 : vector<1x1x128xf32> to vector<1x16x128xf32>
    %34 = arith.addf %32, %33 : vector<1x16x128xf32>
    %cst_7 = arith.constant 0.000000e+00 : f32
    %35 = vector.broadcast %cst_7 : f32 to vector<1x16x128xf32>
    %36 = arith.maximumf %34, %35 : vector<1x16x128xf32>
    %c8_i32_8 = arith.constant 8 : i32
    %37 = arith.addi %1, %c8_i32_8 : i32
    %c15_i32 = arith.constant 15 : i32
    %38 = arith.minsi %37, %c15_i32 : i32
    %c0_9 = arith.constant 0 : index
    %39 = arith.index_cast %38 : i32 to index
    %c0_10 = arith.constant 0 : index
    %c0_11 = arith.constant 0 : index
    %40 = vector.load %arg2[%c0_9, %39, %c0_10, %c0_11] : memref<1x16x16x128xbf16, #tpu.memory_space<vmem>>, vector<1x1x16x128xbf16>
    %41 = vector.shape_cast %40 : vector<1x1x16x128xbf16> to vector<1x16x128xbf16>
    %42 = arith.extf %41 : vector<1x16x128xbf16> to vector<1x16x128xf32>
    %43 = vector.extract_strided_slice %2 {offsets = [0, 0], sizes = [1, 128], strides = [1, 1]} : vector<2x128xf32> to vector<1x128xf32>
    %44 = vector.shape_cast %43 : vector<1x128xf32> to vector<128xf32>
    %45 = vector.shape_cast %44 : vector<128xf32> to vector<1x1x128xf32>
    %46 = vector.extract_strided_slice %2 {offsets = [1, 0], sizes = [1, 128], strides = [1, 1]} : vector<2x128xf32> to vector<1x128xf32>
    %47 = vector.shape_cast %46 : vector<1x128xf32> to vector<128xf32>
    %48 = vector.shape_cast %47 : vector<128xf32> to vector<1x1x128xf32>
    %49 = vector.broadcast %45 : vector<1x1x128xf32> to vector<1x16x128xf32>
    %50 = arith.mulf %42, %49 : vector<1x16x128xf32>
    %51 = vector.broadcast %48 : vector<1x1x128xf32> to vector<1x16x128xf32>
    %52 = arith.addf %50, %51 : vector<1x16x128xf32>
    %cst_12 = arith.constant 0.000000e+00 : f32
    %53 = vector.broadcast %cst_12 : f32 to vector<1x16x128xf32>
    %54 = arith.maximumf %52, %53 : vector<1x16x128xf32>
    %c0_i32_13 = arith.constant 0 : i32
    %55 = arith.cmpi sgt, %arg1, %c0_i32_13 : i32
    %cst_14 = arith.constant 0.000000e+00 : f32
    %56 = vector.broadcast %cst_14 : f32 to vector<1x16x128xf32>
    %57 = arith.select %55, %36, %56 : vector<1x16x128xf32>
    %c1_i32_15 = arith.constant 1 : i32
    %58 = arith.cmpi slt, %arg1, %c1_i32_15 : i32
    %cst_16 = arith.constant 0.000000e+00 : f32
    %59 = vector.broadcast %cst_16 : f32 to vector<1x16x128xf32>
    %60 = arith.select %58, %54, %59 : vector<1x16x128xf32>
    %61 = tpu.concatenate %57, %18, %60 in 0 : vector<1x16x128xf32>, vector<8x16x128xf32>, vector<1x16x128xf32> -> vector<10x16x128xf32>
    %62 = arith.truncf %61 : vector<10x16x128xf32> to vector<10x16x128xbf16>
    %cst_17 = arith.constant 0.000000e+00 : bf16
    %63 = vector.broadcast %cst_17 : bf16 to vector<10x1x128xbf16>
    %64 = tpu.concatenate %63, %62, %63 in 1 : vector<10x1x128xbf16>, vector<10x16x128xbf16>, vector<10x1x128xbf16> -> vector<10x18x128xbf16>
    %65 = vector.extract_strided_slice %64 {offsets = [0, 0, 0], sizes = [8, 16, 128], strides = [1, 1, 1]} : vector<10x18x128xbf16> to vector<8x16x128xbf16>
    %66 = vector.extract_strided_slice %64 {offsets = [0, 1, 0], sizes = [8, 16, 128], strides = [1, 1, 1]} : vector<10x18x128xbf16> to vector<8x16x128xbf16>
    %67 = vector.extract_strided_slice %64 {offsets = [0, 2, 0], sizes = [8, 16, 128], strides = [1, 1, 1]} : vector<10x18x128xbf16> to vector<8x16x128xbf16>
    %68 = vector.extract_strided_slice %64 {offsets = [1, 0, 0], sizes = [8, 16, 128], strides = [1, 1, 1]} : vector<10x18x128xbf16> to vector<8x16x128xbf16>
    %69 = vector.extract_strided_slice %64 {offsets = [1, 1, 0], sizes = [8, 16, 128], strides = [1, 1, 1]} : vector<10x18x128xbf16> to vector<8x16x128xbf16>
    %70 = vector.extract_strided_slice %64 {offsets = [1, 2, 0], sizes = [8, 16, 128], strides = [1, 1, 1]} : vector<10x18x128xbf16> to vector<8x16x128xbf16>
    %71 = vector.extract_strided_slice %64 {offsets = [2, 0, 0], sizes = [8, 16, 128], strides = [1, 1, 1]} : vector<10x18x128xbf16> to vector<8x16x128xbf16>
    %72 = vector.extract_strided_slice %64 {offsets = [2, 1, 0], sizes = [8, 16, 128], strides = [1, 1, 1]} : vector<10x18x128xbf16> to vector<8x16x128xbf16>
    %73 = vector.extract_strided_slice %64 {offsets = [2, 2, 0], sizes = [8, 16, 128], strides = [1, 1, 1]} : vector<10x18x128xbf16> to vector<8x16x128xbf16>
    %74 = tpu.concatenate %65, %66, %67, %68, %69, %70, %71, %72, %73 in 2 : vector<8x16x128xbf16>, vector<8x16x128xbf16>, vector<8x16x128xbf16>, vector<8x16x128xbf16>, vector<8x16x128xbf16>, vector<8x16x128xbf16>, vector<8x16x128xbf16>, vector<8x16x128xbf16>, vector<8x16x128xbf16> -> vector<8x16x1152xbf16>
    %75 = vector.shape_cast %74 : vector<8x16x1152xbf16> to vector<128x1152xbf16>
    %c0_18 = arith.constant 0 : index
    %c0_19 = arith.constant 0 : index
    %76 = vector.load %arg3[%c0_18, %c0_19] : memref<1152x128xbf16, #tpu.memory_space<vmem>>, vector<1152x128xbf16>
    %cst_20 = arith.constant dense<0.000000e+00> : vector<128x128xf32>
    %77 = tpu.matmul %75, %76, %cst_20 {dimension_numbers = #tpu.dot_dimension_numbers<[1], [0], [0], [1], [0, 0, 1, 1], [], []>} : vector<128x1152xbf16>, vector<1152x128xbf16>, vector<128x128xf32> -> vector<128x128xf32>
    %cst_21 = arith.constant dense<0.000000e+00> : vector<128xf32>
    %78 = vector.multi_reduction <add>, %77, %cst_21 [0] : vector<128x128xf32> to vector<128xf32>
    %79 = vector.shape_cast %78 : vector<128xf32> to vector<1x128xf32>
    %cst_22 = arith.constant 7.812500e-03 : f32
    %80 = vector.broadcast %cst_22 : f32 to vector<1x128xf32>
    %81 = arith.mulf %79, %80 : vector<1x128xf32>
    %82 = vector.broadcast %81 : vector<1x128xf32> to vector<128x128xf32>
    %83 = arith.subf %77, %82 : vector<128x128xf32>
    %84 = arith.mulf %83, %83 : vector<128x128xf32>
    %cst_23 = arith.constant dense<0.000000e+00> : vector<128xf32>
    %85 = vector.multi_reduction <add>, %84, %cst_23 [0] : vector<128x128xf32> to vector<128xf32>
    %86 = vector.shape_cast %85 : vector<128xf32> to vector<1x128xf32>
    %87 = tpu.concatenate %81, %86 in 0 : vector<1x128xf32>, vector<1x128xf32> -> vector<2x128xf32>
    %88 = vector.shape_cast %87 : vector<2x128xf32> to vector<1x1x2x128xf32>
    %c0_24 = arith.constant 0 : index
    %c0_25 = arith.constant 0 : index
    %c0_26 = arith.constant 0 : index
    %c0_27 = arith.constant 0 : index
    %89 = vector.load %arg6[%c0_24, %c0_25, %c0_26, %c0_27] : memref<1x1x2x128xf32, #tpu.memory_space<vmem>>, vector<1x1x2x128xf32>
    tpu.vector_store %arg6[%c0_24, %c0_25, %c0_26, %c0_27], %88 {strides = array<i32>} : memref<1x1x2x128xf32, #tpu.memory_space<vmem>>, vector<1x1x2x128xf32>,
    %90 = vector.shape_cast %77 : vector<128x128xf32> to vector<1x8x16x128xf32>
    %91 = arith.truncf %90 : vector<1x8x16x128xf32> to vector<1x8x16x128xbf16>
    %c0_28 = arith.constant 0 : index
    %c0_29 = arith.constant 0 : index
    %c0_30 = arith.constant 0 : index
    %c0_31 = arith.constant 0 : index
    %92 = vector.load %arg5[%c0_28, %c0_29, %c0_30, %c0_31] : memref<1x8x16x128xbf16, #tpu.memory_space<vmem>>, vector<1x8x16x128xbf16>
    tpu.vector_store %arg5[%c0_28, %c0_29, %c0_30, %c0_31], %91 {strides = array<i32>} : memref<1x8x16x128xbf16, #tpu.memory_space<vmem>>, vector<1x8x16x128xbf16>,
    return
  }
  func.func @transform_0(%arg0: i32, %arg1: i32) -> (i32, i32, i32, i32) {
    %c0_i32 = arith.constant 0 : i32
    %c0_i32_0 = arith.constant 0 : i32
    %c0_i32_1 = arith.constant 0 : i32
    %c0_i32_2 = arith.constant 0 : i32
    return %arg0, %c0_i32, %c0_i32_0, %c0_i32_1 : i32, i32, i32, i32
  }
  func.func @transform_1(%arg0: i32, %arg1: i32) -> (i32, i32) {
    %c0_i32 = arith.constant 0 : i32
    %c0_i32_0 = arith.constant 0 : i32
    %c0_i32_1 = arith.constant 0 : i32
    return %c0_i32, %c0_i32_0 : i32, i32
  }
  func.func @transform_2(%arg0: i32, %arg1: i32) -> (i32, i32) {
    %c0_i32 = arith.constant 0 : i32
    %c0_i32_0 = arith.constant 0 : i32
    %c0_i32_1 = arith.constant 0 : i32
    return %c0_i32, %c0_i32_0 : i32, i32
  }
  func.func @transform_3(%arg0: i32, %arg1: i32) -> (i32, i32, i32, i32) {
    %c0_i32 = arith.constant 0 : i32
    %c0_i32_0 = arith.constant 0 : i32
    %c0_i32_1 = arith.constant 0 : i32
    return %arg0, %arg1, %c0_i32, %c0_i32_0 : i32, i32, i32, i32
  }
  func.func @transform_4(%arg0: i32, %arg1: i32) -> (i32, i32, i32, i32) {
    %c0_i32 = arith.constant 0 : i32
    %c0_i32_0 = arith.constant 0 : i32
    %c0_i32_1 = arith.constant 0 : i32
    return %arg0, %arg1, %c0_i32, %c0_i32_0 : i32, i32, i32, i32
  }
}

</mosaic_0001>

<llo_original>
// kernel: double_conv.5
$region0: #{double_conv.5}
  #allocation0 [shape = 'u32[]', space=smem, size = 0x4, offset = 0x4, fixed_abs, tag = 'smem constant byte address 0x4 - core index']
  #allocation1 [shape = 'u32[144,128]{1,0:T(1,128)}', space=vmem, size = 0x12000, scoped, tag = 'internal scratch']
  %s0 = inlined_call_operand.vmem [shape: bf16[2,16,16,128], index: 0, kind: input, shape index: {}]
  %s1 = inlined_call_operand.vmem [shape: f32[2,128], index: 1, kind: input, shape index: {}]
  %s2 = inlined_call_operand.vmem [shape: f32[2,16,16,8], index: 2, kind: output, shape index: {}]
  %s3 = sld [smem:[#allocation0]]
  $region41: #{double_conv.5} parent=0
    _
  %s5 = ssub.s32 1, %s3
  %s6 = scalar_select 0, %s5, %s3
  loop: start=0, step=1, limit=6
  $region2: #{double_conv.5} parent=0 // loop_pre_header
    _
  $region3: #{double_conv.5} parent=0 // loop_header
    %s8 = sphi 0, %s12
    %p9 = scmp.ge.s32.totalorder %s8, 6
    %s15 = sphi 0, %s27
    %s16 = sphi 0, %s23
    %s17 = sphi 0, %s15
    %s18 = sphi 0, %s16
    %s19 = sphi 0, %s17
    %s20 = sphi 0, %s18
    %s32 = sphi 0, %s34
    %s35 = sphi 0, %s32
    %s36 = sphi 0, %s35
    %s52 = sphi 0, %s36
    %s56 = sphi 0, %s56
    %s58 = sphi 0, %s56
    %s59 = sphi 0, %s58
    %s73 = sphi 0, %s59
    %s81 = sphi 0, %s83
    %s84 = sphi 0, %s81
    %s85 = sphi 0, %s84
    %s101 = sphi 0, %s85
  $region4: #{double_conv.5} parent=0 // loop_header_branch
    %11 = sbr.rel (%p9) target = $region8
  $region5: #{double_conv.5} parent=0 // loop_body
    %s13 = ssub.s32 %s8, 1
    %s14 = ssub.s32 %s8, 2
    %s21 = sadd.s32 1, %s16
    %p22 = scmp.ge.s32.totalorder %s21, 2
    %s23 = scalar_select %p22, 0, %s21
    %s24 = sadd.s32 1, %s15
    %s25 = scalar_select %p22, %s24, %s15
    %p26 = scmp.ge.s32.totalorder %s25, 2
    %s27 = scalar_select %p26, 0, %s25
    %s28 = ssub.s32 %s15, %s27
    %s29 = ssub.s32 %s16, %s23
    %s30 = sor.u32 %s28, %s29
    %p31 = scmp.eq.s32.totalorder %s30, 0
    %s33 = sadd.s32 %s32, 1
    %s34 = scalar_select %p31, %s32, %s33
    %p37 = pneg %p31
    %p38 = scmp.eq.s32.totalorder %s8, 3
    %p39 = por %p37, %p38
    %p40 = scmp.ne.s32.totalorder %s32, %s35
    %p41 = scmp.eq.s32.totalorder %s8, 0
    %p42 = por %p40, %p41
    %p43 = scmp.ne.s32.totalorder %s32, %s35
    %p44 = scmp.eq.s32.totalorder %s13, 3
    %p45 = por %p43, %p44
    %p46 = scmp.ne.s32.totalorder %s35, %s36
    %p47 = scmp.eq.s32.totalorder %s13, 0
    %p48 = por %p46, %p47
    %p49 = scmp.ne.s32.totalorder %s35, %s36
    %p50 = scmp.eq.s32.totalorder %s14, 3
    %p51 = por %p49, %p50
    %p53 = scmp.ne.s32.totalorder %s36, %s52
    %p54 = scmp.eq.s32.totalorder %s14, 0
    %p55 = por %p53, %p54
    %s57 = sadd.s32 %s56, 1
    %p60 = scmp.eq.s32.totalorder %s8, 3
    %p61 = scmp.ne.s32.totalorder %s56, %s58
    %p62 = scmp.eq.s32.totalorder %s8, 0
    %p63 = por %p61, %p62
    %p64 = scmp.ne.s32.totalorder %s56, %s58
    %p65 = scmp.eq.s32.totalorder %s13, 3
    %p66 = por %p64, %p65
    %p67 = scmp.ne.s32.totalorder %s58, %s59
    %p68 = scmp.eq.s32.totalorder %s13, 0
    %p69 = por %p67, %p68
    %p70 = scmp.ne.s32.totalorder %s58, %s59
    %p71 = scmp.eq.s32.totalorder %s14, 3
    %p72 = por %p70, %p71
    %p74 = scmp.ne.s32.totalorder %s59, %s73
    %p75 = scmp.eq.s32.totalorder %s14, 0
    %p76 = por %p74, %p75
    %s77 = ssub.s32 %s15, %s27
    %s78 = ssub.s32 %s16, %s23
    %s79 = sor.u32 %s77, %s78
    %p80 = scmp.eq.s32.totalorder %s79, 0
    %s82 = sadd.s32 %s81, 1
    %s83 = scalar_select %p80, %s81, %s82
    %p86 = pneg %p80
    %p87 = scmp.eq.s32.totalorder %s8, 3
    %p88 = por %p86, %p87
    %p89 = scmp.ne.s32.totalorder %s81, %s84
    %p90 = scmp.eq.s32.totalorder %s8, 0
    %p91 = por %p89, %p90
    %p92 = scmp.ne.s32.totalorder %s81, %s84
    %p93 = scmp.eq.s32.totalorder %s13, 3
    %p94 = por %p92, %p93
    %p95 = scmp.ne.s32.totalorder %s84, %s85
    %p96 = scmp.eq.s32.totalorder %s13, 0
    %p97 = por %p95, %p96
    %p98 = scmp.ne.s32.totalorder %s84, %s85
    %p99 = scmp.eq.s32.totalorder %s14, 3
    %p100 = por %p98, %p99
    %p102 = scmp.ne.s32.totalorder %s85, %s101
    %p103 = scmp.eq.s32.totalorder %s14, 0
    %p104 = por %p102, %p103
    %p105 = scmp.le.s32.totalorder 1, %s8
    %p106 = scmp.lt.s32.totalorder %s8, 5
    %p107 = pnand %p105, %p106
    %p108 = pneg %p107
    // Predicated region
    $region9: #{double_conv.5} parent=5 // pred_check
      _
    $region10: #{double_conv.5} parent=5 // pred_check_branch
      %110 = sbr.rel (%p107) target = $region12
    $region11: #{double_conv.5} parent=5 // pred_region
      %s111 = ssub.s32 %s8, 1
      // Predicated region
      $region13: #{double_conv.5} parent=11 // pred_check
        %p112 = pneg %p69
      $region14: #{double_conv.5} parent=11 // pred_check_branch
        %114 = sbr.rel (%p112) target = $region16
      $region15: #{double_conv.5} parent=11 // pred_region
        _
      $region16: #{double_conv.5} parent=11 // pred_fallthru
        _
    $region12: #{double_conv.5} parent=5 // pred_fallthru
      _
    %p115 = scmp.lt.s32.totalorder %s8, 4
    // Predicated region
    $region17: #{double_conv.5} parent=5 // pred_check
      %p116 = pneg %p115
    $region18: #{double_conv.5} parent=5 // pred_check_branch
      %118 = sbr.rel (%p116) target = $region20
    $region19: #{double_conv.5} parent=5 // pred_region
      // Predicated region
      $region21: #{double_conv.5} parent=19 // pred_check
        %p119 = pneg %p42
      $region22: #{double_conv.5} parent=19 // pred_check_branch
        %121 = sbr.rel (%p119) target = $region24
      $region23: #{double_conv.5} parent=19 // pred_region
        %s122 = smul.u32 8, %s16
        %p123 = scmp.lt.s32.totalorder %s15, 1
        %s124 = scalar_select %p123, %s15, 1
        %p125 = scmp.lt.s32.totalorder %s122, 15
        %s126 = scalar_select %p125, %s122, 15
        %s127 = smul.addr %s126, 2
        %s128 = smul.addr %s124, 32
        %s129 = sadd.s32 %s127, %s128
        %s130 = smul.addr %s129, 4
        %s131 = scalar_lea.vmem %s0, %s130
        %s132 = smul.u32 8, %s16
      $region24: #{double_conv.5} parent=19 // pred_fallthru
        _
    $region20: #{double_conv.5} parent=5 // pred_fallthru
      _
    %p133 = scmp.le.s32.totalorder 1, %s8
    %p134 = scmp.lt.s32.totalorder %s8, 5
    %p135 = pnand %p133, %p134
    %p136 = pneg %p135
    // Predicated region
    $region25: #{double_conv.5} parent=5 // pred_check
      _
    $region26: #{double_conv.5} parent=5 // pred_check_branch
      %138 = sbr.rel (%p135) target = $region28
    $region27: #{double_conv.5} parent=5 // pred_region
      %s139 = ssub.s32 %s8, 1
      %s140 = smul.u32 8, %s18
      %p141 = scmp.lt.s32.totalorder %s17, 1
      %s142 = scalar_select %p141, %s17, 1
      %p143 = scmp.lt.s32.totalorder %s140, 15
      %s144 = scalar_select %p143, %s140, 15
      %s145 = smul.addr %s144, 2
      %s146 = smul.addr %s142, 32
      %s147 = sadd.s32 %s145, %s146
      %s148 = smul.addr %s147, 4
      %s149 = scalar_lea.vmem %s0, %s148
      %p150 = pneg %p48
      %p151 = pneg %p45
      %p152 = pneg %p69
      %p153 = pneg %p66
      %p154 = pneg %p97
      %p155 = pneg %p94
      %s156 = smul.u32 8, %s18
      %p157 = scmp.lt.s32.totalorder %s17, 1
      %s158 = scalar_select %p157, %s17, 1
      %p159 = scmp.lt.s32.totalorder %s156, 15
      %s160 = scalar_select %p159, %s156, 15
      %s161 = smul.addr %s160, 2
      %s162 = smul.addr %s158, 32
      %s163 = sadd.s32 %s161, %s162
      %s164 = smul.addr %s163, 8
      %s165 = scalar_lea.vmem %s2, %s164
      %s166 = smul.u32 8, %s18
      %p167 = scmp.lt.s32.totalorder %s17, 1
      %s168 = scalar_select %p167, %s17, 1
      %p169 = scmp.lt.s32.totalorder %s166, 15
      %s170 = scalar_select %p169, %s166, 15
      %s171 = smul.addr %s170, 2
      %s172 = smul.addr %s168, 32
      %s173 = sadd.s32 %s171, %s172
      %s174 = smul.addr %s173, 4
      %s175 = scalar_lea.vmem %s0, %s174
      %s176 = smul.u32 8, %s18
      %s177 = smul.u32 8, %s18
      %p178 = scmp.lt.s32.totalorder %s17, 1
      %s179 = scalar_select %p178, %s17, 1
      %p180 = scmp.lt.s32.totalorder %s177, 15
      %s181 = scalar_select %p180, %s177, 15
      %s182 = smul.addr %s181, 2
      %s183 = smul.addr %s179, 32
      %s184 = sadd.s32 %s182, %s183
      %s185 = smul.addr %s184, 8
      %s186 = scalar_lea.vmem %s2, %s185
      %s187 = smul.u32 8, %s18
      %v188 = vld [vmem:[%s1] sm:$0x3]
      %v189 = vld [vmem:[%s175] sm:$0xf]
      %v190 = vld [vmem:[%s175 + $0x4] sm:$0xf]
      %v191 = vld [vmem:[%s175 + $0x8] sm:$0xf]
      %v192 = vld [vmem:[%s175 + $0xc] sm:$0xf]
      %v193 = vld [vmem:[%s175 + $0x10] sm:$0xf]
      %v194 = vld [vmem:[%s175 + $0x14] sm:$0xf]
      %v195 = vld [vmem:[%s175 + $0x18] sm:$0xf]
      %v196 = vld [vmem:[%s175 + $0x1c] sm:$0xf]
      %v197 = vld [vmem:[%s175 + $0x20] sm:$0xf]
      %v198 = vld [vmem:[%s175 + $0x24] sm:$0xf]
      %v199 = vld [vmem:[%s175 + $0x28] sm:$0xf]
      %v200 = vld [vmem:[%s175 + $0x2c] sm:$0xf]
      %v201 = vld [vmem:[%s175 + $0x30] sm:$0xf]
      %v202 = vld [vmem:[%s175 + $0x34] sm:$0xf]
      %v203 = vld [vmem:[%s175 + $0x38] sm:$0xf]
      %v204 = vld [vmem:[%s175 + $0x3c] sm:$0xf]
      %v205 = vunpack.c.l.bf16 %v189
      %v206 = vunpack.c.l.bf16 %v190
      %v207 = vunpack.c.l.bf16 %v191
      %v208 = vunpack.c.l.bf16 %v192
      %v209 = vunpack.c.l.bf16 %v193
      %v210 = vunpack.c.l.bf16 %v194
      %v211 = vunpack.c.l.bf16 %v195
      %v212 = vunpack.c.l.bf16 %v196
      %v213 = vunpack.c.l.bf16 %v197
      %v214 = vunpack.c.l.bf16 %v198
      %v215 = vunpack.c.l.bf16 %v199
      %v216 = vunpack.c.l.bf16 %v200
      %v217 = vunpack.c.l.bf16 %v201
      %v218 = vunpack.c.l.bf16 %v202
      %v219 = vunpack.c.l.bf16 %v203
      %v220 = vunpack.c.l.bf16 %v204
      %v221 = vlaneseq
      %v222 = vshrl.u32 %v221, 7
      %v223 = vsub.s32 0, %v222
      %v224 = vrot.slane %v188, %v223
      %v225 = vmul.f32 %v205, %v224
      %v226 = vmul.f32 %v206, %v224
      %v227 = vmul.f32 %v207, %v224
      %v228 = vmul.f32 %v208, %v224
      %v229 = vmul.f32 %v209, %v224
      %v230 = vmul.f32 %v210, %v224
      %v231 = vmul.f32 %v211, %v224
      %v232 = vmul.f32 %v212, %v224
      %v233 = vmul.f32 %v213, %v224
      %v234 = vmul.f32 %v214, %v224
      %v235 = vmul.f32 %v215, %v224
      %v236 = vmul.f32 %v216, %v224
      %v237 = vmul.f32 %v217, %v224
      %v238 = vmul.f32 %v218, %v224
      %v239 = vmul.f32 %v219, %v224
      %v240 = vmul.f32 %v220, %v224
      %v241 = vlaneseq
      %v242 = vshrl.u32 %v241, 7
      %v243 = vsub.s32 1, %v242
      %v244 = vrot.slane %v188, %v243
      %v245 = vadd.f32 %v225, %v244
      %v246 = vadd.f32 %v226, %v244
      %v247 = vadd.f32 %v227, %v244
      %v248 = vadd.f32 %v228, %v244
      %v249 = vadd.f32 %v229, %v244
      %v250 = vadd.f32 %v230, %v244
      %v251 = vadd.f32 %v231, %v244
      %v252 = vadd.f32 %v232, %v244
      %v253 = vadd.f32 %v233, %v244
      %v254 = vadd.f32 %v234, %v244
      %v255 = vadd.f32 %v235, %v244
      %v256 = vadd.f32 %v236, %v244
      %v257 = vadd.f32 %v237, %v244
      %v258 = vadd.f32 %v238, %v244
      %v259 = vadd.f32 %v239, %v244
      %v260 = vadd.f32 %v240, %v244
      %v261 = vmax.f32 %v245, 0.0
      %v262 = vmax.f32 %v246, 0.0
      %v263 = vmax.f32 %v247, 0.0
      %v264 = vmax.f32 %v248, 0.0
      %v265 = vmax.f32 %v249, 0.0
      %v266 = vmax.f32 %v250, 0.0
      %v267 = vmax.f32 %v251, 0.0
      %v268 = vmax.f32 %v252, 0.0
      %v269 = vmax.f32 %v253, 0.0
      %v270 = vmax.f32 %v254, 0.0
      %v271 = vmax.f32 %v255, 0.0
      %v272 = vmax.f32 %v256, 0.0
      %v273 = vmax.f32 %v257, 0.0
      %v274 = vmax.f32 %v258, 0.0
      %v275 = vmax.f32 %v259, 0.0
      %v276 = vmax.f32 %v260, 0.0
      %vm277 = vcmask 64512
      %278 = vst.msk [vmem:[%s186] sm:$0xff] %vm277, %v261
      %279 = vst.msk [vmem:[%s186 + $0x8] sm:$0xff] %vm277, %v262
      %280 = vst.msk [vmem:[%s186 + $0x10] sm:$0xff] %vm277, %v263
      %281 = vst.msk [vmem:[%s186 + $0x18] sm:$0xff] %vm277, %v264
      %282 = vst.msk [vmem:[%s186 + $0x20] sm:$0xff] %vm277, %v265
      %283 = vst.msk [vmem:[%s186 + $0x28] sm:$0xff] %vm277, %v266
      %284 = vst.msk [vmem:[%s186 + $0x30] sm:$0xff] %vm277, %v267
      %285 = vst.msk [vmem:[%s186 + $0x38] sm:$0xff] %vm277, %v268
      %286 = vst.msk [vmem:[%s186 + $0x40] sm:$0xff] %vm277, %v269
      %287 = vst.msk [vmem:[%s186 + $0x48] sm:$0xff] %vm277, %v270
      %288 = vst.msk [vmem:[%s186 + $0x50] sm:$0xff] %vm277, %v271
      %289 = vst.msk [vmem:[%s186 + $0x58] sm:$0xff] %vm277, %v272
      %290 = vst.msk [vmem:[%s186 + $0x60] sm:$0xff] %vm277, %v273
      %291 = vst.msk [vmem:[%s186 + $0x68] sm:$0xff] %vm277, %v274
      %292 = vst.msk [vmem:[%s186 + $0x70] sm:$0xff] %vm277, %v275
      %293 = vst.msk [vmem:[%s186 + $0x78] sm:$0xff] %vm277, %v276
      %s294 = smul.u32 8, %s18
      %p295 = scmp.lt.s32.totalorder %s17, 1
      %s296 = scalar_select %p295, %s17, 1
      %p297 = scmp.lt.s32.totalorder %s294, 15
      %s298 = scalar_select %p297, %s294, 15
      %s299 = smul.addr %s298, 2
      %s300 = smul.addr %s296, 32
      %s301 = sadd.s32 %s299, %s300
      %s302 = smul.addr %s301, 8
      %s303 = scalar_lea.vmem %s2, %s302
      // Predicated region
      $region29: #{double_conv.5} parent=27 // pred_check
        %p304 = pneg %p94
      $region30: #{double_conv.5} parent=27 // pred_check_branch
        %306 = sbr.rel (%p304) target = $region32
      $region31: #{double_conv.5} parent=27 // pred_region
        %s307 = smul.u32 8, %s18
      $region32: #{double_conv.5} parent=27 // pred_fallthru
        _
    $region28: #{double_conv.5} parent=5 // pred_fallthru
      _
    %p308 = scmp.le.s32.totalorder 2, %s8
    // Predicated region
    $region33: #{double_conv.5} parent=5 // pred_check
      %p309 = pneg %p308
    $region34: #{double_conv.5} parent=5 // pred_check_branch
      %311 = sbr.rel (%p309) target = $region36
    $region35: #{double_conv.5} parent=5 // pred_region
      %s312 = ssub.s32 %s8, 2
      // Predicated region
      $region37: #{double_conv.5} parent=35 // pred_check
        %p313 = pneg %p100
      $region38: #{double_conv.5} parent=35 // pred_check_branch
        %315 = sbr.rel (%p313) target = $region40
      $region39: #{double_conv.5} parent=35 // pred_region
        %s316 = smul.u32 8, %s20
        %p317 = scmp.lt.s32.totalorder %s19, 1
        %s318 = scalar_select %p317, %s19, 1
        %p319 = scmp.lt.s32.totalorder %s316, 15
        %s320 = scalar_select %p319, %s316, 15
        %s321 = smul.addr %s320, 2
        %s322 = smul.addr %s318, 32
        %s323 = sadd.s32 %s321, %s322
        %s324 = smul.addr %s323, 8
        %s325 = scalar_lea.vmem %s2, %s324
      $region40: #{double_conv.5} parent=35 // pred_fallthru
        _
    $region36: #{double_conv.5} parent=5 // pred_fallthru
      _
  $region6: #{double_conv.5} parent=0 // loop_footer
    %s12 = sadd.s32 1, %s8
  $region7: #{double_conv.5} parent=0 // loop_footer_branch
    %7 = sbr.rel target = $region3
  $region8: #{double_conv.5} parent=0 // loop_exit
    _

// kernel: double_conv.3
$region0: #{double_conv.3}
  #allocation0 [shape = 'u32[]', space=smem, size = 0x4, offset = 0x4, fixed_abs, tag = 'smem constant byte address 0x4 - core index']
  #allocation1 [shape = 'u32[144,128]{1,0:T(1,128)}', space=vmem, size = 0x12000, scoped, tag = 'internal scratch']
  %s0 = inlined_call_operand.vmem [shape: f32[2,16,16,4], index: 0, kind: input, shape index: {}]
  %s1 = inlined_call_operand.vmem [shape: bf16[36,128], index: 1, kind: input, shape index: {}]
  %s2 = inlined_call_operand.vmem [shape: f32[2,4], index: 2, kind: input, shape index: {}]
  %s3 = inlined_call_operand.vmem [shape: bf16[2,16,16,128], index: 3, kind: output, shape index: {0}]
  %s4 = inlined_call_operand.vmem [shape: f32[2,2,2,128], index: 4, kind: output, shape index: {1}]
  %5 = xla_tuple %s3, %s4
  %s6 = sld [smem:[#allocation0]]
  $region53: #{double_conv.3} parent=0
    _
  %s8 = ssub.s32 1, %s6
  %s9 = scalar_select 0, %s8, %s6
  loop: start=0, step=1, limit=6
  $region2: #{double_conv.3} parent=0 // loop_pre_header
    _
  $region3: #{double_conv.3} parent=0 // loop_header
    %s11 = sphi 0, %s15
    %p12 = scmp.ge.s32.totalorder %s11, 6
    %s18 = sphi 0, %s30
    %s19 = sphi 0, %s26
    %s20 = sphi 0, %s18
    %s21 = sphi 0, %s19
    %s22 = sphi 0, %s20
    %s23 = sphi 0, %s21
    %s33 = sphi 0, %s35
    %s36 = sphi 0, %s33
    %s37 = sphi 0, %s36
    %s53 = sphi 0, %s37
    %s57 = sphi 0, %s57
    %s59 = sphi 0, %s57
    %s60 = sphi 0, %s59
    %s74 = sphi 0, %s60
    %s78 = sphi 0, %s78
    %s80 = sphi 0, %s78
    %s81 = sphi 0, %s80
    %s95 = sphi 0, %s81
    %s103 = sphi 0, %s105
    %s106 = sphi 0, %s103
    %s107 = sphi 0, %s106
    %s123 = sphi 0, %s107
    %s131 = sphi 0, %s133
    %s134 = sphi 0, %s131
    %s135 = sphi 0, %s134
    %s151 = sphi 0, %s135
  $region4: #{double_conv.3} parent=0 // loop_header_branch
    %14 = sbr.rel (%p12) target = $region8
  $region5: #{double_conv.3} parent=0 // loop_body
    %s16 = ssub.s32 %s11, 1
    %s17 = ssub.s32 %s11, 2
    %s24 = sadd.s32 1, %s19
    %p25 = scmp.ge.s32.totalorder %s24, 2
    %s26 = scalar_select %p25, 0, %s24
    %s27 = sadd.s32 1, %s18
    %s28 = scalar_select %p25, %s27, %s18
    %p29 = scmp.ge.s32.totalorder %s28, 2
    %s30 = scalar_select %p29, 0, %s28
    %s31 = ssub.s32 %s18, %s30
    %p32 = scmp.eq.s32.totalorder %s31, 0
    %s34 = sadd.s32 %s33, 1
    %s35 = scalar_select %p32, %s33, %s34
    %p38 = pneg %p32
    %p39 = scmp.eq.s32.totalorder %s11, 3
    %p40 = por %p38, %p39
    %p41 = scmp.ne.s32.totalorder %s33, %s36
    %p42 = scmp.eq.s32.totalorder %s11, 0
    %p43 = por %p41, %p42
    %p44 = scmp.ne.s32.totalorder %s33, %s36
    %p45 = scmp.eq.s32.totalorder %s16, 3
    %p46 = por %p44, %p45
    %p47 = scmp.ne.s32.totalorder %s36, %s37
    %p48 = scmp.eq.s32.totalorder %s16, 0
    %p49 = por %p47, %p48
    %p50 = scmp.ne.s32.totalorder %s36, %s37
    %p51 = scmp.eq.s32.totalorder %s17, 3
    %p52 = por %p50, %p51
    %p54 = scmp.ne.s32.totalorder %s37, %s53
    %p55 = scmp.eq.s32.totalorder %s17, 0
    %p56 = por %p54, %p55
    %s58 = sadd.s32 %s57, 1
    %p61 = scmp.eq.s32.totalorder %s11, 3
    %p62 = scmp.ne.s32.totalorder %s57, %s59
    %p63 = scmp.eq.s32.totalorder %s11, 0
    %p64 = por %p62, %p63
    %p65 = scmp.ne.s32.totalorder %s57, %s59
    %p66 = scmp.eq.s32.totalorder %s16, 3
    %p67 = por %p65, %p66
    %p68 = scmp.ne.s32.totalorder %s59, %s60
    %p69 = scmp.eq.s32.totalorder %s16, 0
    %p70 = por %p68, %p69
    %p71 = scmp.ne.s32.totalorder %s59, %s60
    %p72 = scmp.eq.s32.totalorder %s17, 3
    %p73 = por %p71, %p72
    %p75 = scmp.ne.s32.totalorder %s60, %s74
    %p76 = scmp.eq.s32.totalorder %s17, 0
    %p77 = por %p75, %p76
    %s79 = sadd.s32 %s78, 1
    %p82 = scmp.eq.s32.totalorder %s11, 3
    %p83 = scmp.ne.s32.totalorder %s78, %s80
    %p84 = scmp.eq.s32.totalorder %s11, 0
    %p85 = por %p83, %p84
    %p86 = scmp.ne.s32.totalorder %s78, %s80
    %p87 = scmp.eq.s32.totalorder %s16, 3
    %p88 = por %p86, %p87
    %p89 = scmp.ne.s32.totalorder %s80, %s81
    %p90 = scmp.eq.s32.totalorder %s16, 0
    %p91 = por %p89, %p90
    %p92 = scmp.ne.s32.totalorder %s80, %s81
    %p93 = scmp.eq.s32.totalorder %s17, 3
    %p94 = por %p92, %p93
    %p96 = scmp.ne.s32.totalorder %s81, %s95
    %p97 = scmp.eq.s32.totalorder %s17, 0
    %p98 = por %p96, %p97
    %s99 = ssub.s32 %s18, %s30
    %s100 = ssub.s32 %s19, %s26
    %s101 = sor.u32 %s99, %s100
    %p102 = scmp.eq.s32.totalorder %s101, 0
    %s104 = sadd.s32 %s103, 1
    %s105 = scalar_select %p102, %s103, %s104
    %p108 = pneg %p102
    %p109 = scmp.eq.s32.totalorder %s11, 3
    %p110 = por %p108, %p109
    %p111 = scmp.ne.s32.totalorder %s103, %s106
    %p112 = scmp.eq.s32.totalorder %s11, 0
    %p113 = por %p111, %p112
    %p114 = scmp.ne.s32.totalorder %s103, %s106
    %p115 = scmp.eq.s32.totalorder %s16, 3
    %p116 = por %p114, %p115
    %p117 = scmp.ne.s32.totalorder %s106, %s107
    %p118 = scmp.eq.s32.totalorder %s16, 0
    %p119 = por %p117, %p118
    %p120 = scmp.ne.s32.totalorder %s106, %s107
    %p121 = scmp.eq.s32.totalorder %s17, 3
    %p122 = por %p120, %p121
    %p124 = scmp.ne.s32.totalorder %s107, %s123
    %p125 = scmp.eq.s32.totalorder %s17, 0
    %p126 = por %p124, %p125
    %s127 = ssub.s32 %s18, %s30
    %s128 = ssub.s32 %s19, %s26
    %s129 = sor.u32 %s127, %s128
    %p130 = scmp.eq.s32.totalorder %s129, 0
    %s132 = sadd.s32 %s131, 1
    %s133 = scalar_select %p130, %s131, %s132
    %p136 = pneg %p130
    %p137 = scmp.eq.s32.totalorder %s11, 3
    %p138 = por %p136, %p137
    %p139 = scmp.ne.s32.totalorder %s131, %s134
    %p140 = scmp.eq.s32.totalorder %s11, 0
    %p141 = por %p139, %p140
    %p142 = scmp.ne.s32.totalorder %s131, %s134
    %p143 = scmp.eq.s32.totalorder %s16, 3
    %p144 = por %p142, %p143
    %p145 = scmp.ne.s32.totalorder %s134, %s135
    %p146 = scmp.eq.s32.totalorder %s16, 0
    %p147 = por %p145, %p146
    %p148 = scmp.ne.s32.totalorder %s134, %s135
    %p149 = scmp.eq.s32.totalorder %s17, 3
    %p150 = por %p148, %p149
    %p152 = scmp.ne.s32.totalorder %s135, %s151
    %p153 = scmp.eq.s32.totalorder %s17, 0
    %p154 = por %p152, %p153
    %p155 = scmp.le.s32.totalorder 1, %s11
    %p156 = scmp.lt.s32.totalorder %s11, 5
    %p157 = pnand %p155, %p156
    %p158 = pneg %p157
    // Predicated region
    $region9: #{double_conv.3} parent=5 // pred_check
      _
    $region10: #{double_conv.3} parent=5 // pred_check_branch
      %160 = sbr.rel (%p157) target = $region12
    $region11: #{double_conv.3} parent=5 // pred_region
      %s161 = ssub.s32 %s11, 1
      // Predicated region
      $region13: #{double_conv.3} parent=11 // pred_check
        %p162 = pneg %p70
      $region14: #{double_conv.3} parent=11 // pred_check_branch
        %164 = sbr.rel (%p162) target = $region16
      $region15: #{double_conv.3} parent=11 // pred_region
        _
      $region16: #{double_conv.3} parent=11 // pred_fallthru
        _
      // Predicated region
      $region17: #{double_conv.3} parent=11 // pred_check
        %p165 = pneg %p91
      $region18: #{double_conv.3} parent=11 // pred_check_branch
        %167 = sbr.rel (%p165) target = $region20
      $region19: #{double_conv.3} parent=11 // pred_region
        _
      $region20: #{double_conv.3} parent=11 // pred_fallthru
        _
    $region12: #{double_conv.3} parent=5 // pred_fallthru
      _
    %p168 = scmp.lt.s32.totalorder %s11, 4
    // Predicated region
    $region21: #{double_conv.3} parent=5 // pred_check
      %p169 = pneg %p168
    $region22: #{double_conv.3} parent=5 // pred_check_branch
      %171 = sbr.rel (%p169) target = $region24
    $region23: #{double_conv.3} parent=5 // pred_region
      // Predicated region
      $region25: #{double_conv.3} parent=23 // pred_check
        %p172 = pneg %p43
      $region26: #{double_conv.3} parent=23 // pred_check_branch
        %174 = sbr.rel (%p172) target = $region28
      $region27: #{double_conv.3} parent=23 // pred_region
        %p175 = scmp.lt.s32.totalorder %s18, 1
        %s176 = scalar_select %p175, %s18, 1
        %s177 = smul.addr %s176, 32
        %s178 = smul.addr %s177, 8
        %s179 = scalar_lea.vmem %s0, %s178
      $region28: #{double_conv.3} parent=23 // pred_fallthru
        _
    $region24: #{double_conv.3} parent=5 // pred_fallthru
      _
    %p180 = scmp.le.s32.totalorder 1, %s11
    %p181 = scmp.lt.s32.totalorder %s11, 5
    %p182 = pnand %p180, %p181
    %p183 = pneg %p182
    // Predicated region
    $region29: #{double_conv.3} parent=5 // pred_check
      _
    $region30: #{double_conv.3} parent=5 // pred_check_branch
      %185 = sbr.rel (%p182) target = $region32
    $region31: #{double_conv.3} parent=5 // pred_region
      %s186 = ssub.s32 %s11, 1
      %p187 = scmp.lt.s32.totalorder %s20, 1
      %s188 = scalar_select %p187, %s20, 1
      %s189 = smul.addr %s188, 32
      %s190 = smul.addr %s189, 8
      %s191 = scalar_lea.vmem %s0, %s190
      %p192 = pneg %p49
      %p193 = pneg %p46
      %p194 = pneg %p70
      %p195 = pneg %p67
      %p196 = pneg %p91
      %p197 = pneg %p88
      %p198 = pneg %p119
      %p199 = pneg %p116
      %s200 = smul.u32 8, %s21
      %p201 = scmp.lt.s32.totalorder %s20, 1
      %s202 = scalar_select %p201, %s20, 1
      %p203 = scmp.lt.s32.totalorder %s200, 15
      %s204 = scalar_select %p203, %s200, 15
      %s205 = smul.addr %s204, 2
      %s206 = smul.addr %s202, 32
      %s207 = sadd.s32 %s205, %s206
      %s208 = smul.addr %s207, 4
      %s209 = scalar_lea.vmem %s3, %s208
      %p210 = pneg %p147
      %p211 = pneg %p144
      %p212 = scmp.lt.s32.totalorder %s20, 1
      %s213 = scalar_select %p212, %s20, 1
      %p214 = scmp.lt.s32.totalorder %s21, 1
      %s215 = scalar_select %p214, %s21, 1
      %s216 = smul.addr %s213, 2
      %s217 = sadd.s32 %s215, %s216
      %s218 = smul.addr %s217, 2
      %s219 = scalar_lea.vmem %s4, %s218
      %p220 = scmp.lt.s32.totalorder %s20, 1
      %s221 = scalar_select %p220, %s20, 1
      %s222 = smul.addr %s221, 32
      %s223 = smul.addr %s222, 8
      %s224 = scalar_lea.vmem %s0, %s223
      %s225 = smul.u32 8, %s21
      %p226 = scmp.lt.s32.totalorder %s20, 1
      %s227 = scalar_select %p226, %s20, 1
      %p228 = scmp.lt.s32.totalorder %s225, 15
      %s229 = scalar_select %p228, %s225, 15
      %s230 = smul.addr %s229, 2
      %s231 = smul.addr %s227, 32
      %s232 = sadd.s32 %s230, %s231
      %s233 = smul.addr %s232, 4
      %s234 = scalar_lea.vmem %s3, %s233
      %s235 = smul.u32 8, %s21
      %p236 = scmp.lt.s32.totalorder %s20, 1
      %s237 = scalar_select %p236, %s20, 1
      %p238 = scmp.lt.s32.totalorder %s21, 1
      %s239 = scalar_select %p238, %s21, 1
      %s240 = smul.addr %s237, 2
      %s241 = sadd.s32 %s239, %s240
      %s242 = smul.addr %s241, 2
      %s243 = scalar_lea.vmem %s4, %s242
      %s245 = smul.u32 %s21, 8
      %s246 = smul.u32 %s245, 16
      %s247 = scalar_lea.vmem %s224, %s246
      %v248 = vld [vmem:[%s247] sm:$0xff]
      %v249 = vld [vmem:[%s247 + $0x8] sm:$0xff]
      %v250 = vld [vmem:[%s247 + $0x10] sm:$0xff]
      %v251 = vld [vmem:[%s247 + $0x18] sm:$0xff]
      %v252 = vld [vmem:[%s247 + $0x20] sm:$0xff]
      %v253 = vld [vmem:[%s247 + $0x28] sm:$0xff]
      %v254 = vld [vmem:[%s247 + $0x30] sm:$0xff]
      %v255 = vld [vmem:[%s247 + $0x38] sm:$0xff]
      %v256 = vld [vmem:[%s247 + $0x40] sm:$0xff]
      %v257 = vld [vmem:[%s247 + $0x48] sm:$0xff]
      %v258 = vld [vmem:[%s247 + $0x50] sm:$0xff]
      %v259 = vld [vmem:[%s247 + $0x58] sm:$0xff]
      %v260 = vld [vmem:[%s247 + $0x60] sm:$0xff]
      %v261 = vld [vmem:[%s247 + $0x68] sm:$0xff]
      %v262 = vld [vmem:[%s247 + $0x70] sm:$0xff]
      %v263 = vld [vmem:[%s247 + $0x78] sm:$0xff]
      %s264 = ssub.s32 %s245, 1
      %p265 = scmp.gt.s32.totalorder %s264, 0
      %s266 = scalar_select %p265, %s264, 0
      %s267 = smul.u32 %s266, 16
      %s268 = scalar_lea.vmem %s224, %s267
      %v269 = vld [vmem:[%s268] sm:$0xff]
      %v270 = vld [vmem:[%s268 + $0x8] sm:$0xff]
      %s271 = sadd.s32 %s245, 8
      %p272 = scmp.lt.s32.totalorder %s271, 15
      %s273 = scalar_select %p272, %s271, 15
      %s274 = smul.u32 %s273, 16
      %s275 = scalar_lea.vmem %s224, %s274
      %v276 = vld [vmem:[%s275] sm:$0xff]
      %v277 = vld [vmem:[%s275 + $0x8] sm:$0xff]
      %p278 = scmp.gt.s32.totalorder %s21, 0
      %s279 = scalar_select %p278, 1, 0
      %v280 = vstv %s279
      %vm281 = vcmp.eq.s32.totalorder %v280, 1
      %v282 = vsel %vm281, %v269, 0.0
      %v283 = vsel %vm281, %v270, 0.0
      %p284 = scmp.lt.s32.totalorder %s21, 1
      %s285 = scalar_select %p284, 1, 0
      %v286 = vstv %s285
      %vm287 = vcmp.eq.s32.totalorder %v286, 1
      %v288 = vsel %vm287, %v276, 0.0
      %v289 = vsel %vm287, %v277, 0.0
      %v290 = vpack.c.bf16 %v283, %v282
      %v291 = vpack.c.bf16 %v249, %v248
      %v292 = vpack.c.bf16 %v251, %v250
      %v293 = vpack.c.bf16 %v253, %v252
      %v294 = vpack.c.bf16 %v255, %v254
      %v295 = vpack.c.bf16 %v257, %v256
      %v296 = vpack.c.bf16 %v259, %v258
      %v297 = vpack.c.bf16 %v261, %v260
      %v298 = vpack.c.bf16 %v263, %v262
      %v299 = vpack.c.bf16 %v289, %v288
      %v301 = vshrl.u32 %v290, 16
      %v303 = vrot.slane %v301, 7
      %v304 = vshll.u32 %v290, 16
      %v306 = vor.u32 %v303, %v304
      %v308 = vshrl.u32 %v291, 16
      %v310 = vrot.slane %v308, 7
      %v311 = vshll.u32 %v291, 16
      %v313 = vor.u32 %v310, %v311
      %v315 = vshrl.u32 %v292, 16
      %v317 = vrot.slane %v315, 7
      %v318 = vshll.u32 %v292, 16
      %v320 = vor.u32 %v317, %v318
      %v322 = vshrl.u32 %v293, 16
      %v324 = vrot.slane %v322, 7
      %v325 = vshll.u32 %v293, 16
      %v327 = vor.u32 %v324, %v325
      %v329 = vshrl.u32 %v294, 16
      %v331 = vrot.slane %v329, 7
      %v332 = vshll.u32 %v294, 16
      %v334 = vor.u32 %v331, %v332
      %v336 = vshrl.u32 %v295, 16
      %v338 = vrot.slane %v336, 7
      %v339 = vshll.u32 %v295, 16
      %v341 = vor.u32 %v338, %v339
      %v343 = vshrl.u32 %v296, 16
      %v345 = vrot.slane %v343, 7
      %v346 = vshll.u32 %v296, 16
      %v348 = vor.u32 %v345, %v346
      %v350 = vshrl.u32 %v297, 16
      %v352 = vrot.slane %v350, 7
      %v353 = vshll.u32 %v297, 16
      %v355 = vor.u32 %v352, %v353
      %v357 = vshrl.u32 %v298, 16
      %v359 = vrot.slane %v357, 7
      %v360 = vshll.u32 %v298, 16
      %v362 = vor.u32 %v359, %v360
      %v364 = vshrl.u32 %v299, 16
      %v366 = vrot.slane %v364, 7
      %v367 = vshll.u32 %v299, 16
      %v369 = vor.u32 %v366, %v367
      %vm390 = vcmask 1040384
      %vm391 = vsmask.f32 256
      %vm392 = vmand %vm390, %vm391
      %v393 = vsel %vm392, 0, %v306
      %v394 = vsel %vm392, 0, %v313
      %v395 = vsel %vm392, 0, %v320
      %v396 = vsel %vm392, 0, %v327
      %v397 = vsel %vm392, 0, %v334
      %v398 = vsel %vm392, 0, %v341
      %v399 = vsel %vm392, 0, %v348
      %v400 = vsel %vm392, 0, %v355
      %v401 = vsel %vm392, 0, %v362
      %v402 = vsel %vm392, 0, %v369
      %v403 = vsel %vm392, %v303, 0
      %v404 = vsel %vm392, %v310, 0
      %v405 = vsel %vm392, %v317, 0
      %v406 = vsel %vm392, %v324, 0
      %v407 = vsel %vm392, %v331, 0
      %v408 = vsel %vm392, %v338, 0
      %v409 = vsel %vm392, %v345, 0
      %v410 = vsel %vm392, %v352, 0
      %v411 = vsel %vm392, %v359, 0
      %v412 = vsel %vm392, %v366, 0
      %vm413 = vsmask.f32 7424
      %v415 = vshrl.u32 %v393, 16
      %v417 = vshll.u32 %v393, 16
      %v419 = vrot.slane %v417, 1
      %v420 = vor.u32 %v415, %v419
      %v422 = vshll.u32 %v403, 16
      %v424 = vrot.slane %v422, 1
      %v425 = vsel %vm413, %v420, %v424
      %v427 = vshrl.u32 %v394, 16
      %v429 = vshll.u32 %v394, 16
      %v431 = vrot.slane %v429, 1
      %v432 = vor.u32 %v427, %v431
      %v434 = vshll.u32 %v404, 16
      %v436 = vrot.slane %v434, 1
      %v437 = vsel %vm413, %v432, %v436
      %v439 = vshrl.u32 %v395, 16
      %v441 = vshll.u32 %v395, 16
      %v443 = vrot.slane %v441, 1
      %v444 = vor.u32 %v439, %v443
      %v446 = vshll.u32 %v405, 16
      %v448 = vrot.slane %v446, 1
      %v449 = vsel %vm413, %v444, %v448
      %v451 = vshrl.u32 %v396, 16
      %v453 = vshll.u32 %v396, 16
      %v455 = vrot.slane %v453, 1
      %v456 = vor.u32 %v451, %v455
      %v458 = vshll.u32 %v406, 16
      %v460 = vrot.slane %v458, 1
      %v461 = vsel %vm413, %v456, %v460
      %v463 = vshrl.u32 %v397, 16
      %v465 = vshll.u32 %v397, 16
      %v467 = vrot.slane %v465, 1
      %v468 = vor.u32 %v463, %v467
      %v470 = vshll.u32 %v407, 16
      %v472 = vrot.slane %v470, 1
      %v473 = vsel %vm413, %v468, %v472
      %v475 = vshrl.u32 %v398, 16
      %v477 = vshll.u32 %v398, 16
      %v479 = vrot.slane %v477, 1
      %v480 = vor.u32 %v475, %v479
      %v482 = vshll.u32 %v408, 16
      %v484 = vrot.slane %v482, 1
      %v485 = vsel %vm413, %v480, %v484
      %v487 = vshrl.u32 %v399, 16
      %v489 = vshll.u32 %v399, 16
      %v491 = vrot.slane %v489, 1
      %v492 = vor.u32 %v487, %v491
      %v494 = vshll.u32 %v409, 16
      %v496 = vrot.slane %v494, 1
      %v497 = vsel %vm413, %v492, %v496
      %v499 = vshrl.u32 %v400, 16
      %v501 = vshll.u32 %v400, 16
      %v503 = vrot.slane %v501, 1
      %v504 = vor.u32 %v499, %v503
      %v506 = vshll.u32 %v410, 16
      %v508 = vrot.slane %v506, 1
      %v509 = vsel %vm413, %v504, %v508
      %510 = vrot.lane.b32.xlu0 %v425, 4
      %v511 = vpop.permute.xlu0 %510
      %512 = vrot.lane.b32.xlu0 %v437, 4
      %v513 = vpop.permute.xlu0 %512
      %514 = vrot.lane.b32.xlu0 %v449, 4
      %v515 = vpop.permute.xlu0 %514
      %516 = vrot.lane.b32.xlu0 %v461, 4
      %v517 = vpop.permute.xlu0 %516
      %518 = vrot.lane.b32.xlu0 %v473, 4
      %v519 = vpop.permute.xlu0 %518
      %520 = vrot.lane.b32.xlu0 %v485, 4
      %v521 = vpop.permute.xlu0 %520
      %522 = vrot.lane.b32.xlu0 %v497, 4
      %v523 = vpop.permute.xlu0 %522
      %524 = vrot.lane.b32.xlu0 %v509, 4
      %v525 = vpop.permute.xlu0 %524
      %vm542 = vcmask 1046528
      %v543 = vrot.slane %v393, 1
      %v544 = vrot.slane %v403, 1
      %v545 = vsel %vm542, %v543, %v544
      %v546 = vrot.slane %v394, 1
      %v547 = vrot.slane %v404, 1
      %v548 = vsel %vm542, %v546, %v547
      %v549 = vrot.slane %v395, 1
      %v550 = vrot.slane %v405, 1
      %v551 = vsel %vm542, %v549, %v550
      %v552 = vrot.slane %v396, 1
      %v553 = vrot.slane %v406, 1
      %v554 = vsel %vm542, %v552, %v553
      %v555 = vrot.slane %v397, 1
      %v556 = vrot.slane %v407, 1
      %v557 = vsel %vm542, %v555, %v556
      %v558 = vrot.slane %v398, 1
      %v559 = vrot.slane %v408, 1
      %v560 = vsel %vm542, %v558, %v559
      %v561 = vrot.slane %v399, 1
      %v562 = vrot.slane %v409, 1
      %v563 = vsel %vm542, %v561, %v562
      %v564 = vrot.slane %v400, 1
      %v565 = vrot.slane %v410, 1
      %v566 = vsel %vm542, %v564, %v565
      %567 = vrot.lane.b32.xlu0 %v545, 8
      %v568 = vpop.permute.xlu0 %567
      %569 = vrot.lane.b32.xlu0 %v548, 8
      %v570 = vpop.permute.xlu0 %569
      %571 = vrot.lane.b32.xlu0 %v551, 8
      %v572 = vpop.permute.xlu0 %571
      %573 = vrot.lane.b32.xlu0 %v554, 8
      %v574 = vpop.permute.xlu0 %573
      %575 = vrot.lane.b32.xlu0 %v557, 8
      %v576 = vpop.permute.xlu0 %575
      %577 = vrot.lane.b32.xlu0 %v560, 8
      %v578 = vpop.permute.xlu0 %577
      %579 = vrot.lane.b32.xlu0 %v563, 8
      %v580 = vpop.permute.xlu0 %579
      %581 = vrot.lane.b32.xlu0 %v566, 8
      %v582 = vpop.permute.xlu0 %581
      %584 = vrot.lane.b32.xlu0 %v394, 12
      %v585 = vpop.permute.xlu0 %584
      %586 = vrot.lane.b32.xlu0 %v395, 12
      %v587 = vpop.permute.xlu0 %586
      %588 = vrot.lane.b32.xlu0 %v396, 12
      %v589 = vpop.permute.xlu0 %588
      %590 = vrot.lane.b32.xlu0 %v397, 12
      %v591 = vpop.permute.xlu0 %590
      %592 = vrot.lane.b32.xlu0 %v398, 12
      %v593 = vpop.permute.xlu0 %592
      %594 = vrot.lane.b32.xlu0 %v399, 12
      %v595 = vpop.permute.xlu0 %594
      %596 = vrot.lane.b32.xlu0 %v400, 12
      %v597 = vpop.permute.xlu0 %596
      %598 = vrot.lane.b32.xlu0 %v401, 12
      %v599 = vpop.permute.xlu0 %598
      %v601 = vshrl.u32 %v401, 16
      %v603 = vshll.u32 %v401, 16
      %v605 = vrot.slane %v603, 1
      %v606 = vor.u32 %v601, %v605
      %v608 = vshll.u32 %v411, 16
      %v610 = vrot.slane %v608, 1
      %v611 = vsel %vm413, %v606, %v610
      %612 = vrot.lane.b32.xlu0 %v437, 16
      %v613 = vpop.permute.xlu0 %612
      %614 = vrot.lane.b32.xlu0 %v449, 16
      %v615 = vpop.permute.xlu0 %614
      %616 = vrot.lane.b32.xlu0 %v461, 16
      %v617 = vpop.permute.xlu0 %616
      %618 = vrot.lane.b32.xlu0 %v473, 16
      %v619 = vpop.permute.xlu0 %618
      %620 = vrot.lane.b32.xlu0 %v485, 16
      %v621 = vpop.permute.xlu0 %620
      %622 = vrot.lane.b32.xlu0 %v497, 16
      %v623 = vpop.permute.xlu0 %622
      %624 = vrot.lane.b32.xlu0 %v509, 16
      %v625 = vpop.permute.xlu0 %624
      %626 = vrot.lane.b32.xlu0 %v611, 16
      %v627 = vpop.permute.xlu0 %626
      %v629 = vrot.slane %v401, 1
      %v630 = vrot.slane %v411, 1
      %v631 = vsel %vm542, %v629, %v630
      %632 = vrot.lane.b32.xlu0 %v548, 20
      %v633 = vpop.permute.xlu0 %632
      %634 = vrot.lane.b32.xlu0 %v551, 20
      %v635 = vpop.permute.xlu0 %634
      %636 = vrot.lane.b32.xlu0 %v554, 20
      %v637 = vpop.permute.xlu0 %636
      %638 = vrot.lane.b32.xlu0 %v557, 20
      %v639 = vpop.permute.xlu0 %638
      %640 = vrot.lane.b32.xlu0 %v560, 20
      %v641 = vpop.permute.xlu0 %640
      %642 = vrot.lane.b32.xlu0 %v563, 20
      %v643 = vpop.permute.xlu0 %642
      %644 = vrot.lane.b32.xlu0 %v566, 20
      %v645 = vpop.permute.xlu0 %644
      %646 = vrot.lane.b32.xlu0 %v631, 20
      %v647 = vpop.permute.xlu0 %646
      %649 = vrot.lane.b32.xlu0 %v395, 24
      %v650 = vpop.permute.xlu0 %649
      %651 = vrot.lane.b32.xlu0 %v396, 24
      %v652 = vpop.permute.xlu0 %651
      %653 = vrot.lane.b32.xlu0 %v397, 24
      %v654 = vpop.permute.xlu0 %653
      %655 = vrot.lane.b32.xlu0 %v398, 24
      %v656 = vpop.permute.xlu0 %655
      %657 = vrot.lane.b32.xlu0 %v399, 24
      %v658 = vpop.permute.xlu0 %657
      %659 = vrot.lane.b32.xlu0 %v400, 24
      %v660 = vpop.permute.xlu0 %659
      %661 = vrot.lane.b32.xlu0 %v401, 24
      %v662 = vpop.permute.xlu0 %661
      %663 = vrot.lane.b32.xlu0 %v402, 24
      %v664 = vpop.permute.xlu0 %663
      %v666 = vshrl.u32 %v402, 16
      %v668 = vshll.u32 %v402, 16
      %v670 = vrot.slane %v668, 1
      %v671 = vor.u32 %v666, %v670
      %v673 = vshll.u32 %v412, 16
      %v675 = vrot.slane %v673, 1
      %v676 = vsel %vm413, %v671, %v675
      %677 = vrot.lane.b32.xlu0 %v449, 28
      %v678 = vpop.permute.xlu0 %677
      %679 = vrot.lane.b32.xlu0 %v461, 28
      %v680 = vpop.permute.xlu0 %679
      %681 = vrot.lane.b32.xlu0 %v473, 28
      %v682 = vpop.permute.xlu0 %681
      %683 = vrot.lane.b32.xlu0 %v485, 28
      %v684 = vpop.permute.xlu0 %683
      %685 = vrot.lane.b32.xlu0 %v497, 28
      %v686 = vpop.permute.xlu0 %685
      %687 = vrot.lane.b32.xlu0 %v509, 28
      %v688 = vpop.permute.xlu0 %687
      %689 = vrot.lane.b32.xlu0 %v611, 28
      %v690 = vpop.permute.xlu0 %689
      %691 = vrot.lane.b32.xlu0 %v676, 28
      %v692 = vpop.permute.xlu0 %691
      %v694 = vrot.slane %v402, 1
      %v695 = vrot.slane %v412, 1
      %v696 = vsel %vm542, %v694, %v695
      %697 = vrot.lane.b32.xlu0 %v551, 32
      %v698 = vpop.permute.xlu0 %697
      %699 = vrot.lane.b32.xlu0 %v554, 32
      %v700 = vpop.permute.xlu0 %699
      %701 = vrot.lane.b32.xlu0 %v557, 32
      %v702 = vpop.permute.xlu0 %701
      %703 = vrot.lane.b32.xlu0 %v560, 32
      %v704 = vpop.permute.xlu0 %703
      %705 = vrot.lane.b32.xlu0 %v563, 32
      %v706 = vpop.permute.xlu0 %705
      %707 = vrot.lane.b32.xlu0 %v566, 32
      %v708 = vpop.permute.xlu0 %707
      %709 = vrot.lane.b32.xlu0 %v631, 32
      %v710 = vpop.permute.xlu0 %709
      %711 = vrot.lane.b32.xlu0 %v696, 32
      %v712 = vpop.permute.xlu0 %711
      %vm713 = vcmask 31744
      %v715 = vsel %vm713, %v393, %v511
      %v717 = vsel %vm713, %v394, %v513
      %v719 = vsel %vm713, %v395, %v515
      %v721 = vsel %vm713, %v396, %v517
      %v723 = vsel %vm713, %v397, %v519
      %v725 = vsel %vm713, %v398, %v521
      %v727 = vsel %vm713, %v399, %v523
      %v729 = vsel %vm713, %v400, %v525
      %vm730 = vcmask 64512
      %v732 = vsel %vm730, %v715, %v568
      %v734 = vsel %vm730, %v717, %v570
      %v736 = vsel %vm730, %v719, %v572
      %v738 = vsel %vm730, %v721, %v574
      %v740 = vsel %vm730, %v723, %v576
      %v742 = vsel %vm730, %v725, %v578
      %v744 = vsel %vm730, %v727, %v580
      %v746 = vsel %vm730, %v729, %v582
      %vm747 = vcmask 97280
      %v749 = vsel %vm747, %v732, %v585
      %v751 = vsel %vm747, %v734, %v587
      %v753 = vsel %vm747, %v736, %v589
      %v755 = vsel %vm747, %v738, %v591
      %v757 = vsel %vm747, %v740, %v593
      %v759 = vsel %vm747, %v742, %v595
      %v761 = vsel %vm747, %v744, %v597
      %v763 = vsel %vm747, %v746, %v599
      %vm764 = vcmask 130048
      %v766 = vsel %vm764, %v749, %v613
      %v768 = vsel %vm764, %v751, %v615
      %v770 = vsel %vm764, %v753, %v617
      %v772 = vsel %vm764, %v755, %v619
      %v774 = vsel %vm764, %v757, %v621
      %v776 = vsel %vm764, %v759, %v623
      %v778 = vsel %vm764, %v761, %v625
      %v780 = vsel %vm764, %v763, %v627
      %vm781 = vcmask 162816
      %v783 = vsel %vm781, %v766, %v633
      %v785 = vsel %vm781, %v768, %v635
      %v787 = vsel %vm781, %v770, %v637
      %v789 = vsel %vm781, %v772, %v639
      %v791 = vsel %vm781, %v774, %v641
      %v793 = vsel %vm781, %v776, %v643
      %v795 = vsel %vm781, %v778, %v645
      %v797 = vsel %vm781, %v780, %v647
      %vm798 = vcmask 195584
      %v800 = vsel %vm798, %v783, %v650
      %v802 = vsel %vm798, %v785, %v652
      %v804 = vsel %vm798, %v787, %v654
      %v806 = vsel %vm798, %v789, %v656
      %v808 = vsel %vm798, %v791, %v658
      %v810 = vsel %vm798, %v793, %v660
      %v812 = vsel %vm798, %v795, %v662
      %v814 = vsel %vm798, %v797, %v664
      %vm815 = vcmask 228352
      %v817 = vsel %vm815, %v800, %v678
      %v819 = vsel %vm815, %v802, %v680
      %v821 = vsel %vm815, %v804, %v682
      %v823 = vsel %vm815, %v806, %v684
      %v825 = vsel %vm815, %v808, %v686
      %v827 = vsel %vm815, %v810, %v688
      %v829 = vsel %vm815, %v812, %v690
      %v831 = vsel %vm815, %v814, %v692
      %vm832 = vcmask 261120
      %v834 = vsel %vm832, %v817, %v698
      %v836 = vsel %vm832, %v819, %v700
      %v838 = vsel %vm832, %v821, %v702
      %v840 = vsel %vm832, %v823, %v704
      %v842 = vsel %vm832, %v825, %v706
      %v844 = vsel %vm832, %v827, %v708
      %v846 = vsel %vm832, %v829, %v710
      %v848 = vsel %vm832, %v831, %v712
      %v849 = vld [vmem:[%s1] sm:$0xf]
      %v850 = vld [vmem:[%s1 + $0x4] sm:$0xf]
      %v851 = vld [vmem:[%s1 + $0x8] sm:$0xf]
      %v852 = vld [vmem:[%s1 + $0xc] sm:$0xf]
      %v853 = vld [vmem:[%s1 + $0x10] sm:$0x3]
      %v859 = vunpack.c.l.b16 %v849
      %v860 = vunpack.c.l.b16 %v850
      %v861 = vunpack.c.l.b16 %v851
      %v862 = vunpack.c.l.b16 %v852
      %v863 = vunpack.c.l.b16 %v853
      %v864 = vpack.c.b16 %v860, %v859
      %v865 = vpack.c.b16 %v862, %v861
      %v866 = vpack.c.b16 %v863, %v863
      %vm869 = vcmask 293888
      %v870 = vsel %vm869, %v834, 0
      %v872 = vsel %vm869, %v836, 0
      %v874 = vsel %vm869, %v838, 0
      %v876 = vsel %vm869, %v840, 0
      %v878 = vsel %vm869, %v842, 0
      %v880 = vsel %vm869, %v844, 0
      %v882 = vsel %vm869, %v846, 0
      %v884 = vsel %vm869, %v848, 0
      %vm886 = vcmask 1041408
      %v888 = vsel %vm886, %v866, 0
      %890 = vmatprep.subr.bf16.mxu0 0
      %891 = vmatpush1.bf16.msra.mxu0 0
      %892 = vmatprep.subr.bf16.mxu0 0
      %893 = vmatpush1.bf16.msra.mxu0 0
      %894 = vmatprep.subr.bf16.mxu0 0
      %895 = vmatpush1.bf16.msra.mxu0 0
      %896 = vmatprep.subr.bf16.mxu0 0
      %897 = vmatpush1.bf16.msra.mxu0 0
      %898 = vmatprep.subr.bf16.mxu0 0
      %899 = vmatpush1.bf16.msra.mxu0 0
      %900 = vmatprep.subr.bf16.mxu0 0
      %901 = vmatpush1.bf16.msra.mxu0 %v888
      %902 = vmatprep.subr.bf16.mxu0 0
      %903 = vmatpush1.bf16.msra.mxu0 %v865
      %904 = vmatprep.subr.bf16.mxu0 0
      %905 = vmatpush1.bf16.msra.mxu0 %v864
      %906 = vmatprep.subr.bf16.mxu0 0
      %907 = vmatpush2.bf16.msra.mxu0 0
      %908 = vmatprep.subr.bf16.mxu0 0
      %909 = vmatpush2.bf16.msra.mxu0 0
      %910 = vmatprep.subr.bf16.mxu0 0
      %911 = vmatpush2.bf16.msra.mxu0 0
      %912 = vmatprep.subr.bf16.mxu0 0
      %913 = vmatpush2.bf16.msra.mxu0 0
      %914 = vmatprep.subr.bf16.mxu0 0
      %915 = vmatpush2.bf16.msra.mxu0 0
      %916 = vmatprep.subr.bf16.mxu0 0
      %917 = vmatpush2.bf16.msra.mxu0 0
      %918 = vmatprep.subr.bf16.mxu0 0
      %919 = vmatpush2.bf16.msra.mxu0 0
      %920 = vmatprep.subr.bf16.mxu0 0
      %921 = vmatpush2.bf16.msra.mxu0 0
      %922 = vmatprep.mubr.bf16.mxu0 0
      %923 = vmatmul.mubr.bf16.gmra.mxu0 %v870
      %v924 = vpop.f32.mrf.mxu0
      %v925 = vadd.f32 0.0, %v924
      %v926 = vpop.f32.mrf.mxu0
      %v927 = vpop.f32.mrf.mxu0
      %v928 = vadd.f32 0.0, %v927
      %v929 = vpop.f32.mrf.mxu0
      %930 = vmatprep.mubr.bf16.mxu0 0
      %931 = vmatmul.mubr.bf16.gmra.mxu0 %v872
      %v932 = vpop.f32.mrf.mxu0
      %v933 = vadd.f32 0.0, %v932
      %v934 = vpop.f32.mrf.mxu0
      %v935 = vpop.f32.mrf.mxu0
      %v936 = vadd.f32 0.0, %v935
      %v937 = vpop.f32.mrf.mxu0
      %938 = vmatprep.mubr.bf16.mxu0 0
      %939 = vmatmul.mubr.bf16.gmra.mxu0 %v874
      %v940 = vpop.f32.mrf.mxu0
      %v941 = vadd.f32 0.0, %v940
      %v942 = vpop.f32.mrf.mxu0
      %v943 = vpop.f32.mrf.mxu0
      %v944 = vadd.f32 0.0, %v943
      %v945 = vpop.f32.mrf.mxu0
      %946 = vmatprep.mubr.bf16.mxu0 0
      %947 = vmatmul.mubr.bf16.gmra.mxu0 %v876
      %v948 = vpop.f32.mrf.mxu0
      %v949 = vadd.f32 0.0, %v948
      %v950 = vpop.f32.mrf.mxu0
      %v951 = vpop.f32.mrf.mxu0
      %v952 = vadd.f32 0.0, %v951
      %v953 = vpop.f32.mrf.mxu0
      %954 = vmatprep.mubr.bf16.mxu0 0
      %955 = vmatmul.mubr.bf16.gmra.mxu0 %v878
      %v956 = vpop.f32.mrf.mxu0
      %v957 = vadd.f32 0.0, %v956
      %v958 = vpop.f32.mrf.mxu0
      %v959 = vpop.f32.mrf.mxu0
      %v960 = vadd.f32 0.0, %v959
      %v961 = vpop.f32.mrf.mxu0
      %962 = vmatprep.mubr.bf16.mxu0 0
      %963 = vmatmul.mubr.bf16.gmra.mxu0 %v880
      %v964 = vpop.f32.mrf.mxu0
      %v965 = vadd.f32 0.0, %v964
      %v966 = vpop.f32.mrf.mxu0
      %v967 = vpop.f32.mrf.mxu0
      %v968 = vadd.f32 0.0, %v967
      %v969 = vpop.f32.mrf.mxu0
      %970 = vmatprep.mubr.bf16.mxu0 0
      %971 = vmatmul.mubr.bf16.gmra.mxu0 %v882
      %v972 = vpop.f32.mrf.mxu0
      %v973 = vadd.f32 0.0, %v972
      %v974 = vpop.f32.mrf.mxu0
      %v975 = vpop.f32.mrf.mxu0
      %v976 = vadd.f32 0.0, %v975
      %v977 = vpop.f32.mrf.mxu0
      %978 = vmatprep.mubr.bf16.mxu0 0
      %979 = vmatmul.mubr.bf16.gmra.mxu0 %v884
      %v980 = vpop.f32.mrf.mxu0
      %v981 = vadd.f32 0.0, %v980
      %v982 = vpop.f32.mrf.mxu0
      %v983 = vpop.f32.mrf.mxu0
      %v984 = vadd.f32 0.0, %v983
      %v985 = vpop.f32.mrf.mxu0
      %986 = vdwg.mxu0
      %v987 = vadd.f32 %v925, %v928
      %v988 = vadd.f32 %v987, %v933
      %v989 = vadd.f32 %v988, %v936
      %v990 = vadd.f32 %v989, %v941
      %v991 = vadd.f32 %v990, %v944
      %v992 = vadd.f32 %v991, %v949
      %v993 = vadd.f32 %v992, %v952
      %v994 = vadd.f32 %v993, %v957
      %v995 = vadd.f32 %v994, %v960
      %v996 = vadd.f32 %v995, %v965
      %v997 = vadd.f32 %v996, %v968
      %v998 = vadd.f32 %v997, %v973
      %v999 = vadd.f32 %v998, %v976
      %v1000 = vadd.f32 %v999, %v981
      %v1001 = vadd.f32 %v1000, %v984
      %v1002 = vrot.slane %v1001, 4
      %v1003 = vadd.f32 %v1001, %v1002
      %v1004 = vrot.slane %v1003, 2
      %v1005 = vadd.f32 %v1003, %v1004
      %v1006 = vrot.slane %v1005, 1
      %v1007 = vadd.f32 %v1005, %v1006
      %v1008 = vmul.f32 %v1007, 0.0078125
      %v1009 = vsub.f32 %v925, %v1008
      %v1010 = vsub.f32 %v928, %v1008
      %v1011 = vsub.f32 %v933, %v1008
      %v1012 = vsub.f32 %v936, %v1008
      %v1013 = vsub.f32 %v941, %v1008
      %v1014 = vsub.f32 %v944, %v1008
      %v1015 = vsub.f32 %v949, %v1008
      %v1016 = vsub.f32 %v952, %v1008
      %v1017 = vsub.f32 %v957, %v1008
      %v1018 = vsub.f32 %v960, %v1008
      %v1019 = vsub.f32 %v965, %v1008
      %v1020 = vsub.f32 %v968, %v1008
      %v1021 = vsub.f32 %v973, %v1008
      %v1022 = vsub.f32 %v976, %v1008
      %v1023 = vsub.f32 %v981, %v1008
      %v1024 = vsub.f32 %v984, %v1008
      %v1025 = vmul.f32 %v1009, %v1009
      %v1026 = vmul.f32 %v1010, %v1010
      %v1027 = vmul.f32 %v1011, %v1011
      %v1028 = vmul.f32 %v1012, %v1012
      %v1029 = vmul.f32 %v1013, %v1013
      %v1030 = vmul.f32 %v1014, %v1014
      %v1031 = vmul.f32 %v1015, %v1015
      %v1032 = vmul.f32 %v1016, %v1016
      %v1033 = vmul.f32 %v1017, %v1017
      %v1034 = vmul.f32 %v1018, %v1018
      %v1035 = vmul.f32 %v1019, %v1019
      %v1036 = vmul.f32 %v1020, %v1020
      %v1037 = vmul.f32 %v1021, %v1021
      %v1038 = vmul.f32 %v1022, %v1022
      %v1039 = vmul.f32 %v1023, %v1023
      %v1040 = vmul.f32 %v1024, %v1024
      %v1041 = vadd.f32 %v1025, %v1026
      %v1042 = vadd.f32 %v1041, %v1027
      %v1043 = vadd.f32 %v1042, %v1028
      %v1044 = vadd.f32 %v1043, %v1029
      %v1045 = vadd.f32 %v1044, %v1030
      %v1046 = vadd.f32 %v1045, %v1031
      %v1047 = vadd.f32 %v1046, %v1032
      %v1048 = vadd.f32 %v1047, %v1033
      %v1049 = vadd.f32 %v1048, %v1034
      %v1050 = vadd.f32 %v1049, %v1035
      %v1051 = vadd.f32 %v1050, %v1036
      %v1052 = vadd.f32 %v1051, %v1037
      %v1053 = vadd.f32 %v1052, %v1038
      %v1054 = vadd.f32 %v1053, %v1039
      %v1055 = vadd.f32 %v1054, %v1040
      %v1056 = vrot.slane %v1055, 4
      %v1057 = vadd.f32 %v1055, %v1056
      %v1058 = vrot.slane %v1057, 2
      %v1059 = vadd.f32 %v1057, %v1058
      %v1060 = vrot.slane %v1059, 1
      %v1061 = vadd.f32 %v1059, %v1060
      %vm1062 = vcmask 1040384
      %v1063 = vsel %vm1062, %v1008, %v1061
      %1064 = vst [vmem:[%s243] sm:$0x3] %v1063
      %v1065 = vpack.c.bf16 %v928, %v925
      %v1066 = vpack.c.bf16 %v936, %v933
      %v1067 = vpack.c.bf16 %v944, %v941
      %v1068 = vpack.c.bf16 %v952, %v949
      %v1069 = vpack.c.bf16 %v960, %v957
      %v1070 = vpack.c.bf16 %v968, %v965
      %v1071 = vpack.c.bf16 %v976, %v973
      %v1072 = vpack.c.bf16 %v984, %v981
      %v1081 = vunpack.c.l.b16 %v1065
      %v1082 = vunpack.c.h.b16 %v1065
      %v1083 = vunpack.c.l.b16 %v1066
      %v1084 = vunpack.c.h.b16 %v1066
      %v1085 = vunpack.c.l.b16 %v1067
      %v1086 = vunpack.c.h.b16 %v1067
      %v1087 = vunpack.c.l.b16 %v1068
      %v1088 = vunpack.c.h.b16 %v1068
      %v1089 = vunpack.c.l.b16 %v1069
      %v1090 = vunpack.c.h.b16 %v1069
      %v1091 = vunpack.c.l.b16 %v1070
      %v1092 = vunpack.c.h.b16 %v1070
      %v1093 = vunpack.c.l.b16 %v1071
      %v1094 = vunpack.c.h.b16 %v1071
      %v1095 = vunpack.c.l.b16 %v1072
      %v1096 = vunpack.c.h.b16 %v1072
      %v1097 = vpack.c.b16 %v1081, %v1081
      %v1098 = vpack.c.b16 %v1082, %v1082
      %v1099 = vpack.c.b16 %v1083, %v1083
      %v1100 = vpack.c.b16 %v1084, %v1084
      %v1101 = vpack.c.b16 %v1085, %v1085
      %v1102 = vpack.c.b16 %v1086, %v1086
      %v1103 = vpack.c.b16 %v1087, %v1087
      %v1104 = vpack.c.b16 %v1088, %v1088
      %v1105 = vpack.c.b16 %v1089, %v1089
      %v1106 = vpack.c.b16 %v1090, %v1090
      %v1107 = vpack.c.b16 %v1091, %v1091
      %v1108 = vpack.c.b16 %v1092, %v1092
      %v1109 = vpack.c.b16 %v1093, %v1093
      %v1110 = vpack.c.b16 %v1094, %v1094
      %v1111 = vpack.c.b16 %v1095, %v1095
      %v1112 = vpack.c.b16 %v1096, %v1096
      %1129 = vst [vmem:[%s234] sm:$0xf] %v1097
      %1130 = vst [vmem:[%s234 + $0x4] sm:$0xf] %v1098
      %1131 = vst [vmem:[%s234 + $0x8] sm:$0xf] %v1099
      %1132 = vst [vmem:[%s234 + $0xc] sm:$0xf] %v1100
      %1133 = vst [vmem:[%s234 + $0x10] sm:$0xf] %v1101
      %1134 = vst [vmem:[%s234 + $0x14] sm:$0xf] %v1102
      %1135 = vst [vmem:[%s234 + $0x18] sm:$0xf] %v1103
      %1136 = vst [vmem:[%s234 + $0x1c] sm:$0xf] %v1104
      %1137 = vst [vmem:[%s234 + $0x20] sm:$0xf] %v1105
      %1138 = vst [vmem:[%s234 + $0x24] sm:$0xf] %v1106
      %1139 = vst [vmem:[%s234 + $0x28] sm:$0xf] %v1107
      %1140 = vst [vmem:[%s234 + $0x2c] sm:$0xf] %v1108
      %1141 = vst [vmem:[%s234 + $0x30] sm:$0xf] %v1109
      %1142 = vst [vmem:[%s234 + $0x34] sm:$0xf] %v1110
      %1143 = vst [vmem:[%s234 + $0x38] sm:$0xf] %v1111
      %1144 = vst [vmem:[%s234 + $0x3c] sm:$0xf] %v1112
      %s1145 = smul.u32 8, %s21
      %p1146 = scmp.lt.s32.totalorder %s20, 1
      %s1147 = scalar_select %p1146, %s20, 1
      %p1148 = scmp.lt.s32.totalorder %s1145, 15
      %s1149 = scalar_select %p1148, %s1145, 15
      %s1150 = smul.addr %s1149, 2
      %s1151 = smul.addr %s1147, 32
      %s1152 = sadd.s32 %s1150, %s1151
      %s1153 = smul.addr %s1152, 4
      %s1154 = scalar_lea.vmem %s3, %s1153
      %p1155 = scmp.lt.s32.totalorder %s20, 1
      %s1156 = scalar_select %p1155, %s20, 1
      %p1157 = scmp.lt.s32.totalorder %s21, 1
      %s1158 = scalar_select %p1157, %s21, 1
      %s1159 = smul.addr %s1156, 2
      %s1160 = sadd.s32 %s1158, %s1159
      %s1161 = smul.addr %s1160, 2
      %s1162 = scalar_lea.vmem %s4, %s1161
      // Predicated region
      $region33: #{double_conv.3} parent=31 // pred_check
        %p1163 = pneg %p116
      $region34: #{double_conv.3} parent=31 // pred_check_branch
        %1165 = sbr.rel (%p1163) target = $region36
      $region35: #{double_conv.3} parent=31 // pred_region
        %s1166 = smul.u32 8, %s21
      $region36: #{double_conv.3} parent=31 // pred_fallthru
        _
      // Predicated region
      $region37: #{double_conv.3} parent=31 // pred_check
        %p1167 = pneg %p144
      $region38: #{double_conv.3} parent=31 // pred_check_branch
        %1169 = sbr.rel (%p1167) target = $region40
      $region39: #{double_conv.3} parent=31 // pred_region
        _
      $region40: #{double_conv.3} parent=31 // pred_fallthru
        _
    $region32: #{double_conv.3} parent=5 // pred_fallthru
      _
    %p1170 = scmp.le.s32.totalorder 2, %s11
    // Predicated region
    $region41: #{double_conv.3} parent=5 // pred_check
      %p1171 = pneg %p1170
    $region42: #{double_conv.3} parent=5 // pred_check_branch
      %1173 = sbr.rel (%p1171) target = $region44
    $region43: #{double_conv.3} parent=5 // pred_region
      %s1174 = ssub.s32 %s11, 2
      // Predicated region
      $region45: #{double_conv.3} parent=43 // pred_check
        %p1175 = pneg %p122
      $region46: #{double_conv.3} parent=43 // pred_check_branch
        %1177 = sbr.rel (%p1175) target = $region48
      $region47: #{double_conv.3} parent=43 // pred_region
        %s1178 = smul.u32 8, %s23
        %p1179 = scmp.lt.s32.totalorder %s22, 1
        %s1180 = scalar_select %p1179, %s22, 1
        %p1181 = scmp.lt.s32.totalorder %s1178, 15
        %s1182 = scalar_select %p1181, %s1178, 15
        %s1183 = smul.addr %s1182, 2
        %s1184 = smul.addr %s1180, 32
        %s1185 = sadd.s32 %s1183, %s1184
        %s1186 = smul.addr %s1185, 4
        %s1187 = scalar_lea.vmem %s3, %s1186
      $region48: #{double_conv.3} parent=43 // pred_fallthru
        _
      // Predicated region
      $region49: #{double_conv.3} parent=43 // pred_check
        %p1188 = pneg %p150
      $region50: #{double_conv.3} parent=43 // pred_check_branch
        %1190 = sbr.rel (%p1188) target = $region52
      $region51: #{double_conv.3} parent=43 // pred_region
        %p1191 = scmp.lt.s32.totalorder %s22, 1
        %s1192 = scalar_select %p1191, %s22, 1
        %p1193 = scmp.lt.s32.totalorder %s23, 1
        %s1194 = scalar_select %p1193, %s23, 1
        %s1195 = smul.addr %s1192, 2
        %s1196 = sadd.s32 %s1194, %s1195
        %s1197 = smul.addr %s1196, 2
        %s1198 = scalar_lea.vmem %s4, %s1197
      $region52: #{double_conv.3} parent=43 // pred_fallthru
        _
    $region44: #{double_conv.3} parent=5 // pred_fallthru
      _
  $region6: #{double_conv.3} parent=0 // loop_footer
    %s15 = sadd.s32 1, %s11
  $region7: #{double_conv.3} parent=0 // loop_footer_branch
    %10 = sbr.rel target = $region3
  $region8: #{double_conv.3} parent=0 // loop_exit
    _

// kernel: double_conv.4
$region0: #{double_conv.4}
  #allocation0 [shape = 'u32[]', space=smem, size = 0x4, offset = 0x4, fixed_abs, tag = 'smem constant byte address 0x4 - core index']
  #allocation1 [shape = 'u32[144,128]{1,0:T(1,128)}', space=vmem, size = 0x12000, scoped, tag = 'internal scratch']
  %s0 = inlined_call_operand.vmem [shape: bf16[2,16,16,128], index: 0, kind: input, shape index: {}]
  %s1 = inlined_call_operand.vmem [shape: bf16[1152,128], index: 1, kind: input, shape index: {}]
  %s2 = inlined_call_operand.vmem [shape: f32[2,128], index: 2, kind: input, shape index: {}]
  %s3 = inlined_call_operand.vmem [shape: bf16[2,16,16,128], index: 3, kind: output, shape index: {0}]
  %s4 = inlined_call_operand.vmem [shape: f32[2,2,2,128], index: 4, kind: output, shape index: {1}]
  %5 = xla_tuple %s3, %s4
  %s6 = sld [smem:[#allocation0]]
  $region53: #{double_conv.4} parent=0
    _
  %s8 = ssub.s32 1, %s6
  %s9 = scalar_select 0, %s8, %s6
  loop: start=0, step=1, limit=6
  $region2: #{double_conv.4} parent=0 // loop_pre_header
    _
  $region3: #{double_conv.4} parent=0 // loop_header
    %s11 = sphi 0, %s15
    %p12 = scmp.ge.s32.totalorder %s11, 6
    %s18 = sphi 0, %s30
    %s19 = sphi 0, %s26
    %s20 = sphi 0, %s18
    %s21 = sphi 0, %s19
    %s22 = sphi 0, %s20
    %s23 = sphi 0, %s21
    %s33 = sphi 0, %s35
    %s36 = sphi 0, %s33
    %s37 = sphi 0, %s36
    %s53 = sphi 0, %s37
    %s57 = sphi 0, %s57
    %s59 = sphi 0, %s57
    %s60 = sphi 0, %s59
    %s74 = sphi 0, %s60
    %s78 = sphi 0, %s78
    %s80 = sphi 0, %s78
    %s81 = sphi 0, %s80
    %s95 = sphi 0, %s81
    %s103 = sphi 0, %s105
    %s106 = sphi 0, %s103
    %s107 = sphi 0, %s106
    %s123 = sphi 0, %s107
    %s131 = sphi 0, %s133
    %s134 = sphi 0, %s131
    %s135 = sphi 0, %s134
    %s151 = sphi 0, %s135
  $region4: #{double_conv.4} parent=0 // loop_header_branch
    %14 = sbr.rel (%p12) target = $region8
  $region5: #{double_conv.4} parent=0 // loop_body
    %s16 = ssub.s32 %s11, 1
    %s17 = ssub.s32 %s11, 2
    %s24 = sadd.s32 1, %s19
    %p25 = scmp.ge.s32.totalorder %s24, 2
    %s26 = scalar_select %p25, 0, %s24
    %s27 = sadd.s32 1, %s18
    %s28 = scalar_select %p25, %s27, %s18
    %p29 = scmp.ge.s32.totalorder %s28, 2
    %s30 = scalar_select %p29, 0, %s28
    %s31 = ssub.s32 %s18, %s30
    %p32 = scmp.eq.s32.totalorder %s31, 0
    %s34 = sadd.s32 %s33, 1
    %s35 = scalar_select %p32, %s33, %s34
    %p38 = pneg %p32
    %p39 = scmp.eq.s32.totalorder %s11, 3
    %p40 = por %p38, %p39
    %p41 = scmp.ne.s32.totalorder %s33, %s36
    %p42 = scmp.eq.s32.totalorder %s11, 0
    %p43 = por %p41, %p42
    %p44 = scmp.ne.s32.totalorder %s33, %s36
    %p45 = scmp.eq.s32.totalorder %s16, 3
    %p46 = por %p44, %p45
    %p47 = scmp.ne.s32.totalorder %s36, %s37
    %p48 = scmp.eq.s32.totalorder %s16, 0
    %p49 = por %p47, %p48
    %p50 = scmp.ne.s32.totalorder %s36, %s37
    %p51 = scmp.eq.s32.totalorder %s17, 3
    %p52 = por %p50, %p51
    %p54 = scmp.ne.s32.totalorder %s37, %s53
    %p55 = scmp.eq.s32.totalorder %s17, 0
    %p56 = por %p54, %p55
    %s58 = sadd.s32 %s57, 1
    %p61 = scmp.eq.s32.totalorder %s11, 3
    %p62 = scmp.ne.s32.totalorder %s57, %s59
    %p63 = scmp.eq.s32.totalorder %s11, 0
    %p64 = por %p62, %p63
    %p65 = scmp.ne.s32.totalorder %s57, %s59
    %p66 = scmp.eq.s32.totalorder %s16, 3
    %p67 = por %p65, %p66
    %p68 = scmp.ne.s32.totalorder %s59, %s60
    %p69 = scmp.eq.s32.totalorder %s16, 0
    %p70 = por %p68, %p69
    %p71 = scmp.ne.s32.totalorder %s59, %s60
    %p72 = scmp.eq.s32.totalorder %s17, 3
    %p73 = por %p71, %p72
    %p75 = scmp.ne.s32.totalorder %s60, %s74
    %p76 = scmp.eq.s32.totalorder %s17, 0
    %p77 = por %p75, %p76
    %s79 = sadd.s32 %s78, 1
    %p82 = scmp.eq.s32.totalorder %s11, 3
    %p83 = scmp.ne.s32.totalorder %s78, %s80
    %p84 = scmp.eq.s32.totalorder %s11, 0
    %p85 = por %p83, %p84
    %p86 = scmp.ne.s32.totalorder %s78, %s80
    %p87 = scmp.eq.s32.totalorder %s16, 3
    %p88 = por %p86, %p87
    %p89 = scmp.ne.s32.totalorder %s80, %s81
    %p90 = scmp.eq.s32.totalorder %s16, 0
    %p91 = por %p89, %p90
    %p92 = scmp.ne.s32.totalorder %s80, %s81
    %p93 = scmp.eq.s32.totalorder %s17, 3
    %p94 = por %p92, %p93
    %p96 = scmp.ne.s32.totalorder %s81, %s95
    %p97 = scmp.eq.s32.totalorder %s17, 0
    %p98 = por %p96, %p97
    %s99 = ssub.s32 %s18, %s30
    %s100 = ssub.s32 %s19, %s26
    %s101 = sor.u32 %s99, %s100
    %p102 = scmp.eq.s32.totalorder %s101, 0
    %s104 = sadd.s32 %s103, 1
    %s105 = scalar_select %p102, %s103, %s104
    %p108 = pneg %p102
    %p109 = scmp.eq.s32.totalorder %s11, 3
    %p110 = por %p108, %p109
    %p111 = scmp.ne.s32.totalorder %s103, %s106
    %p112 = scmp.eq.s32.totalorder %s11, 0
    %p113 = por %p111, %p112
    %p114 = scmp.ne.s32.totalorder %s103, %s106
    %p115 = scmp.eq.s32.totalorder %s16, 3
    %p116 = por %p114, %p115
    %p117 = scmp.ne.s32.totalorder %s106, %s107
    %p118 = scmp.eq.s32.totalorder %s16, 0
    %p119 = por %p117, %p118
    %p120 = scmp.ne.s32.totalorder %s106, %s107
    %p121 = scmp.eq.s32.totalorder %s17, 3
    %p122 = por %p120, %p121
    %p124 = scmp.ne.s32.totalorder %s107, %s123
    %p125 = scmp.eq.s32.totalorder %s17, 0
    %p126 = por %p124, %p125
    %s127 = ssub.s32 %s18, %s30
    %s128 = ssub.s32 %s19, %s26
    %s129 = sor.u32 %s127, %s128
    %p130 = scmp.eq.s32.totalorder %s129, 0
    %s132 = sadd.s32 %s131, 1
    %s133 = scalar_select %p130, %s131, %s132
    %p136 = pneg %p130
    %p137 = scmp.eq.s32.totalorder %s11, 3
    %p138 = por %p136, %p137
    %p139 = scmp.ne.s32.totalorder %s131, %s134
    %p140 = scmp.eq.s32.totalorder %s11, 0
    %p141 = por %p139, %p140
    %p142 = scmp.ne.s32.totalorder %s131, %s134
    %p143 = scmp.eq.s32.totalorder %s16, 3
    %p144 = por %p142, %p143
    %p145 = scmp.ne.s32.totalorder %s134, %s135
    %p146 = scmp.eq.s32.totalorder %s16, 0
    %p147 = por %p145, %p146
    %p148 = scmp.ne.s32.totalorder %s134, %s135
    %p149 = scmp.eq.s32.totalorder %s17, 3
    %p150 = por %p148, %p149
    %p152 = scmp.ne.s32.totalorder %s135, %s151
    %p153 = scmp.eq.s32.totalorder %s17, 0
    %p154 = por %p152, %p153
    %p155 = scmp.le.s32.totalorder 1, %s11
    %p156 = scmp.lt.s32.totalorder %s11, 5
    %p157 = pnand %p155, %p156
    %p158 = pneg %p157
    // Predicated region
    $region9: #{double_conv.4} parent=5 // pred_check
      _
    $region10: #{double_conv.4} parent=5 // pred_check_branch
      %160 = sbr.rel (%p157) target = $region12
    $region11: #{double_conv.4} parent=5 // pred_region
      %s161 = ssub.s32 %s11, 1
      // Predicated region
      $region13: #{double_conv.4} parent=11 // pred_check
        %p162 = pneg %p70
      $region14: #{double_conv.4} parent=11 // pred_check_branch
        %164 = sbr.rel (%p162) target = $region16
      $region15: #{double_conv.4} parent=11 // pred_region
        _
      $region16: #{double_conv.4} parent=11 // pred_fallthru
        _
      // Predicated region
      $region17: #{double_conv.4} parent=11 // pred_check
        %p165 = pneg %p91
      $region18: #{double_conv.4} parent=11 // pred_check_branch
        %167 = sbr.rel (%p165) target = $region20
      $region19: #{double_conv.4} parent=11 // pred_region
        _
      $region20: #{double_conv.4} parent=11 // pred_fallthru
        _
    $region12: #{double_conv.4} parent=5 // pred_fallthru
      _
    %p168 = scmp.lt.s32.totalorder %s11, 4
    // Predicated region
    $region21: #{double_conv.4} parent=5 // pred_check
      %p169 = pneg %p168
    $region22: #{double_conv.4} parent=5 // pred_check_branch
      %171 = sbr.rel (%p169) target = $region24
    $region23: #{double_conv.4} parent=5 // pred_region
      // Predicated region
      $region25: #{double_conv.4} parent=23 // pred_check
        %p172 = pneg %p43
      $region26: #{double_conv.4} parent=23 // pred_check_branch
        %174 = sbr.rel (%p172) target = $region28
      $region27: #{double_conv.4} parent=23 // pred_region
        %p175 = scmp.lt.s32.totalorder %s18, 1
        %s176 = scalar_select %p175, %s18, 1
        %s177 = smul.addr %s176, 32
        %s178 = smul.addr %s177, 4
        %s179 = scalar_lea.vmem %s0, %s178
      $region28: #{double_conv.4} parent=23 // pred_fallthru
        _
    $region24: #{double_conv.4} parent=5 // pred_fallthru
      _
    %p180 = scmp.le.s32.totalorder 1, %s11
    %p181 = scmp.lt.s32.totalorder %s11, 5
    %p182 = pnand %p180, %p181
    %p183 = pneg %p182
    // Predicated region
    $region29: #{double_conv.4} parent=5 // pred_check
      _
    $region30: #{double_conv.4} parent=5 // pred_check_branch
      %185 = sbr.rel (%p182) target = $region32
    $region31: #{double_conv.4} parent=5 // pred_region
      %s186 = ssub.s32 %s11, 1
      %p187 = scmp.lt.s32.totalorder %s20, 1
      %s188 = scalar_select %p187, %s20, 1
      %s189 = smul.addr %s188, 32
      %s190 = smul.addr %s189, 4
      %s191 = scalar_lea.vmem %s0, %s190
      %p192 = pneg %p49
      %p193 = pneg %p46
      %p194 = pneg %p70
      %p195 = pneg %p67
      %p196 = pneg %p91
      %p197 = pneg %p88
      %p198 = pneg %p119
      %p199 = pneg %p116
      %s200 = smul.u32 8, %s21
      %p201 = scmp.lt.s32.totalorder %s20, 1
      %s202 = scalar_select %p201, %s20, 1
      %p203 = scmp.lt.s32.totalorder %s200, 15
      %s204 = scalar_select %p203, %s200, 15
      %s205 = smul.addr %s204, 2
      %s206 = smul.addr %s202, 32
      %s207 = sadd.s32 %s205, %s206
      %s208 = smul.addr %s207, 4
      %s209 = scalar_lea.vmem %s3, %s208
      %p210 = pneg %p147
      %p211 = pneg %p144
      %p212 = scmp.lt.s32.totalorder %s20, 1
      %s213 = scalar_select %p212, %s20, 1
      %p214 = scmp.lt.s32.totalorder %s21, 1
      %s215 = scalar_select %p214, %s21, 1
      %s216 = smul.addr %s213, 2
      %s217 = sadd.s32 %s215, %s216
      %s218 = smul.addr %s217, 2
      %s219 = scalar_lea.vmem %s4, %s218
      %p220 = scmp.lt.s32.totalorder %s20, 1
      %s221 = scalar_select %p220, %s20, 1
      %s222 = smul.addr %s221, 32
      %s223 = smul.addr %s222, 4
      %s224 = scalar_lea.vmem %s0, %s223
      %s225 = smul.u32 8, %s21
      %p226 = scmp.lt.s32.totalorder %s20, 1
      %s227 = scalar_select %p226, %s20, 1
      %p228 = scmp.lt.s32.totalorder %s225, 15
      %s229 = scalar_select %p228, %s225, 15
      %s230 = smul.addr %s229, 2
      %s231 = smul.addr %s227, 32
      %s232 = sadd.s32 %s230, %s231
      %s233 = smul.addr %s232, 4
      %s234 = scalar_lea.vmem %s3, %s233
      %s235 = smul.u32 8, %s21
      %p236 = scmp.lt.s32.totalorder %s20, 1
      %s237 = scalar_select %p236, %s20, 1
      %p238 = scmp.lt.s32.totalorder %s21, 1
      %s239 = scalar_select %p238, %s21, 1
      %s240 = smul.addr %s237, 2
      %s241 = sadd.s32 %s239, %s240
      %s242 = smul.addr %s241, 2
      %s243 = scalar_lea.vmem %s4, %s242
      %s245 = smul.u32 %s21, 8
      %v246 = vld [vmem:[%s2] sm:$0x3]
      %s247 = smul.u32 %s245, 2
      %s248 = smul.addr %s247, 4
      %s249 = scalar_lea.vmem %s224, %s248
      %v250 = vld [vmem:[%s249] sm:$0xf]
      %v251 = vld [vmem:[%s249 + $0x4] sm:$0xf]
      %v252 = vld [vmem:[%s249 + $0x8] sm:$0xf]
      %v253 = vld [vmem:[%s249 + $0xc] sm:$0xf]
      %v254 = vld [vmem:[%s249 + $0x10] sm:$0xf]
      %v255 = vld [vmem:[%s249 + $0x14] sm:$0xf]
      %v256 = vld [vmem:[%s249 + $0x18] sm:$0xf]
      %v257 = vld [vmem:[%s249 + $0x1c] sm:$0xf]
      %v258 = vld [vmem:[%s249 + $0x20] sm:$0xf]
      %v259 = vld [vmem:[%s249 + $0x24] sm:$0xf]
      %v260 = vld [vmem:[%s249 + $0x28] sm:$0xf]
      %v261 = vld [vmem:[%s249 + $0x2c] sm:$0xf]
      %v262 = vld [vmem:[%s249 + $0x30] sm:$0xf]
      %v263 = vld [vmem:[%s249 + $0x34] sm:$0xf]
      %v264 = vld [vmem:[%s249 + $0x38] sm:$0xf]
      %v265 = vld [vmem:[%s249 + $0x3c] sm:$0xf]
      %v266 = vunpack.c.l.bf16 %v250
      %v267 = vunpack.c.l.bf16 %v251
      %v268 = vunpack.c.l.bf16 %v252
      %v269 = vunpack.c.l.bf16 %v253
      %v270 = vunpack.c.l.bf16 %v254
      %v271 = vunpack.c.l.bf16 %v255
      %v272 = vunpack.c.l.bf16 %v256
      %v273 = vunpack.c.l.bf16 %v257
      %v274 = vunpack.c.l.bf16 %v258
      %v275 = vunpack.c.l.bf16 %v259
      %v276 = vunpack.c.l.bf16 %v260
      %v277 = vunpack.c.l.bf16 %v261
      %v278 = vunpack.c.l.bf16 %v262
      %v279 = vunpack.c.l.bf16 %v263
      %v280 = vunpack.c.l.bf16 %v264
      %v281 = vunpack.c.l.bf16 %v265
      %v282 = vlaneseq
      %v283 = vshrl.u32 %v282, 7
      %v284 = vsub.s32 0, %v283
      %v285 = vrot.slane %v246, %v284
      %v286 = vmul.f32 %v266, %v285
      %v287 = vmul.f32 %v267, %v285
      %v288 = vmul.f32 %v268, %v285
      %v289 = vmul.f32 %v269, %v285
      %v290 = vmul.f32 %v270, %v285
      %v291 = vmul.f32 %v271, %v285
      %v292 = vmul.f32 %v272, %v285
      %v293 = vmul.f32 %v273, %v285
      %v294 = vmul.f32 %v274, %v285
      %v295 = vmul.f32 %v275, %v285
      %v296 = vmul.f32 %v276, %v285
      %v297 = vmul.f32 %v277, %v285
      %v298 = vmul.f32 %v278, %v285
      %v299 = vmul.f32 %v279, %v285
      %v300 = vmul.f32 %v280, %v285
      %v301 = vmul.f32 %v281, %v285
      %v302 = vlaneseq
      %v303 = vshrl.u32 %v302, 7
      %v304 = vsub.s32 1, %v303
      %v305 = vrot.slane %v246, %v304
      %v306 = vadd.f32 %v286, %v305
      %v307 = vadd.f32 %v287, %v305
      %v308 = vadd.f32 %v288, %v305
      %v309 = vadd.f32 %v289, %v305
      %v310 = vadd.f32 %v290, %v305
      %v311 = vadd.f32 %v291, %v305
      %v312 = vadd.f32 %v292, %v305
      %v313 = vadd.f32 %v293, %v305
      %v314 = vadd.f32 %v294, %v305
      %v315 = vadd.f32 %v295, %v305
      %v316 = vadd.f32 %v296, %v305
      %v317 = vadd.f32 %v297, %v305
      %v318 = vadd.f32 %v298, %v305
      %v319 = vadd.f32 %v299, %v305
      %v320 = vadd.f32 %v300, %v305
      %v321 = vadd.f32 %v301, %v305
      %v322 = vmax.f32 %v306, 0.0
      %v323 = vmax.f32 %v307, 0.0
      %v324 = vmax.f32 %v308, 0.0
      %v325 = vmax.f32 %v309, 0.0
      %v326 = vmax.f32 %v310, 0.0
      %v327 = vmax.f32 %v311, 0.0
      %v328 = vmax.f32 %v312, 0.0
      %v329 = vmax.f32 %v313, 0.0
      %v330 = vmax.f32 %v314, 0.0
      %v331 = vmax.f32 %v315, 0.0
      %v332 = vmax.f32 %v316, 0.0
      %v333 = vmax.f32 %v317, 0.0
      %v334 = vmax.f32 %v318, 0.0
      %v335 = vmax.f32 %v319, 0.0
      %v336 = vmax.f32 %v320, 0.0
      %v337 = vmax.f32 %v321, 0.0
      %s338 = ssub.s32 %s245, 1
      %p339 = scmp.gt.s32.totalorder %s338, 0
      %s340 = scalar_select %p339, %s338, 0
      %s341 = smul.u32 %s340, 2
      %s342 = smul.addr %s341, 4
      %s343 = scalar_lea.vmem %s224, %s342
      %v344 = vld [vmem:[%s343] sm:$0xf]
      %v345 = vld [vmem:[%s343 + $0x4] sm:$0xf]
      %v346 = vunpack.c.l.bf16 %v344
      %v347 = vunpack.c.l.bf16 %v345
      %v348 = vmul.f32 %v346, %v285
      %v349 = vmul.f32 %v347, %v285
      %v350 = vadd.f32 %v348, %v305
      %v351 = vadd.f32 %v349, %v305
      %v352 = vmax.f32 %v350, 0.0
      %v353 = vmax.f32 %v351, 0.0
      %s354 = sadd.s32 %s245, 8
      %p355 = scmp.lt.s32.totalorder %s354, 15
      %s356 = scalar_select %p355, %s354, 15
      %s357 = smul.u32 %s356, 2
      %s358 = smul.addr %s357, 4
      %s359 = scalar_lea.vmem %s224, %s358
      %v360 = vld [vmem:[%s359] sm:$0xf]
      %v361 = vld [vmem:[%s359 + $0x4] sm:$0xf]
      %v362 = vunpack.c.l.bf16 %v360
      %v363 = vunpack.c.l.bf16 %v361
      %v364 = vmul.f32 %v362, %v285
      %v365 = vmul.f32 %v363, %v285
      %v366 = vadd.f32 %v364, %v305
      %v367 = vadd.f32 %v365, %v305
      %v368 = vmax.f32 %v366, 0.0
      %v369 = vmax.f32 %v367, 0.0
      %p370 = scmp.gt.s32.totalorder %s21, 0
      %s371 = scalar_select %p370, 1, 0
      %v372 = vstv %s371
      %vm373 = vcmp.eq.s32.totalorder %v372, 1
      %v374 = vsel %vm373, %v352, 0.0
      %v375 = vsel %vm373, %v353, 0.0
      %p376 = scmp.lt.s32.totalorder %s21, 1
      %s377 = scalar_select %p376, 1, 0
      %v378 = vstv %s377
      %vm379 = vcmp.eq.s32.totalorder %v378, 1
      %v380 = vsel %vm379, %v368, 0.0
      %v381 = vsel %vm379, %v369, 0.0
      %v382 = vpack.c.bf16 %v375, %v374
      %v383 = vpack.c.bf16 %v323, %v322
      %v384 = vpack.c.bf16 %v325, %v324
      %v385 = vpack.c.bf16 %v327, %v326
      %v386 = vpack.c.bf16 %v329, %v328
      %v387 = vpack.c.bf16 %v331, %v330
      %v388 = vpack.c.bf16 %v333, %v332
      %v389 = vpack.c.bf16 %v335, %v334
      %v390 = vpack.c.bf16 %v337, %v336
      %v391 = vpack.c.bf16 %v381, %v380
      %v393 = vshrl.u32 %v382, 16
      %v395 = vrot.slane %v393, 7
      %v396 = vshll.u32 %v382, 16
      %v398 = vor.u32 %v395, %v396
      %v400 = vshrl.u32 %v383, 16
      %v402 = vrot.slane %v400, 7
      %v403 = vshll.u32 %v383, 16
      %v405 = vor.u32 %v402, %v403
      %v407 = vshrl.u32 %v384, 16
      %v409 = vrot.slane %v407, 7
      %v410 = vshll.u32 %v384, 16
      %v412 = vor.u32 %v409, %v410
      %v414 = vshrl.u32 %v385, 16
      %v416 = vrot.slane %v414, 7
      %v417 = vshll.u32 %v385, 16
      %v419 = vor.u32 %v416, %v417
      %v421 = vshrl.u32 %v386, 16
      %v423 = vrot.slane %v421, 7
      %v424 = vshll.u32 %v386, 16
      %v426 = vor.u32 %v423, %v424
      %v428 = vshrl.u32 %v387, 16
      %v430 = vrot.slane %v428, 7
      %v431 = vshll.u32 %v387, 16
      %v433 = vor.u32 %v430, %v431
      %v435 = vshrl.u32 %v388, 16
      %v437 = vrot.slane %v435, 7
      %v438 = vshll.u32 %v388, 16
      %v440 = vor.u32 %v437, %v438
      %v442 = vshrl.u32 %v389, 16
      %v444 = vrot.slane %v442, 7
      %v445 = vshll.u32 %v389, 16
      %v447 = vor.u32 %v444, %v445
      %v449 = vshrl.u32 %v390, 16
      %v451 = vrot.slane %v449, 7
      %v452 = vshll.u32 %v390, 16
      %v454 = vor.u32 %v451, %v452
      %v456 = vshrl.u32 %v391, 16
      %v458 = vrot.slane %v456, 7
      %v459 = vshll.u32 %v391, 16
      %v461 = vor.u32 %v458, %v459
      %vm482 = vcmask 1040384
      %vm483 = vsmask.f32 256
      %vm484 = vmand %vm482, %vm483
      %v485 = vsel %vm484, 0, %v398
      %v486 = vsel %vm484, 0, %v405
      %v487 = vsel %vm484, 0, %v412
      %v488 = vsel %vm484, 0, %v419
      %v489 = vsel %vm484, 0, %v426
      %v490 = vsel %vm484, 0, %v433
      %v491 = vsel %vm484, 0, %v440
      %v492 = vsel %vm484, 0, %v447
      %v493 = vsel %vm484, 0, %v454
      %v494 = vsel %vm484, 0, %v461
      %v495 = vsel %vm484, %v395, 0
      %v496 = vsel %vm484, %v402, 0
      %v497 = vsel %vm484, %v409, 0
      %v498 = vsel %vm484, %v416, 0
      %v499 = vsel %vm484, %v423, 0
      %v500 = vsel %vm484, %v430, 0
      %v501 = vsel %vm484, %v437, 0
      %v502 = vsel %vm484, %v444, 0
      %v503 = vsel %vm484, %v451, 0
      %v504 = vsel %vm484, %v458, 0
      %vm505 = vsmask.f32 7424
      %v507 = vshrl.u32 %v485, 16
      %v509 = vshll.u32 %v485, 16
      %v511 = vrot.slane %v509, 1
      %v512 = vor.u32 %v507, %v511
      %v514 = vshll.u32 %v495, 16
      %v516 = vrot.slane %v514, 1
      %v517 = vsel %vm505, %v512, %v516
      %v519 = vshrl.u32 %v486, 16
      %v521 = vshll.u32 %v486, 16
      %v523 = vrot.slane %v521, 1
      %v524 = vor.u32 %v519, %v523
      %v526 = vshll.u32 %v496, 16
      %v528 = vrot.slane %v526, 1
      %v529 = vsel %vm505, %v524, %v528
      %v531 = vshrl.u32 %v487, 16
      %v533 = vshll.u32 %v487, 16
      %v535 = vrot.slane %v533, 1
      %v536 = vor.u32 %v531, %v535
      %v538 = vshll.u32 %v497, 16
      %v540 = vrot.slane %v538, 1
      %v541 = vsel %vm505, %v536, %v540
      %v543 = vshrl.u32 %v488, 16
      %v545 = vshll.u32 %v488, 16
      %v547 = vrot.slane %v545, 1
      %v548 = vor.u32 %v543, %v547
      %v550 = vshll.u32 %v498, 16
      %v552 = vrot.slane %v550, 1
      %v553 = vsel %vm505, %v548, %v552
      %v555 = vshrl.u32 %v489, 16
      %v557 = vshll.u32 %v489, 16
      %v559 = vrot.slane %v557, 1
      %v560 = vor.u32 %v555, %v559
      %v562 = vshll.u32 %v499, 16
      %v564 = vrot.slane %v562, 1
      %v565 = vsel %vm505, %v560, %v564
      %v567 = vshrl.u32 %v490, 16
      %v569 = vshll.u32 %v490, 16
      %v571 = vrot.slane %v569, 1
      %v572 = vor.u32 %v567, %v571
      %v574 = vshll.u32 %v500, 16
      %v576 = vrot.slane %v574, 1
      %v577 = vsel %vm505, %v572, %v576
      %v579 = vshrl.u32 %v491, 16
      %v581 = vshll.u32 %v491, 16
      %v583 = vrot.slane %v581, 1
      %v584 = vor.u32 %v579, %v583
      %v586 = vshll.u32 %v501, 16
      %v588 = vrot.slane %v586, 1
      %v589 = vsel %vm505, %v584, %v588
      %v591 = vshrl.u32 %v492, 16
      %v593 = vshll.u32 %v492, 16
      %v595 = vrot.slane %v593, 1
      %v596 = vor.u32 %v591, %v595
      %v598 = vshll.u32 %v502, 16
      %v600 = vrot.slane %v598, 1
      %v601 = vsel %vm505, %v596, %v600
      %vm626 = vcmask 1046528
      %v627 = vrot.slane %v485, 1
      %v628 = vrot.slane %v495, 1
      %v629 = vsel %vm626, %v627, %v628
      %v630 = vrot.slane %v486, 1
      %v631 = vrot.slane %v496, 1
      %v632 = vsel %vm626, %v630, %v631
      %v633 = vrot.slane %v487, 1
      %v634 = vrot.slane %v497, 1
      %v635 = vsel %vm626, %v633, %v634
      %v636 = vrot.slane %v488, 1
      %v637 = vrot.slane %v498, 1
      %v638 = vsel %vm626, %v636, %v637
      %v639 = vrot.slane %v489, 1
      %v640 = vrot.slane %v499, 1
      %v641 = vsel %vm626, %v639, %v640
      %v642 = vrot.slane %v490, 1
      %v643 = vrot.slane %v500, 1
      %v644 = vsel %vm626, %v642, %v643
      %v645 = vrot.slane %v491, 1
      %v646 = vrot.slane %v501, 1
      %v647 = vsel %vm626, %v645, %v646
      %v648 = vrot.slane %v492, 1
      %v649 = vrot.slane %v502, 1
      %v650 = vsel %vm626, %v648, %v649
      %v660 = vshrl.u32 %v493, 16
      %v662 = vshll.u32 %v493, 16
      %v664 = vrot.slane %v662, 1
      %v665 = vor.u32 %v660, %v664
      %v667 = vshll.u32 %v503, 16
      %v669 = vrot.slane %v667, 1
      %v670 = vsel %vm505, %v665, %v669
      %v674 = vrot.slane %v493, 1
      %v675 = vrot.slane %v503, 1
      %v676 = vsel %vm626, %v674, %v675
      %v679 = vshrl.u32 %v494, 16
      %v681 = vshll.u32 %v494, 16
      %v683 = vrot.slane %v681, 1
      %v684 = vor.u32 %v679, %v683
      %v686 = vshll.u32 %v504, 16
      %v688 = vrot.slane %v686, 1
      %v689 = vsel %vm505, %v684, %v688
      %v693 = vrot.slane %v494, 1
      %v694 = vrot.slane %v504, 1
      %v695 = vsel %vm626, %v693, %v694
      %v697 = vld [vmem:[%s1] sm:$0xf]
      %v698 = vld [vmem:[%s1 + $0x4] sm:$0xf]
      %v699 = vld [vmem:[%s1 + $0x8] sm:$0xf]
      %v700 = vld [vmem:[%s1 + $0xc] sm:$0xf]
      %v701 = vld [vmem:[%s1 + $0x10] sm:$0xf]
      %v702 = vld [vmem:[%s1 + $0x14] sm:$0xf]
      %v703 = vld [vmem:[%s1 + $0x18] sm:$0xf]
      %v704 = vld [vmem:[%s1 + $0x1c] sm:$0xf]
      %v705 = vld [vmem:[%s1 + $0x20] sm:$0xf]
      %v706 = vld [vmem:[%s1 + $0x24] sm:$0xf]
      %v707 = vld [vmem:[%s1 + $0x28] sm:$0xf]
      %v708 = vld [vmem:[%s1 + $0x2c] sm:$0xf]
      %v709 = vld [vmem:[%s1 + $0x30] sm:$0xf]
      %v710 = vld [vmem:[%s1 + $0x34] sm:$0xf]
      %v711 = vld [vmem:[%s1 + $0x38] sm:$0xf]
      %v712 = vld [vmem:[%s1 + $0x3c] sm:$0xf]
      %v713 = vld [vmem:[%s1 + $0x40] sm:$0xf]
      %v714 = vld [vmem:[%s1 + $0x44] sm:$0xf]
      %v715 = vld [vmem:[%s1 + $0x48] sm:$0xf]
      %v716 = vld [vmem:[%s1 + $0x4c] sm:$0xf]
      %v717 = vld [vmem:[%s1 + $0x50] sm:$0xf]
      %v718 = vld [vmem:[%s1 + $0x54] sm:$0xf]
      %v719 = vld [vmem:[%s1 + $0x58] sm:$0xf]
      %v720 = vld [vmem:[%s1 + $0x5c] sm:$0xf]
      %v721 = vld [vmem:[%s1 + $0x60] sm:$0xf]
      %v722 = vld [vmem:[%s1 + $0x64] sm:$0xf]
      %v723 = vld [vmem:[%s1 + $0x68] sm:$0xf]
      %v724 = vld [vmem:[%s1 + $0x6c] sm:$0xf]
      %v725 = vld [vmem:[%s1 + $0x70] sm:$0xf]
      %v726 = vld [vmem:[%s1 + $0x74] sm:$0xf]
      %v727 = vld [vmem:[%s1 + $0x78] sm:$0xf]
      %v728 = vld [vmem:[%s1 + $0x7c] sm:$0xf]
      %v729 = vld [vmem:[%s1 + $0x80] sm:$0xf]
      %v730 = vld [vmem:[%s1 + $0x84] sm:$0xf]
      %v731 = vld [vmem:[%s1 + $0x88] sm:$0xf]
      %v732 = vld [vmem:[%s1 + $0x8c] sm:$0xf]
      %v733 = vld [vmem:[%s1 + $0x90] sm:$0xf]
      %v734 = vld [vmem:[%s1 + $0x94] sm:$0xf]
      %v735 = vld [vmem:[%s1 + $0x98] sm:$0xf]
      %v736 = vld [vmem:[%s1 + $0x9c] sm:$0xf]
      %v737 = vld [vmem:[%s1 + $0xa0] sm:$0xf]
      %v738 = vld [vmem:[%s1 + $0xa4] sm:$0xf]
      %v739 = vld [vmem:[%s1 + $0xa8] sm:$0xf]
      %v740 = vld [vmem:[%s1 + $0xac] sm:$0xf]
      %v741 = vld [vmem:[%s1 + $0xb0] sm:$0xf]
      %v742 = vld [vmem:[%s1 + $0xb4] sm:$0xf]
      %v743 = vld [vmem:[%s1 + $0xb8] sm:$0xf]
      %v744 = vld [vmem:[%s1 + $0xbc] sm:$0xf]
      %v745 = vld [vmem:[%s1 + $0xc0] sm:$0xf]
      %v746 = vld [vmem:[%s1 + $0xc4] sm:$0xf]
      %v747 = vld [vmem:[%s1 + $0xc8] sm:$0xf]
      %v748 = vld [vmem:[%s1 + $0xcc] sm:$0xf]
      %v749 = vld [vmem:[%s1 + $0xd0] sm:$0xf]
      %v750 = vld [vmem:[%s1 + $0xd4] sm:$0xf]
      %v751 = vld [vmem:[%s1 + $0xd8] sm:$0xf]
      %v752 = vld [vmem:[%s1 + $0xdc] sm:$0xf]
      %v753 = vld [vmem:[%s1 + $0xe0] sm:$0xf]
      %v754 = vld [vmem:[%s1 + $0xe4] sm:$0xf]
      %v755 = vld [vmem:[%s1 + $0xe8] sm:$0xf]
      %v756 = vld [vmem:[%s1 + $0xec] sm:$0xf]
      %v757 = vld [vmem:[%s1 + $0xf0] sm:$0xf]
      %v758 = vld [vmem:[%s1 + $0xf4] sm:$0xf]
      %v759 = vld [vmem:[%s1 + $0xf8] sm:$0xf]
      %v760 = vld [vmem:[%s1 + $0xfc] sm:$0xf]
      %v761 = vld [vmem:[%s1 + $0x100] sm:$0xf]
      %v762 = vld [vmem:[%s1 + $0x104] sm:$0xf]
      %v763 = vld [vmem:[%s1 + $0x108] sm:$0xf]
      %v764 = vld [vmem:[%s1 + $0x10c] sm:$0xf]
      %v765 = vld [vmem:[%s1 + $0x110] sm:$0xf]
      %v766 = vld [vmem:[%s1 + $0x114] sm:$0xf]
      %v767 = vld [vmem:[%s1 + $0x118] sm:$0xf]
      %v768 = vld [vmem:[%s1 + $0x11c] sm:$0xf]
      %v769 = vld [vmem:[%s1 + $0x120] sm:$0xf]
      %v770 = vld [vmem:[%s1 + $0x124] sm:$0xf]
      %v771 = vld [vmem:[%s1 + $0x128] sm:$0xf]
      %v772 = vld [vmem:[%s1 + $0x12c] sm:$0xf]
      %v773 = vld [vmem:[%s1 + $0x130] sm:$0xf]
      %v774 = vld [vmem:[%s1 + $0x134] sm:$0xf]
      %v775 = vld [vmem:[%s1 + $0x138] sm:$0xf]
      %v776 = vld [vmem:[%s1 + $0x13c] sm:$0xf]
      %v777 = vld [vmem:[%s1 + $0x140] sm:$0xf]
      %v778 = vld [vmem:[%s1 + $0x144] sm:$0xf]
      %v779 = vld [vmem:[%s1 + $0x148] sm:$0xf]
      %v780 = vld [vmem:[%s1 + $0x14c] sm:$0xf]
      %v781 = vld [vmem:[%s1 + $0x150] sm:$0xf]
      %v782 = vld [vmem:[%s1 + $0x154] sm:$0xf]
      %v783 = vld [vmem:[%s1 + $0x158] sm:$0xf]
      %v784 = vld [vmem:[%s1 + $0x15c] sm:$0xf]
      %v785 = vld [vmem:[%s1 + $0x160] sm:$0xf]
      %v786 = vld [vmem:[%s1 + $0x164] sm:$0xf]
      %v787 = vld [vmem:[%s1 + $0x168] sm:$0xf]
      %v788 = vld [vmem:[%s1 + $0x16c] sm:$0xf]
      %v789 = vld [vmem:[%s1 + $0x170] sm:$0xf]
      %v790 = vld [vmem:[%s1 + $0x174] sm:$0xf]
      %v791 = vld [vmem:[%s1 + $0x178] sm:$0xf]
      %v792 = vld [vmem:[%s1 + $0x17c] sm:$0xf]
      %v793 = vld [vmem:[%s1 + $0x180] sm:$0xf]
      %v794 = vld [vmem:[%s1 + $0x184] sm:$0xf]
      %v795 = vld [vmem:[%s1 + $0x188] sm:$0xf]
      %v796 = vld [vmem:[%s1 + $0x18c] sm:$0xf]
      %v797 = vld [vmem:[%s1 + $0x190] sm:$0xf]
      %v798 = vld [vmem:[%s1 + $0x194] sm:$0xf]
      %v799 = vld [vmem:[%s1 + $0x198] sm:$0xf]
      %v800 = vld [vmem:[%s1 + $0x19c] sm:$0xf]
      %v801 = vld [vmem:[%s1 + $0x1a0] sm:$0xf]
      %v802 = vld [vmem:[%s1 + $0x1a4] sm:$0xf]
      %v803 = vld [vmem:[%s1 + $0x1a8] sm:$0xf]
      %v804 = vld [vmem:[%s1 + $0x1ac] sm:$0xf]
      %v805 = vld [vmem:[%s1 + $0x1b0] sm:$0xf]
      %v806 = vld [vmem:[%s1 + $0x1b4] sm:$0xf]
      %v807 = vld [vmem:[%s1 + $0x1b8] sm:$0xf]
      %v808 = vld [vmem:[%s1 + $0x1bc] sm:$0xf]
      %v809 = vld [vmem:[%s1 + $0x1c0] sm:$0xf]
      %v810 = vld [vmem:[%s1 + $0x1c4] sm:$0xf]
      %v811 = vld [vmem:[%s1 + $0x1c8] sm:$0xf]
      %v812 = vld [vmem:[%s1 + $0x1cc] sm:$0xf]
      %v813 = vld [vmem:[%s1 + $0x1d0] sm:$0xf]
      %v814 = vld [vmem:[%s1 + $0x1d4] sm:$0xf]
      %v815 = vld [vmem:[%s1 + $0x1d8] sm:$0xf]
      %v816 = vld [vmem:[%s1 + $0x1dc] sm:$0xf]
      %v817 = vld [vmem:[%s1 + $0x1e0] sm:$0xf]
      %v818 = vld [vmem:[%s1 + $0x1e4] sm:$0xf]
      %v819 = vld [vmem:[%s1 + $0x1e8] sm:$0xf]
      %v820 = vld [vmem:[%s1 + $0x1ec] sm:$0xf]
      %v821 = vld [vmem:[%s1 + $0x1f0] sm:$0xf]
      %v822 = vld [vmem:[%s1 + $0x1f4] sm:$0xf]
      %v823 = vld [vmem:[%s1 + $0x1f8] sm:$0xf]
      %v824 = vld [vmem:[%s1 + $0x1fc] sm:$0xf]
      %v825 = vld [vmem:[%s1 + $0x200] sm:$0xf]
      %v826 = vld [vmem:[%s1 + $0x204] sm:$0xf]
      %v827 = vld [vmem:[%s1 + $0x208] sm:$0xf]
      %v828 = vld [vmem:[%s1 + $0x20c] sm:$0xf]
      %v829 = vld [vmem:[%s1 + $0x210] sm:$0xf]
      %v830 = vld [vmem:[%s1 + $0x214] sm:$0xf]
      %v831 = vld [vmem:[%s1 + $0x218] sm:$0xf]
      %v832 = vld [vmem:[%s1 + $0x21c] sm:$0xf]
      %v833 = vld [vmem:[%s1 + $0x220] sm:$0xf]
      %v834 = vld [vmem:[%s1 + $0x224] sm:$0xf]
      %v835 = vld [vmem:[%s1 + $0x228] sm:$0xf]
      %v836 = vld [vmem:[%s1 + $0x22c] sm:$0xf]
      %v837 = vld [vmem:[%s1 + $0x230] sm:$0xf]
      %v838 = vld [vmem:[%s1 + $0x234] sm:$0xf]
      %v839 = vld [vmem:[%s1 + $0x238] sm:$0xf]
      %v840 = vld [vmem:[%s1 + $0x23c] sm:$0xf]
      %v985 = vunpack.c.l.b16 %v697
      %v986 = vunpack.c.l.b16 %v698
      %v987 = vunpack.c.l.b16 %v699
      %v988 = vunpack.c.l.b16 %v700
      %v989 = vunpack.c.l.b16 %v701
      %v990 = vunpack.c.l.b16 %v702
      %v991 = vunpack.c.l.b16 %v703
      %v992 = vunpack.c.l.b16 %v704
      %v993 = vunpack.c.l.b16 %v705
      %v994 = vunpack.c.l.b16 %v706
      %v995 = vunpack.c.l.b16 %v707
      %v996 = vunpack.c.l.b16 %v708
      %v997 = vunpack.c.l.b16 %v709
      %v998 = vunpack.c.l.b16 %v710
      %v999 = vunpack.c.l.b16 %v711
      %v1000 = vunpack.c.l.b16 %v712
      %v1001 = vunpack.c.l.b16 %v713
      %v1002 = vunpack.c.l.b16 %v714
      %v1003 = vunpack.c.l.b16 %v715
      %v1004 = vunpack.c.l.b16 %v716
      %v1005 = vunpack.c.l.b16 %v717
      %v1006 = vunpack.c.l.b16 %v718
      %v1007 = vunpack.c.l.b16 %v719
      %v1008 = vunpack.c.l.b16 %v720
      %v1009 = vunpack.c.l.b16 %v721
      %v1010 = vunpack.c.l.b16 %v722
      %v1011 = vunpack.c.l.b16 %v723
      %v1012 = vunpack.c.l.b16 %v724
      %v1013 = vunpack.c.l.b16 %v725
      %v1014 = vunpack.c.l.b16 %v726
      %v1015 = vunpack.c.l.b16 %v727
      %v1016 = vunpack.c.l.b16 %v728
      %v1017 = vunpack.c.l.b16 %v729
      %v1018 = vunpack.c.l.b16 %v730
      %v1019 = vunpack.c.l.b16 %v731
      %v1020 = vunpack.c.l.b16 %v732
      %v1021 = vunpack.c.l.b16 %v733
      %v1022 = vunpack.c.l.b16 %v734
      %v1023 = vunpack.c.l.b16 %v735
      %v1024 = vunpack.c.l.b16 %v736
      %v1025 = vunpack.c.l.b16 %v737
      %v1026 = vunpack.c.l.b16 %v738
      %v1027 = vunpack.c.l.b16 %v739
      %v1028 = vunpack.c.l.b16 %v740
      %v1029 = vunpack.c.l.b16 %v741
      %v1030 = vunpack.c.l.b16 %v742
      %v1031 = vunpack.c.l.b16 %v743
      %v1032 = vunpack.c.l.b16 %v744
      %v1033 = vunpack.c.l.b16 %v745
      %v1034 = vunpack.c.l.b16 %v746
      %v1035 = vunpack.c.l.b16 %v747
      %v1036 = vunpack.c.l.b16 %v748
      %v1037 = vunpack.c.l.b16 %v749
      %v1038 = vunpack.c.l.b16 %v750
      %v1039 = vunpack.c.l.b16 %v751
      %v1040 = vunpack.c.l.b16 %v752
      %v1041 = vunpack.c.l.b16 %v753
      %v1042 = vunpack.c.l.b16 %v754
      %v1043 = vunpack.c.l.b16 %v755
      %v1044 = vunpack.c.l.b16 %v756
      %v1045 = vunpack.c.l.b16 %v757
      %v1046 = vunpack.c.l.b16 %v758
      %v1047 = vunpack.c.l.b16 %v759
      %v1048 = vunpack.c.l.b16 %v760
      %v1049 = vunpack.c.l.b16 %v761
      %v1050 = vunpack.c.l.b16 %v762
      %v1051 = vunpack.c.l.b16 %v763
      %v1052 = vunpack.c.l.b16 %v764
      %v1053 = vunpack.c.l.b16 %v765
      %v1054 = vunpack.c.l.b16 %v766
      %v1055 = vunpack.c.l.b16 %v767
      %v1056 = vunpack.c.l.b16 %v768
      %v1057 = vunpack.c.l.b16 %v769
      %v1058 = vunpack.c.l.b16 %v770
      %v1059 = vunpack.c.l.b16 %v771
      %v1060 = vunpack.c.l.b16 %v772
      %v1061 = vunpack.c.l.b16 %v773
      %v1062 = vunpack.c.l.b16 %v774
      %v1063 = vunpack.c.l.b16 %v775
      %v1064 = vunpack.c.l.b16 %v776
      %v1065 = vunpack.c.l.b16 %v777
      %v1066 = vunpack.c.l.b16 %v778
      %v1067 = vunpack.c.l.b16 %v779
      %v1068 = vunpack.c.l.b16 %v780
      %v1069 = vunpack.c.l.b16 %v781
      %v1070 = vunpack.c.l.b16 %v782
      %v1071 = vunpack.c.l.b16 %v783
      %v1072 = vunpack.c.l.b16 %v784
      %v1073 = vunpack.c.l.b16 %v785
      %v1074 = vunpack.c.l.b16 %v786
      %v1075 = vunpack.c.l.b16 %v787
      %v1076 = vunpack.c.l.b16 %v788
      %v1077 = vunpack.c.l.b16 %v789
      %v1078 = vunpack.c.l.b16 %v790
      %v1079 = vunpack.c.l.b16 %v791
      %v1080 = vunpack.c.l.b16 %v792
      %v1081 = vunpack.c.l.b16 %v793
      %v1082 = vunpack.c.l.b16 %v794
      %v1083 = vunpack.c.l.b16 %v795
      %v1084 = vunpack.c.l.b16 %v796
      %v1085 = vunpack.c.l.b16 %v797
      %v1086 = vunpack.c.l.b16 %v798
      %v1087 = vunpack.c.l.b16 %v799
      %v1088 = vunpack.c.l.b16 %v800
      %v1089 = vunpack.c.l.b16 %v801
      %v1090 = vunpack.c.l.b16 %v802
      %v1091 = vunpack.c.l.b16 %v803
      %v1092 = vunpack.c.l.b16 %v804
      %v1093 = vunpack.c.l.b16 %v805
      %v1094 = vunpack.c.l.b16 %v806
      %v1095 = vunpack.c.l.b16 %v807
      %v1096 = vunpack.c.l.b16 %v808
      %v1097 = vunpack.c.l.b16 %v809
      %v1098 = vunpack.c.l.b16 %v810
      %v1099 = vunpack.c.l.b16 %v811
      %v1100 = vunpack.c.l.b16 %v812
      %v1101 = vunpack.c.l.b16 %v813
      %v1102 = vunpack.c.l.b16 %v814
      %v1103 = vunpack.c.l.b16 %v815
      %v1104 = vunpack.c.l.b16 %v816
      %v1105 = vunpack.c.l.b16 %v817
      %v1106 = vunpack.c.l.b16 %v818
      %v1107 = vunpack.c.l.b16 %v819
      %v1108 = vunpack.c.l.b16 %v820
      %v1109 = vunpack.c.l.b16 %v821
      %v1110 = vunpack.c.l.b16 %v822
      %v1111 = vunpack.c.l.b16 %v823
      %v1112 = vunpack.c.l.b16 %v824
      %v1113 = vunpack.c.l.b16 %v825
      %v1114 = vunpack.c.l.b16 %v826
      %v1115 = vunpack.c.l.b16 %v827
      %v1116 = vunpack.c.l.b16 %v828
      %v1117 = vunpack.c.l.b16 %v829
      %v1118 = vunpack.c.l.b16 %v830
      %v1119 = vunpack.c.l.b16 %v831
      %v1120 = vunpack.c.l.b16 %v832
      %v1121 = vunpack.c.l.b16 %v833
      %v1122 = vunpack.c.l.b16 %v834
      %v1123 = vunpack.c.l.b16 %v835
      %v1124 = vunpack.c.l.b16 %v836
      %v1125 = vunpack.c.l.b16 %v837
      %v1126 = vunpack.c.l.b16 %v838
      %v1127 = vunpack.c.l.b16 %v839
      %v1128 = vunpack.c.l.b16 %v840
      %v1129 = vpack.c.b16 %v986, %v985
      %v1130 = vpack.c.b16 %v988, %v987
      %v1131 = vpack.c.b16 %v990, %v989
      %v1132 = vpack.c.b16 %v992, %v991
      %v1133 = vpack.c.b16 %v994, %v993
      %v1134 = vpack.c.b16 %v996, %v995
      %v1135 = vpack.c.b16 %v998, %v997
      %v1136 = vpack.c.b16 %v1000, %v999
      %v1137 = vpack.c.b16 %v1002, %v1001
      %v1138 = vpack.c.b16 %v1004, %v1003
      %v1139 = vpack.c.b16 %v1006, %v1005
      %v1140 = vpack.c.b16 %v1008, %v1007
      %v1141 = vpack.c.b16 %v1010, %v1009
      %v1142 = vpack.c.b16 %v1012, %v1011
      %v1143 = vpack.c.b16 %v1014, %v1013
      %v1144 = vpack.c.b16 %v1016, %v1015
      %v1145 = vpack.c.b16 %v1018, %v1017
      %v1146 = vpack.c.b16 %v1020, %v1019
      %v1147 = vpack.c.b16 %v1022, %v1021
      %v1148 = vpack.c.b16 %v1024, %v1023
      %v1149 = vpack.c.b16 %v1026, %v1025
      %v1150 = vpack.c.b16 %v1028, %v1027
      %v1151 = vpack.c.b16 %v1030, %v1029
      %v1152 = vpack.c.b16 %v1032, %v1031
      %v1153 = vpack.c.b16 %v1034, %v1033
      %v1154 = vpack.c.b16 %v1036, %v1035
      %v1155 = vpack.c.b16 %v1038, %v1037
      %v1156 = vpack.c.b16 %v1040, %v1039
      %v1157 = vpack.c.b16 %v1042, %v1041
      %v1158 = vpack.c.b16 %v1044, %v1043
      %v1159 = vpack.c.b16 %v1046, %v1045
      %v1160 = vpack.c.b16 %v1048, %v1047
      %v1161 = vpack.c.b16 %v1050, %v1049
      %v1162 = vpack.c.b16 %v1052, %v1051
      %v1163 = vpack.c.b16 %v1054, %v1053
      %v1164 = vpack.c.b16 %v1056, %v1055
      %v1165 = vpack.c.b16 %v1058, %v1057
      %v1166 = vpack.c.b16 %v1060, %v1059
      %v1167 = vpack.c.b16 %v1062, %v1061
      %v1168 = vpack.c.b16 %v1064, %v1063
      %v1169 = vpack.c.b16 %v1066, %v1065
      %v1170 = vpack.c.b16 %v1068, %v1067
      %v1171 = vpack.c.b16 %v1070, %v1069
      %v1172 = vpack.c.b16 %v1072, %v1071
      %v1173 = vpack.c.b16 %v1074, %v1073
      %v1174 = vpack.c.b16 %v1076, %v1075
      %v1175 = vpack.c.b16 %v1078, %v1077
      %v1176 = vpack.c.b16 %v1080, %v1079
      %v1177 = vpack.c.b16 %v1082, %v1081
      %v1178 = vpack.c.b16 %v1084, %v1083
      %v1179 = vpack.c.b16 %v1086, %v1085
      %v1180 = vpack.c.b16 %v1088, %v1087
      %v1181 = vpack.c.b16 %v1090, %v1089
      %v1182 = vpack.c.b16 %v1092, %v1091
      %v1183 = vpack.c.b16 %v1094, %v1093
      %v1184 = vpack.c.b16 %v1096, %v1095
      %v1185 = vpack.c.b16 %v1098, %v1097
      %v1186 = vpack.c.b16 %v1100, %v1099
      %v1187 = vpack.c.b16 %v1102, %v1101
      %v1188 = vpack.c.b16 %v1104, %v1103
      %v1189 = vpack.c.b16 %v1106, %v1105
      %v1190 = vpack.c.b16 %v1108, %v1107
      %v1191 = vpack.c.b16 %v1110, %v1109
      %v1192 = vpack.c.b16 %v1112, %v1111
      %v1193 = vpack.c.b16 %v1114, %v1113
      %v1194 = vpack.c.b16 %v1116, %v1115
      %v1195 = vpack.c.b16 %v1118, %v1117
      %v1196 = vpack.c.b16 %v1120, %v1119
      %v1197 = vpack.c.b16 %v1122, %v1121
      %v1198 = vpack.c.b16 %v1124, %v1123
      %v1199 = vpack.c.b16 %v1126, %v1125
      %v1200 = vpack.c.b16 %v1128, %v1127
      %1273 = vmatprep.subr.bf16.mxu0 0
      %1274 = vmatpush1.bf16.msra.mxu0 %v1136
      %1275 = vmatprep.subr.bf16.mxu0 0
      %1276 = vmatpush1.bf16.msra.mxu0 %v1135
      %1277 = vmatprep.subr.bf16.mxu0 0
      %1278 = vmatpush1.bf16.msra.mxu0 %v1134
      %1279 = vmatprep.subr.bf16.mxu0 0
      %1280 = vmatpush1.bf16.msra.mxu0 %v1133
      %1281 = vmatprep.subr.bf16.mxu0 0
      %1282 = vmatpush1.bf16.msra.mxu0 %v1132
      %1283 = vmatprep.subr.bf16.mxu0 0
      %1284 = vmatpush1.bf16.msra.mxu0 %v1131
      %1285 = vmatprep.subr.bf16.mxu0 0
      %1286 = vmatpush1.bf16.msra.mxu0 %v1130
      %1287 = vmatprep.subr.bf16.mxu0 0
      %1288 = vmatpush1.bf16.msra.mxu0 %v1129
      %1289 = vmatprep.subr.bf16.mxu0 0
      %1290 = vmatpush2.bf16.msra.mxu0 %v1144
      %1291 = vmatprep.subr.bf16.mxu0 0
      %1292 = vmatpush2.bf16.msra.mxu0 %v1143
      %1293 = vmatprep.subr.bf16.mxu0 0
      %1294 = vmatpush2.bf16.msra.mxu0 %v1142
      %1295 = vmatprep.subr.bf16.mxu0 0
      %1296 = vmatpush2.bf16.msra.mxu0 %v1141
      %1297 = vmatprep.subr.bf16.mxu0 0
      %1298 = vmatpush2.bf16.msra.mxu0 %v1140
      %1299 = vmatprep.subr.bf16.mxu0 0
      %1300 = vmatpush2.bf16.msra.mxu0 %v1139
      %1301 = vmatprep.subr.bf16.mxu0 0
      %1302 = vmatpush2.bf16.msra.mxu0 %v1138
      %1303 = vmatprep.subr.bf16.mxu0 0
      %1304 = vmatpush2.bf16.msra.mxu0 %v1137
      %1305 = vmatprep.mubr.bf16.mxu0 %v517
      %1306 = vmatmul.mubr.bf16.gmra.mxu0 %v485
      %v1307 = vpop.f32.mrf.mxu0
      %v1308 = vadd.f32 0.0, %v1307
      %v1309 = vpop.f32.mrf.mxu0
      %v1310 = vpop.f32.mrf.mxu0
      %v1311 = vadd.f32 0.0, %v1310
      %v1312 = vpop.f32.mrf.mxu0
      %1313 = vmatprep.mubr.bf16.mxu0 %v529
      %1314 = vmatmul.mubr.bf16.gmra.mxu0 %v486
      %v1315 = vpop.f32.mrf.mxu0
      %v1316 = vadd.f32 0.0, %v1315
      %v1317 = vpop.f32.mrf.mxu0
      %v1318 = vpop.f32.mrf.mxu0
      %v1319 = vadd.f32 0.0, %v1318
      %v1320 = vpop.f32.mrf.mxu0
      %1321 = vmatprep.mubr.bf16.mxu0 %v541
      %1322 = vmatmul.mubr.bf16.gmra.mxu0 %v487
      %v1323 = vpop.f32.mrf.mxu0
      %v1324 = vadd.f32 0.0, %v1323
      %v1325 = vpop.f32.mrf.mxu0
      %v1326 = vpop.f32.mrf.mxu0
      %v1327 = vadd.f32 0.0, %v1326
      %v1328 = vpop.f32.mrf.mxu0
      %1329 = vmatprep.mubr.bf16.mxu0 %v553
      %1330 = vmatmul.mubr.bf16.gmra.mxu0 %v488
      %v1331 = vpop.f32.mrf.mxu0
      %v1332 = vadd.f32 0.0, %v1331
      %v1333 = vpop.f32.mrf.mxu0
      %v1334 = vpop.f32.mrf.mxu0
      %v1335 = vadd.f32 0.0, %v1334
      %v1336 = vpop.f32.mrf.mxu0
      %1337 = vmatprep.mubr.bf16.mxu0 %v565
      %1338 = vmatmul.mubr.bf16.gmra.mxu0 %v489
      %v1339 = vpop.f32.mrf.mxu0
      %v1340 = vadd.f32 0.0, %v1339
      %v1341 = vpop.f32.mrf.mxu0
      %v1342 = vpop.f32.mrf.mxu0
      %v1343 = vadd.f32 0.0, %v1342
      %v1344 = vpop.f32.mrf.mxu0
      %1345 = vmatprep.mubr.bf16.mxu0 %v577
      %1346 = vmatmul.mubr.bf16.gmra.mxu0 %v490
      %v1347 = vpop.f32.mrf.mxu0
      %v1348 = vadd.f32 0.0, %v1347
      %v1349 = vpop.f32.mrf.mxu0
      %v1350 = vpop.f32.mrf.mxu0
      %v1351 = vadd.f32 0.0, %v1350
      %v1352 = vpop.f32.mrf.mxu0
      %1353 = vmatprep.mubr.bf16.mxu0 %v589
      %1354 = vmatmul.mubr.bf16.gmra.mxu0 %v491
      %v1355 = vpop.f32.mrf.mxu0
      %v1356 = vadd.f32 0.0, %v1355
      %v1357 = vpop.f32.mrf.mxu0
      %v1358 = vpop.f32.mrf.mxu0
      %v1359 = vadd.f32 0.0, %v1358
      %v1360 = vpop.f32.mrf.mxu0
      %1361 = vmatprep.mubr.bf16.mxu0 %v601
      %1362 = vmatmul.mubr.bf16.gmra.mxu0 %v492
      %v1363 = vpop.f32.mrf.mxu0
      %v1364 = vadd.f32 0.0, %v1363
      %v1365 = vpop.f32.mrf.mxu0
      %v1366 = vpop.f32.mrf.mxu0
      %v1367 = vadd.f32 0.0, %v1366
      %v1368 = vpop.f32.mrf.mxu0
      %1369 = vdwg.mxu0
      %1370 = vmatprep.subr.bf16.mxu0 0
      %1371 = vmatpush1.bf16.msra.mxu0 %v1152
      %1372 = vmatprep.subr.bf16.mxu0 0
      %1373 = vmatpush1.bf16.msra.mxu0 %v1151
      %1374 = vmatprep.subr.bf16.mxu0 0
      %1375 = vmatpush1.bf16.msra.mxu0 %v1150
      %1376 = vmatprep.subr.bf16.mxu0 0
      %1377 = vmatpush1.bf16.msra.mxu0 %v1149
      %1378 = vmatprep.subr.bf16.mxu0 0
      %1379 = vmatpush1.bf16.msra.mxu0 %v1148
      %1380 = vmatprep.subr.bf16.mxu0 0
      %1381 = vmatpush1.bf16.msra.mxu0 %v1147
      %1382 = vmatprep.subr.bf16.mxu0 0
      %1383 = vmatpush1.bf16.msra.mxu0 %v1146
      %1384 = vmatprep.subr.bf16.mxu0 0
      %1385 = vmatpush1.bf16.msra.mxu0 %v1145
      %1386 = vmatprep.subr.bf16.mxu0 0
      %1387 = vmatpush2.bf16.msra.mxu0 %v1160
      %1388 = vmatprep.subr.bf16.mxu0 0
      %1389 = vmatpush2.bf16.msra.mxu0 %v1159
      %1390 = vmatprep.subr.bf16.mxu0 0
      %1391 = vmatpush2.bf16.msra.mxu0 %v1158
      %1392 = vmatprep.subr.bf16.mxu0 0
      %1393 = vmatpush2.bf16.msra.mxu0 %v1157
      %1394 = vmatprep.subr.bf16.mxu0 0
      %1395 = vmatpush2.bf16.msra.mxu0 %v1156
      %1396 = vmatprep.subr.bf16.mxu0 0
      %1397 = vmatpush2.bf16.msra.mxu0 %v1155
      %1398 = vmatprep.subr.bf16.mxu0 0
      %1399 = vmatpush2.bf16.msra.mxu0 %v1154
      %1400 = vmatprep.subr.bf16.mxu0 0
      %1401 = vmatpush2.bf16.msra.mxu0 %v1153
      %1402 = vmatprep.mubr.bf16.mxu0 %v486
      %1403 = vmatmul.mubr.bf16.gmra.mxu0 %v629
      %v1404 = vpop.f32.mrf.mxu0
      %v1405 = vadd.f32 %v1308, %v1404
      %v1406 = vpop.f32.mrf.mxu0
      %v1407 = vpop.f32.mrf.mxu0
      %v1408 = vadd.f32 %v1311, %v1407
      %v1409 = vpop.f32.mrf.mxu0
      %1410 = vmatprep.mubr.bf16.mxu0 %v487
      %1411 = vmatmul.mubr.bf16.gmra.mxu0 %v632
      %v1412 = vpop.f32.mrf.mxu0
      %v1413 = vadd.f32 %v1316, %v1412
      %v1414 = vpop.f32.mrf.mxu0
      %v1415 = vpop.f32.mrf.mxu0
      %v1416 = vadd.f32 %v1319, %v1415
      %v1417 = vpop.f32.mrf.mxu0
      %1418 = vmatprep.mubr.bf16.mxu0 %v488
      %1419 = vmatmul.mubr.bf16.gmra.mxu0 %v635
      %v1420 = vpop.f32.mrf.mxu0
      %v1421 = vadd.f32 %v1324, %v1420
      %v1422 = vpop.f32.mrf.mxu0
      %v1423 = vpop.f32.mrf.mxu0
      %v1424 = vadd.f32 %v1327, %v1423
      %v1425 = vpop.f32.mrf.mxu0
      %1426 = vmatprep.mubr.bf16.mxu0 %v489
      %1427 = vmatmul.mubr.bf16.gmra.mxu0 %v638
      %v1428 = vpop.f32.mrf.mxu0
      %v1429 = vadd.f32 %v1332, %v1428
      %v1430 = vpop.f32.mrf.mxu0
      %v1431 = vpop.f32.mrf.mxu0
      %v1432 = vadd.f32 %v1335, %v1431
      %v1433 = vpop.f32.mrf.mxu0
      %1434 = vmatprep.mubr.bf16.mxu0 %v490
      %1435 = vmatmul.mubr.bf16.gmra.mxu0 %v641
      %v1436 = vpop.f32.mrf.mxu0
      %v1437 = vadd.f32 %v1340, %v1436
      %v1438 = vpop.f32.mrf.mxu0
      %v1439 = vpop.f32.mrf.mxu0
      %v1440 = vadd.f32 %v1343, %v1439
      %v1441 = vpop.f32.mrf.mxu0
      %1442 = vmatprep.mubr.bf16.mxu0 %v491
      %1443 = vmatmul.mubr.bf16.gmra.mxu0 %v644
      %v1444 = vpop.f32.mrf.mxu0
      %v1445 = vadd.f32 %v1348, %v1444
      %v1446 = vpop.f32.mrf.mxu0
      %v1447 = vpop.f32.mrf.mxu0
      %v1448 = vadd.f32 %v1351, %v1447
      %v1449 = vpop.f32.mrf.mxu0
      %1450 = vmatprep.mubr.bf16.mxu0 %v492
      %1451 = vmatmul.mubr.bf16.gmra.mxu0 %v647
      %v1452 = vpop.f32.mrf.mxu0
      %v1453 = vadd.f32 %v1356, %v1452
      %v1454 = vpop.f32.mrf.mxu0
      %v1455 = vpop.f32.mrf.mxu0
      %v1456 = vadd.f32 %v1359, %v1455
      %v1457 = vpop.f32.mrf.mxu0
      %1458 = vmatprep.mubr.bf16.mxu0 %v493
      %1459 = vmatmul.mubr.bf16.gmra.mxu0 %v650
      %v1460 = vpop.f32.mrf.mxu0
      %v1461 = vadd.f32 %v1364, %v1460
      %v1462 = vpop.f32.mrf.mxu0
      %v1463 = vpop.f32.mrf.mxu0
      %v1464 = vadd.f32 %v1367, %v1463
      %v1465 = vpop.f32.mrf.mxu0
      %1466 = vdwg.mxu0
      %1467 = vmatprep.subr.bf16.mxu0 0
      %1468 = vmatpush1.bf16.msra.mxu0 %v1168
      %1469 = vmatprep.subr.bf16.mxu0 0
      %1470 = vmatpush1.bf16.msra.mxu0 %v1167
      %1471 = vmatprep.subr.bf16.mxu0 0
      %1472 = vmatpush1.bf16.msra.mxu0 %v1166
      %1473 = vmatprep.subr.bf16.mxu0 0
      %1474 = vmatpush1.bf16.msra.mxu0 %v1165
      %1475 = vmatprep.subr.bf16.mxu0 0
      %1476 = vmatpush1.bf16.msra.mxu0 %v1164
      %1477 = vmatprep.subr.bf16.mxu0 0
      %1478 = vmatpush1.bf16.msra.mxu0 %v1163
      %1479 = vmatprep.subr.bf16.mxu0 0
      %1480 = vmatpush1.bf16.msra.mxu0 %v1162
      %1481 = vmatprep.subr.bf16.mxu0 0
      %1482 = vmatpush1.bf16.msra.mxu0 %v1161
      %1483 = vmatprep.subr.bf16.mxu0 0
      %1484 = vmatpush2.bf16.msra.mxu0 %v1176
      %1485 = vmatprep.subr.bf16.mxu0 0
      %1486 = vmatpush2.bf16.msra.mxu0 %v1175
      %1487 = vmatprep.subr.bf16.mxu0 0
      %1488 = vmatpush2.bf16.msra.mxu0 %v1174
      %1489 = vmatprep.subr.bf16.mxu0 0
      %1490 = vmatpush2.bf16.msra.mxu0 %v1173
      %1491 = vmatprep.subr.bf16.mxu0 0
      %1492 = vmatpush2.bf16.msra.mxu0 %v1172
      %1493 = vmatprep.subr.bf16.mxu0 0
      %1494 = vmatpush2.bf16.msra.mxu0 %v1171
      %1495 = vmatprep.subr.bf16.mxu0 0
      %1496 = vmatpush2.bf16.msra.mxu0 %v1170
      %1497 = vmatprep.subr.bf16.mxu0 0
      %1498 = vmatpush2.bf16.msra.mxu0 %v1169
      %1499 = vmatprep.mubr.bf16.mxu0 %v632
      %1500 = vmatmul.mubr.bf16.gmra.mxu0 %v529
      %v1501 = vpop.f32.mrf.mxu0
      %v1502 = vadd.f32 %v1405, %v1501
      %v1503 = vpop.f32.mrf.mxu0
      %v1504 = vpop.f32.mrf.mxu0
      %v1505 = vadd.f32 %v1408, %v1504
      %v1506 = vpop.f32.mrf.mxu0
      %1507 = vmatprep.mubr.bf16.mxu0 %v635
      %1508 = vmatmul.mubr.bf16.gmra.mxu0 %v541
      %v1509 = vpop.f32.mrf.mxu0
      %v1510 = vadd.f32 %v1413, %v1509
      %v1511 = vpop.f32.mrf.mxu0
      %v1512 = vpop.f32.mrf.mxu0
      %v1513 = vadd.f32 %v1416, %v1512
      %v1514 = vpop.f32.mrf.mxu0
      %1515 = vmatprep.mubr.bf16.mxu0 %v638
      %1516 = vmatmul.mubr.bf16.gmra.mxu0 %v553
      %v1517 = vpop.f32.mrf.mxu0
      %v1518 = vadd.f32 %v1421, %v1517
      %v1519 = vpop.f32.mrf.mxu0
      %v1520 = vpop.f32.mrf.mxu0
      %v1521 = vadd.f32 %v1424, %v1520
      %v1522 = vpop.f32.mrf.mxu0
      %1523 = vmatprep.mubr.bf16.mxu0 %v641
      %1524 = vmatmul.mubr.bf16.gmra.mxu0 %v565
      %v1525 = vpop.f32.mrf.mxu0
      %v1526 = vadd.f32 %v1429, %v1525
      %v1527 = vpop.f32.mrf.mxu0
      %v1528 = vpop.f32.mrf.mxu0
      %v1529 = vadd.f32 %v1432, %v1528
      %v1530 = vpop.f32.mrf.mxu0
      %1531 = vmatprep.mubr.bf16.mxu0 %v644
      %1532 = vmatmul.mubr.bf16.gmra.mxu0 %v577
      %v1533 = vpop.f32.mrf.mxu0
      %v1534 = vadd.f32 %v1437, %v1533
      %v1535 = vpop.f32.mrf.mxu0
      %v1536 = vpop.f32.mrf.mxu0
      %v1537 = vadd.f32 %v1440, %v1536
      %v1538 = vpop.f32.mrf.mxu0
      %1539 = vmatprep.mubr.bf16.mxu0 %v647
      %1540 = vmatmul.mubr.bf16.gmra.mxu0 %v589
      %v1541 = vpop.f32.mrf.mxu0
      %v1542 = vadd.f32 %v1445, %v1541
      %v1543 = vpop.f32.mrf.mxu0
      %v1544 = vpop.f32.mrf.mxu0
      %v1545 = vadd.f32 %v1448, %v1544
      %v1546 = vpop.f32.mrf.mxu0
      %1547 = vmatprep.mubr.bf16.mxu0 %v650
      %1548 = vmatmul.mubr.bf16.gmra.mxu0 %v601
      %v1549 = vpop.f32.mrf.mxu0
      %v1550 = vadd.f32 %v1453, %v1549
      %v1551 = vpop.f32.mrf.mxu0
      %v1552 = vpop.f32.mrf.mxu0
      %v1553 = vadd.f32 %v1456, %v1552
      %v1554 = vpop.f32.mrf.mxu0
      %1555 = vmatprep.mubr.bf16.mxu0 %v676
      %1556 = vmatmul.mubr.bf16.gmra.mxu0 %v670
      %v1557 = vpop.f32.mrf.mxu0
      %v1558 = vadd.f32 %v1461, %v1557
      %v1559 = vpop.f32.mrf.mxu0
      %v1560 = vpop.f32.mrf.mxu0
      %v1561 = vadd.f32 %v1464, %v1560
      %v1562 = vpop.f32.mrf.mxu0
      %1563 = vdwg.mxu0
      %1564 = vmatprep.subr.bf16.mxu0 0
      %1565 = vmatpush1.bf16.msra.mxu0 %v1184
      %1566 = vmatprep.subr.bf16.mxu0 0
      %1567 = vmatpush1.bf16.msra.mxu0 %v1183
      %1568 = vmatprep.subr.bf16.mxu0 0
      %1569 = vmatpush1.bf16.msra.mxu0 %v1182
      %1570 = vmatprep.subr.bf16.mxu0 0
      %1571 = vmatpush1.bf16.msra.mxu0 %v1181
      %1572 = vmatprep.subr.bf16.mxu0 0
      %1573 = vmatpush1.bf16.msra.mxu0 %v1180
      %1574 = vmatprep.subr.bf16.mxu0 0
      %1575 = vmatpush1.bf16.msra.mxu0 %v1179
      %1576 = vmatprep.subr.bf16.mxu0 0
      %1577 = vmatpush1.bf16.msra.mxu0 %v1178
      %1578 = vmatprep.subr.bf16.mxu0 0
      %1579 = vmatpush1.bf16.msra.mxu0 %v1177
      %1580 = vmatprep.subr.bf16.mxu0 0
      %1581 = vmatpush2.bf16.msra.mxu0 %v1192
      %1582 = vmatprep.subr.bf16.mxu0 0
      %1583 = vmatpush2.bf16.msra.mxu0 %v1191
      %1584 = vmatprep.subr.bf16.mxu0 0
      %1585 = vmatpush2.bf16.msra.mxu0 %v1190
      %1586 = vmatprep.subr.bf16.mxu0 0
      %1587 = vmatpush2.bf16.msra.mxu0 %v1189
      %1588 = vmatprep.subr.bf16.mxu0 0
      %1589 = vmatpush2.bf16.msra.mxu0 %v1188
      %1590 = vmatprep.subr.bf16.mxu0 0
      %1591 = vmatpush2.bf16.msra.mxu0 %v1187
      %1592 = vmatprep.subr.bf16.mxu0 0
      %1593 = vmatpush2.bf16.msra.mxu0 %v1186
      %1594 = vmatprep.subr.bf16.mxu0 0
      %1595 = vmatpush2.bf16.msra.mxu0 %v1185
      %1596 = vmatprep.mubr.bf16.mxu0 %v541
      %1597 = vmatmul.mubr.bf16.gmra.mxu0 %v487
      %v1598 = vpop.f32.mrf.mxu0
      %v1599 = vadd.f32 %v1502, %v1598
      %v1600 = vpop.f32.mrf.mxu0
      %v1601 = vpop.f32.mrf.mxu0
      %v1602 = vadd.f32 %v1505, %v1601
      %v1603 = vpop.f32.mrf.mxu0
      %1604 = vmatprep.mubr.bf16.mxu0 %v553
      %1605 = vmatmul.mubr.bf16.gmra.mxu0 %v488
      %v1606 = vpop.f32.mrf.mxu0
      %v1607 = vadd.f32 %v1510, %v1606
      %v1608 = vpop.f32.mrf.mxu0
      %v1609 = vpop.f32.mrf.mxu0
      %v1610 = vadd.f32 %v1513, %v1609
      %v1611 = vpop.f32.mrf.mxu0
      %1612 = vmatprep.mubr.bf16.mxu0 %v565
      %1613 = vmatmul.mubr.bf16.gmra.mxu0 %v489
      %v1614 = vpop.f32.mrf.mxu0
      %v1615 = vadd.f32 %v1518, %v1614
      %v1616 = vpop.f32.mrf.mxu0
      %v1617 = vpop.f32.mrf.mxu0
      %v1618 = vadd.f32 %v1521, %v1617
      %v1619 = vpop.f32.mrf.mxu0
      %1620 = vmatprep.mubr.bf16.mxu0 %v577
      %1621 = vmatmul.mubr.bf16.gmra.mxu0 %v490
      %v1622 = vpop.f32.mrf.mxu0
      %v1623 = vadd.f32 %v1526, %v1622
      %v1624 = vpop.f32.mrf.mxu0
      %v1625 = vpop.f32.mrf.mxu0
      %v1626 = vadd.f32 %v1529, %v1625
      %v1627 = vpop.f32.mrf.mxu0
      %1628 = vmatprep.mubr.bf16.mxu0 %v589
      %1629 = vmatmul.mubr.bf16.gmra.mxu0 %v491
      %v1630 = vpop.f32.mrf.mxu0
      %v1631 = vadd.f32 %v1534, %v1630
      %v1632 = vpop.f32.mrf.mxu0
      %v1633 = vpop.f32.mrf.mxu0
      %v1634 = vadd.f32 %v1537, %v1633
      %v1635 = vpop.f32.mrf.mxu0
      %1636 = vmatprep.mubr.bf16.mxu0 %v601
      %1637 = vmatmul.mubr.bf16.gmra.mxu0 %v492
      %v1638 = vpop.f32.mrf.mxu0
      %v1639 = vadd.f32 %v1542, %v1638
      %v1640 = vpop.f32.mrf.mxu0
      %v1641 = vpop.f32.mrf.mxu0
      %v1642 = vadd.f32 %v1545, %v1641
      %v1643 = vpop.f32.mrf.mxu0
      %1644 = vmatprep.mubr.bf16.mxu0 %v670
      %1645 = vmatmul.mubr.bf16.gmra.mxu0 %v493
      %v1646 = vpop.f32.mrf.mxu0
      %v1647 = vadd.f32 %v1550, %v1646
      %v1648 = vpop.f32.mrf.mxu0
      %v1649 = vpop.f32.mrf.mxu0
      %v1650 = vadd.f32 %v1553, %v1649
      %v1651 = vpop.f32.mrf.mxu0
      %1652 = vmatprep.mubr.bf16.mxu0 %v689
      %1653 = vmatmul.mubr.bf16.gmra.mxu0 %v494
      %v1654 = vpop.f32.mrf.mxu0
      %v1655 = vadd.f32 %v1558, %v1654
      %v1656 = vpop.f32.mrf.mxu0
      %v1657 = vpop.f32.mrf.mxu0
      %v1658 = vadd.f32 %v1561, %v1657
      %v1659 = vpop.f32.mrf.mxu0
      %1660 = vdwg.mxu0
      %1661 = vmatprep.subr.bf16.mxu0 0
      %1662 = vmatpush1.bf16.msra.mxu0 %v1200
      %1663 = vmatprep.subr.bf16.mxu0 0
      %1664 = vmatpush1.bf16.msra.mxu0 %v1199
      %1665 = vmatprep.subr.bf16.mxu0 0
      %1666 = vmatpush1.bf16.msra.mxu0 %v1198
      %1667 = vmatprep.subr.bf16.mxu0 0
      %1668 = vmatpush1.bf16.msra.mxu0 %v1197
      %1669 = vmatprep.subr.bf16.mxu0 0
      %1670 = vmatpush1.bf16.msra.mxu0 %v1196
      %1671 = vmatprep.subr.bf16.mxu0 0
      %1672 = vmatpush1.bf16.msra.mxu0 %v1195
      %1673 = vmatprep.subr.bf16.mxu0 0
      %1674 = vmatpush1.bf16.msra.mxu0 %v1194
      %1675 = vmatprep.subr.bf16.mxu0 0
      %1676 = vmatpush1.bf16.msra.mxu0 %v1193
      %1677 = vmatprep.subr.bf16.mxu0 0
      %1678 = vmatpush2.bf16.msra.mxu0 0
      %1679 = vmatprep.subr.bf16.mxu0 0
      %1680 = vmatpush2.bf16.msra.mxu0 0
      %1681 = vmatprep.subr.bf16.mxu0 0
      %1682 = vmatpush2.bf16.msra.mxu0 0
      %1683 = vmatprep.subr.bf16.mxu0 0
      %1684 = vmatpush2.bf16.msra.mxu0 0
      %1685 = vmatprep.subr.bf16.mxu0 0
      %1686 = vmatpush2.bf16.msra.mxu0 0
      %1687 = vmatprep.subr.bf16.mxu0 0
      %1688 = vmatpush2.bf16.msra.mxu0 0
      %1689 = vmatprep.subr.bf16.mxu0 0
      %1690 = vmatpush2.bf16.msra.mxu0 0
      %1691 = vmatprep.subr.bf16.mxu0 0
      %1692 = vmatpush2.bf16.msra.mxu0 0
      %1693 = vmatprep.mubr.bf16.mxu0 0
      %1694 = vmatmul.mubr.bf16.gmra.mxu0 %v635
      %v1695 = vpop.f32.mrf.mxu0
      %v1696 = vadd.f32 %v1599, %v1695
      %v1697 = vpop.f32.mrf.mxu0
      %v1698 = vpop.f32.mrf.mxu0
      %v1699 = vadd.f32 %v1602, %v1698
      %v1700 = vpop.f32.mrf.mxu0
      %1701 = vmatprep.mubr.bf16.mxu0 0
      %1702 = vmatmul.mubr.bf16.gmra.mxu0 %v638
      %v1703 = vpop.f32.mrf.mxu0
      %v1704 = vadd.f32 %v1607, %v1703
      %v1705 = vpop.f32.mrf.mxu0
      %v1706 = vpop.f32.mrf.mxu0
      %v1707 = vadd.f32 %v1610, %v1706
      %v1708 = vpop.f32.mrf.mxu0
      %1709 = vmatprep.mubr.bf16.mxu0 0
      %1710 = vmatmul.mubr.bf16.gmra.mxu0 %v641
      %v1711 = vpop.f32.mrf.mxu0
      %v1712 = vadd.f32 %v1615, %v1711
      %v1713 = vpop.f32.mrf.mxu0
      %v1714 = vpop.f32.mrf.mxu0
      %v1715 = vadd.f32 %v1618, %v1714
      %v1716 = vpop.f32.mrf.mxu0
      %1717 = vmatprep.mubr.bf16.mxu0 0
      %1718 = vmatmul.mubr.bf16.gmra.mxu0 %v644
      %v1719 = vpop.f32.mrf.mxu0
      %v1720 = vadd.f32 %v1623, %v1719
      %v1721 = vpop.f32.mrf.mxu0
      %v1722 = vpop.f32.mrf.mxu0
      %v1723 = vadd.f32 %v1626, %v1722
      %v1724 = vpop.f32.mrf.mxu0
      %1725 = vmatprep.mubr.bf16.mxu0 0
      %1726 = vmatmul.mubr.bf16.gmra.mxu0 %v647
      %v1727 = vpop.f32.mrf.mxu0
      %v1728 = vadd.f32 %v1631, %v1727
      %v1729 = vpop.f32.mrf.mxu0
      %v1730 = vpop.f32.mrf.mxu0
      %v1731 = vadd.f32 %v1634, %v1730
      %v1732 = vpop.f32.mrf.mxu0
      %1733 = vmatprep.mubr.bf16.mxu0 0
      %1734 = vmatmul.mubr.bf16.gmra.mxu0 %v650
      %v1735 = vpop.f32.mrf.mxu0
      %v1736 = vadd.f32 %v1639, %v1735
      %v1737 = vpop.f32.mrf.mxu0
      %v1738 = vpop.f32.mrf.mxu0
      %v1739 = vadd.f32 %v1642, %v1738
      %v1740 = vpop.f32.mrf.mxu0
      %1741 = vmatprep.mubr.bf16.mxu0 0
      %1742 = vmatmul.mubr.bf16.gmra.mxu0 %v676
      %v1743 = vpop.f32.mrf.mxu0
      %v1744 = vadd.f32 %v1647, %v1743
      %v1745 = vpop.f32.mrf.mxu0
      %v1746 = vpop.f32.mrf.mxu0
      %v1747 = vadd.f32 %v1650, %v1746
      %v1748 = vpop.f32.mrf.mxu0
      %1749 = vmatprep.mubr.bf16.mxu0 0
      %1750 = vmatmul.mubr.bf16.gmra.mxu0 %v695
      %v1751 = vpop.f32.mrf.mxu0
      %v1752 = vadd.f32 %v1655, %v1751
      %v1753 = vpop.f32.mrf.mxu0
      %v1754 = vpop.f32.mrf.mxu0
      %v1755 = vadd.f32 %v1658, %v1754
      %v1756 = vpop.f32.mrf.mxu0
      %1757 = vdwg.mxu0
      %v1758 = vadd.f32 %v1696, %v1699
      %v1759 = vadd.f32 %v1758, %v1704
      %v1760 = vadd.f32 %v1759, %v1707
      %v1761 = vadd.f32 %v1760, %v1712
      %v1762 = vadd.f32 %v1761, %v1715
      %v1763 = vadd.f32 %v1762, %v1720
      %v1764 = vadd.f32 %v1763, %v1723
      %v1765 = vadd.f32 %v1764, %v1728
      %v1766 = vadd.f32 %v1765, %v1731
      %v1767 = vadd.f32 %v1766, %v1736
      %v1768 = vadd.f32 %v1767, %v1739
      %v1769 = vadd.f32 %v1768, %v1744
      %v1770 = vadd.f32 %v1769, %v1747
      %v1771 = vadd.f32 %v1770, %v1752
      %v1772 = vadd.f32 %v1771, %v1755
      %v1773 = vrot.slane %v1772, 4
      %v1774 = vadd.f32 %v1772, %v1773
      %v1775 = vrot.slane %v1774, 2
      %v1776 = vadd.f32 %v1774, %v1775
      %v1777 = vrot.slane %v1776, 1
      %v1778 = vadd.f32 %v1776, %v1777
      %v1779 = vmul.f32 %v1778, 0.0078125
      %v1780 = vsub.f32 %v1696, %v1779
      %v1781 = vsub.f32 %v1699, %v1779
      %v1782 = vsub.f32 %v1704, %v1779
      %v1783 = vsub.f32 %v1707, %v1779
      %v1784 = vsub.f32 %v1712, %v1779
      %v1785 = vsub.f32 %v1715, %v1779
      %v1786 = vsub.f32 %v1720, %v1779
      %v1787 = vsub.f32 %v1723, %v1779
      %v1788 = vsub.f32 %v1728, %v1779
      %v1789 = vsub.f32 %v1731, %v1779
      %v1790 = vsub.f32 %v1736, %v1779
      %v1791 = vsub.f32 %v1739, %v1779
      %v1792 = vsub.f32 %v1744, %v1779
      %v1793 = vsub.f32 %v1747, %v1779
      %v1794 = vsub.f32 %v1752, %v1779
      %v1795 = vsub.f32 %v1755, %v1779
      %v1796 = vmul.f32 %v1780, %v1780
      %v1797 = vmul.f32 %v1781, %v1781
      %v1798 = vmul.f32 %v1782, %v1782
      %v1799 = vmul.f32 %v1783, %v1783
      %v1800 = vmul.f32 %v1784, %v1784
      %v1801 = vmul.f32 %v1785, %v1785
      %v1802 = vmul.f32 %v1786, %v1786
      %v1803 = vmul.f32 %v1787, %v1787
      %v1804 = vmul.f32 %v1788, %v1788
      %v1805 = vmul.f32 %v1789, %v1789
      %v1806 = vmul.f32 %v1790, %v1790
      %v1807 = vmul.f32 %v1791, %v1791
      %v1808 = vmul.f32 %v1792, %v1792
      %v1809 = vmul.f32 %v1793, %v1793
      %v1810 = vmul.f32 %v1794, %v1794
      %v1811 = vmul.f32 %v1795, %v1795
      %v1812 = vadd.f32 %v1796, %v1797
      %v1813 = vadd.f32 %v1812, %v1798
      %v1814 = vadd.f32 %v1813, %v1799
      %v1815 = vadd.f32 %v1814, %v1800
      %v1816 = vadd.f32 %v1815, %v1801
      %v1817 = vadd.f32 %v1816, %v1802
      %v1818 = vadd.f32 %v1817, %v1803
      %v1819 = vadd.f32 %v1818, %v1804
      %v1820 = vadd.f32 %v1819, %v1805
      %v1821 = vadd.f32 %v1820, %v1806
      %v1822 = vadd.f32 %v1821, %v1807
      %v1823 = vadd.f32 %v1822, %v1808
      %v1824 = vadd.f32 %v1823, %v1809
      %v1825 = vadd.f32 %v1824, %v1810
      %v1826 = vadd.f32 %v1825, %v1811
      %v1827 = vrot.slane %v1826, 4
      %v1828 = vadd.f32 %v1826, %v1827
      %v1829 = vrot.slane %v1828, 2
      %v1830 = vadd.f32 %v1828, %v1829
      %v1831 = vrot.slane %v1830, 1
      %v1832 = vadd.f32 %v1830, %v1831
      %vm1833 = vcmask 1040384
      %v1834 = vsel %vm1833, %v1779, %v1832
      %1835 = vst [vmem:[%s243] sm:$0x3] %v1834
      %v1836 = vpack.c.bf16 %v1699, %v1696
      %v1837 = vpack.c.bf16 %v1707, %v1704
      %v1838 = vpack.c.bf16 %v1715, %v1712
      %v1839 = vpack.c.bf16 %v1723, %v1720
      %v1840 = vpack.c.bf16 %v1731, %v1728
      %v1841 = vpack.c.bf16 %v1739, %v1736
      %v1842 = vpack.c.bf16 %v1747, %v1744
      %v1843 = vpack.c.bf16 %v1755, %v1752
      %v1852 = vunpack.c.l.b16 %v1836
      %v1853 = vunpack.c.h.b16 %v1836
      %v1854 = vunpack.c.l.b16 %v1837
      %v1855 = vunpack.c.h.b16 %v1837
      %v1856 = vunpack.c.l.b16 %v1838
      %v1857 = vunpack.c.h.b16 %v1838
      %v1858 = vunpack.c.l.b16 %v1839
      %v1859 = vunpack.c.h.b16 %v1839
      %v1860 = vunpack.c.l.b16 %v1840
      %v1861 = vunpack.c.h.b16 %v1840
      %v1862 = vunpack.c.l.b16 %v1841
      %v1863 = vunpack.c.h.b16 %v1841
      %v1864 = vunpack.c.l.b16 %v1842
      %v1865 = vunpack.c.h.b16 %v1842
      %v1866 = vunpack.c.l.b16 %v1843
      %v1867 = vunpack.c.h.b16 %v1843
      %v1868 = vpack.c.b16 %v1852, %v1852
      %v1869 = vpack.c.b16 %v1853, %v1853
      %v1870 = vpack.c.b16 %v1854, %v1854
      %v1871 = vpack.c.b16 %v1855, %v1855
      %v1872 = vpack.c.b16 %v1856, %v1856
      %v1873 = vpack.c.b16 %v1857, %v1857
      %v1874 = vpack.c.b16 %v1858, %v1858
      %v1875 = vpack.c.b16 %v1859, %v1859
      %v1876 = vpack.c.b16 %v1860, %v1860
      %v1877 = vpack.c.b16 %v1861, %v1861
      %v1878 = vpack.c.b16 %v1862, %v1862
      %v1879 = vpack.c.b16 %v1863, %v1863
      %v1880 = vpack.c.b16 %v1864, %v1864
      %v1881 = vpack.c.b16 %v1865, %v1865
      %v1882 = vpack.c.b16 %v1866, %v1866
      %v1883 = vpack.c.b16 %v1867, %v1867
      %1900 = vst [vmem:[%s234] sm:$0xf] %v1868
      %1901 = vst [vmem:[%s234 + $0x4] sm:$0xf] %v1869
      %1902 = vst [vmem:[%s234 + $0x8] sm:$0xf] %v1870
      %1903 = vst [vmem:[%s234 + $0xc] sm:$0xf] %v1871
      %1904 = vst [vmem:[%s234 + $0x10] sm:$0xf] %v1872
      %1905 = vst [vmem:[%s234 + $0x14] sm:$0xf] %v1873
      %1906 = vst [vmem:[%s234 + $0x18] sm:$0xf] %v1874
      %1907 = vst [vmem:[%s234 + $0x1c] sm:$0xf] %v1875
      %1908 = vst [vmem:[%s234 + $0x20] sm:$0xf] %v1876
      %1909 = vst [vmem:[%s234 + $0x24] sm:$0xf] %v1877
      %1910 = vst [vmem:[%s234 + $0x28] sm:$0xf] %v1878
      %1911 = vst [vmem:[%s234 + $0x2c] sm:$0xf] %v1879
      %1912 = vst [vmem:[%s234 + $0x30] sm:$0xf] %v1880
      %1913 = vst [vmem:[%s234 + $0x34] sm:$0xf] %v1881
      %1914 = vst [vmem:[%s234 + $0x38] sm:$0xf] %v1882
      %1915 = vst [vmem:[%s234 + $0x3c] sm:$0xf] %v1883
      %s1916 = smul.u32 8, %s21
      %p1917 = scmp.lt.s32.totalorder %s20, 1
      %s1918 = scalar_select %p1917, %s20, 1
      %p1919 = scmp.lt.s32.totalorder %s1916, 15
      %s1920 = scalar_select %p1919, %s1916, 15
      %s1921 = smul.addr %s1920, 2
      %s1922 = smul.addr %s1918, 32
      %s1923 = sadd.s32 %s1921, %s1922
      %s1924 = smul.addr %s1923, 4
      %s1925 = scalar_lea.vmem %s3, %s1924
      %p1926 = scmp.lt.s32.totalorder %s20, 1
      %s1927 = scalar_select %p1926, %s20, 1
      %p1928 = scmp.lt.s32.totalorder %s21, 1
      %s1929 = scalar_select %p1928, %s21, 1
      %s1930 = smul.addr %s1927, 2
      %s1931 = sadd.s32 %s1929, %s1930
      %s1932 = smul.addr %s1931, 2
      %s1933 = scalar_lea.vmem %s4, %s1932
      // Predicated region
      $region33: #{double_conv.4} parent=31 // pred_check
        %p1934 = pneg %p116
      $region34: #{double_conv.4} parent=31 // pred_check_branch
        %1936 = sbr.rel (%p1934) target = $region36
      $region35: #{double_conv.4} parent=31 // pred_region
        %s1937 = smul.u32 8, %s21
      $region36: #{double_conv.4} parent=31 // pred_fallthru
        _
      // Predicated region
      $region37: #{double_conv.4} parent=31 // pred_check
        %p1938 = pneg %p144
      $region38: #{double_conv.4} parent=31 // pred_check_branch
        %1940 = sbr.rel (%p1938) target = $region40
      $region39: #{double_conv.4} parent=31 // pred_region
        _
      $region40: #{double_conv.4} parent=31 // pred_fallthru
        _
    $region32: #{double_conv.4} parent=5 // pred_fallthru
      _
    %p1941 = scmp.le.s32.totalorder 2, %s11
    // Predicated region
    $region41: #{double_conv.4} parent=5 // pred_check
      %p1942 = pneg %p1941
    $region42: #{double_conv.4} parent=5 // pred_check_branch
      %1944 = sbr.rel (%p1942) target = $region44
    $region43: #{double_conv.4} parent=5 // pred_region
      %s1945 = ssub.s32 %s11, 2
      // Predicated region
      $region45: #{double_conv.4} parent=43 // pred_check
        %p1946 = pneg %p122
      $region46: #{double_conv.4} parent=43 // pred_check_branch
        %1948 = sbr.rel (%p1946) target = $region48
      $region47: #{double_conv.4} parent=43 // pred_region
        %s1949 = smul.u32 8, %s23
        %p1950 = scmp.lt.s32.totalorder %s22, 1
        %s1951 = scalar_select %p1950, %s22, 1
        %p1952 = scmp.lt.s32.totalorder %s1949, 15
        %s1953 = scalar_select %p1952, %s1949, 15
        %s1954 = smul.addr %s1953, 2
        %s1955 = smul.addr %s1951, 32
        %s1956 = sadd.s32 %s1954, %s1955
        %s1957 = smul.addr %s1956, 4
        %s1958 = scalar_lea.vmem %s3, %s1957
      $region48: #{double_conv.4} parent=43 // pred_fallthru
        _
      // Predicated region
      $region49: #{double_conv.4} parent=43 // pred_check
        %p1959 = pneg %p150
      $region50: #{double_conv.4} parent=43 // pred_check_branch
        %1961 = sbr.rel (%p1959) target = $region52
      $region51: #{double_conv.4} parent=43 // pred_region
        %p1962 = scmp.lt.s32.totalorder %s22, 1
        %s1963 = scalar_select %p1962, %s22, 1
        %p1964 = scmp.lt.s32.totalorder %s23, 1
        %s1965 = scalar_select %p1964, %s23, 1
        %s1966 = smul.addr %s1963, 2
        %s1967 = sadd.s32 %s1965, %s1966
        %s1968 = smul.addr %s1967, 2
        %s1969 = scalar_lea.vmem %s4, %s1968
      $region52: #{double_conv.4} parent=43 // pred_fallthru
        _
    $region44: #{double_conv.4} parent=5 // pred_fallthru
      _
  $region6: #{double_conv.4} parent=0 // loop_footer
    %s15 = sadd.s32 1, %s11
  $region7: #{double_conv.4} parent=0 // loop_footer_branch
    %10 = sbr.rel target = $region3
  $region8: #{double_conv.4} parent=0 // loop_exit
    _

</llo_original>
